<compile_context>
chip_gen: v6e
topology: v6e:2x2x1
jax: 0.10.0
libtpu: 0.0.40
codegen_flags: <defaults>
</compile_context>

<pallas_src>
import jax
import jax.numpy as jnp
from jax.experimental import pallas as pl
from jax.experimental.pallas import tpu as pltpu

LEAKY_SLOPE = 0.2


def _round_up(n, m):
    return ((n + m - 1) // m) * m


def _generator_kernel(x_ref,
                      w1_ref, b1_ref,
                      w2_ref, b2_ref,
                      w3_ref, b3_ref,
                      w4_ref, b4_ref,
                      o_ref):
    """Whole MLP for one batch tile; all operands resident in VMEM."""
    cdt = w1_ref.dtype  # matmul-operand dtype (f32 or bf16)

    def linear(h, w_ref, b_ref):
        # MXU matmul with f32 accumulation; bias add in f32.
        return (jnp.dot(h, w_ref[...], preferred_element_type=jnp.float32)
                + b_ref[...])

    def leaky_relu(v):
        return jnp.where(v >= 0, v, LEAKY_SLOPE * v)

    h = x_ref[...]                                          # already in cdt
    h = leaky_relu(linear(h, w1_ref, b1_ref)).astype(cdt)   # hidden_0:  64 -> 128
    h = leaky_relu(linear(h, w2_ref, b2_ref)).astype(cdt)   # hidden_1: 128 -> 256
    h = leaky_relu(linear(h, w3_ref, b3_ref)).astype(cdt)   # hidden_2: 256 -> 512
    y = jnp.tanh(linear(h, w4_ref, b4_ref))                 # out     : 512 -> out
    # TODO(synk): `escalonate=True` default in the reference is not a valid
    # nn.Module activation; tanh is used as the concrete escalonate activation.
    o_ref[...] = y.astype(o_ref.dtype)


def prepare_params(params, param_dtype=jnp.float32):
    """One-time prep: transpose PyTorch (out,in) weights to (in,out), cast the
    matmul operands to `param_dtype` (use bf16 on v6e/v7x), keep biases f32."""
    prepared = []
    for i in (1, 2, 3, 4):
        prepared.append(jnp.asarray(params[f"w{i}"].T, dtype=param_dtype))
        prepared.append(jnp.asarray(params[f"b{i}"], dtype=jnp.float32)[None, :])
    return tuple(prepared)


def generator_forward(x, prepared_params, *, batch_tile=256, out_dtype=jnp.float32):
    """x: [B, in_features]. prepared_params: output of prepare_params()."""
    w1, b1, w2, b2, w3, b3, w4, b4 = prepared_params
    B, in_features = x.shape
    out_features = w4.shape[1]

    # Cast activations to the matmul-operand dtype once (bf16 halves DMA bytes).
    x = x.astype(w1.dtype)

    # Pick a batch tile: large enough to fill the MXU M dim, but never larger
    # than the (8-row aligned) batch.  Pad the batch to a tile multiple; padded
    # rows are sliced off after the call.  Keep tiles modest for v7x's 64 MiB
    # VMEM (256 rows f32 of the widest activation is ~0.5 MB — plenty of room).
    tile = int(min(batch_tile, _round_up(B, 8)))
    padded_b = _round_up(B, tile)
    if padded_b != B:
        x = jnp.pad(x, ((0, padded_b - B), (0, 0)))

    grid = (padded_b // tile,)

    def rep(shape):
        # Full array, constant block index: stays VMEM-resident across the
        # batch grid (Pallas does not re-fetch blocks whose index is unchanged).
        return pl.BlockSpec(shape, lambda i: (0, 0))

    out = pl.pallas_call(
        _generator_kernel,
        out_shape=jax.ShapeDtypeStruct((padded_b, out_features), out_dtype),
        grid_spec=pltpu.PrefetchScalarGridSpec(
            num_scalar_prefetch=0,
            grid=grid,
            in_specs=[
                pl.BlockSpec((tile, in_features), lambda i: (i, 0)),
                rep(w1.shape), rep(b1.shape),
                rep(w2.shape), rep(b2.shape),
                rep(w3.shape), rep(b3.shape),
                rep(w4.shape), rep(b4.shape),
            ],
            out_specs=pl.BlockSpec((tile, out_features), lambda i: (i, 0)),
        ),
        compiler_params=pltpu.CompilerParams(
            dimension_semantics=("parallel",)),
    )(x, w1, b1, w2, b2, w3, b3, w4, b4)

    return out[:B] if padded_b != B else out


def init_params(key, in_features=64, hidden=(128, 256, 512), out_features=128):
    """Deterministic PyTorch-Linear-style init: W, b ~ U(-1/sqrt(fan_in), +)."""
    layers = [in_features, *hidden, out_features]
    params = {}
    for idx in range(len(layers) - 1):
        fan_in, fan_out = layers[idx], layers[idx + 1]
        key, kw, kb = jax.random.split(key, 3)
        bound = 1.0 / (fan_in ** 0.5)
        params[f"w{idx + 1}"] = jax.random.uniform(
            kw, (fan_out, fan_in), jnp.float32, -bound, bound)   # PyTorch (out,in)
        params[f"b{idx + 1}"] = jax.random.uniform(
            kb, (fan_out,), jnp.float32, -bound, bound)
    return params


def reference_forward(x, params):
    """Plain-JAX reference replicating the PyTorch forward."""
    h = x
    for i in (1, 2, 3):
        h = h @ params[f"w{i}"].T + params[f"b{i}"]
        h = jnp.where(h >= 0, h, LEAKY_SLOPE * h)
    y = h @ params["w4"].T + params["b4"]
    return jnp.tanh(y)


if __name__ == "__main__":
    key = jax.random.PRNGKey(0)
    kp, kx, kx2 = jax.random.split(key, 3)

    in_features = 64
    out_features = 128
    batch = 512  # 2 batch tiles of 256 -> both TensorCores get work on v7x

    params = init_params(kp, in_features=in_features, out_features=out_features)
    # mimic GeneratorNet.create_data: x = noise(batch, in_features) ~ N(0,1)
    x = jax.random.normal(kx, (batch, in_features), jnp.float32)
    ref = reference_forward(x, params)

    # f32 matmul-operand path: exact check against the plain-JAX reference.
    p_f32 = prepare_params(params, jnp.float32)
    out_f32 = jax.block_until_ready(generator_forward(x, p_f32))
    assert out_f32.shape == (batch, out_features)
    assert jnp.allclose(out_f32, ref, atol=1e-5, rtol=1e-5), "f32 mismatch vs reference"

    # bf16 matmul-operand path (halves weight/activation DMA on v6e/v7x);
    # looser tolerance since MXU inputs are rounded to bf16.
    p_bf16 = prepare_params(params, jnp.bfloat16)
    out_bf16 = jax.block_until_ready(generator_forward(x, p_bf16))
    assert out_bf16.shape == (batch, out_features)
    assert jnp.allclose(out_bf16, ref, atol=2e-2, rtol=2e-2), "bf16 mismatch vs reference"

    # Small / ragged batch exercises the pad-to-tile path.
    x_small = jax.random.normal(kx2, (4, in_features), jnp.float32)
    out_small = jax.block_until_ready(generator_forward(x_small, p_f32))
    assert out_small.shape == (4, out_features)
    assert jnp.allclose(out_small, reference_forward(x_small, params),
                        atol=1e-5, rtol=1e-5), "small-batch mismatch vs reference"

    print("KERNEL_OK")
</pallas_src>

<mosaic_0001>
module attributes {stable_mosaic.version = 11 : i64} {
  func.func @_generator_kernel(%arg0: i32, %arg1: memref<256x64xf32, #tpu.memory_space<vmem>>, %arg2: memref<64x128xf32, #tpu.memory_space<vmem>>, %arg3: memref<1x128xf32, #tpu.memory_space<vmem>>, %arg4: memref<128x256xf32, #tpu.memory_space<vmem>>, %arg5: memref<1x256xf32, #tpu.memory_space<vmem>>, %arg6: memref<256x512xf32, #tpu.memory_space<vmem>>, %arg7: memref<1x512xf32, #tpu.memory_space<vmem>>, %arg8: memref<512x128xf32, #tpu.memory_space<vmem>>, %arg9: memref<1x128xf32, #tpu.memory_space<vmem>>, %arg10: memref<256x128xf32, #tpu.memory_space<vmem>>) attributes {dimension_semantics = [#tpu.dimension_semantics<parallel>], iteration_bounds = array<i64: 2>, scalar_prefetch = 0 : i64, scratch_operands = 0 : i64, tpu.core_type = #tpu.core_type<tc>, window_params = [{transform_indices = @transform_0, window_bounds = array<i64: 256, 64>}, {pipeline_mode = #tpu.pipeline_mode<synchronous>, transform_indices = @transform_1, window_bounds = array<i64: 64, 128>}, {pipeline_mode = #tpu.pipeline_mode<synchronous>, transform_indices = @transform_2, window_bounds = array<i64: 1, 128>}, {pipeline_mode = #tpu.pipeline_mode<synchronous>, transform_indices = @transform_3, window_bounds = array<i64: 128, 256>}, {pipeline_mode = #tpu.pipeline_mode<synchronous>, transform_indices = @transform_4, window_bounds = array<i64: 1, 256>}, {pipeline_mode = #tpu.pipeline_mode<synchronous>, transform_indices = @transform_5, window_bounds = array<i64: 256, 512>}, {pipeline_mode = #tpu.pipeline_mode<synchronous>, transform_indices = @transform_6, window_bounds = array<i64: 1, 512>}, {pipeline_mode = #tpu.pipeline_mode<synchronous>, transform_indices = @transform_7, window_bounds = array<i64: 512, 128>}, {pipeline_mode = #tpu.pipeline_mode<synchronous>, transform_indices = @transform_8, window_bounds = array<i64: 1, 128>}, {transform_indices = @transform_9, window_bounds = array<i64: 256, 128>}]} {
    %c0 = arith.constant 0 : index
    %c0_0 = arith.constant 0 : index
    %0 = vector.load %arg1[%c0, %c0_0] : memref<256x64xf32, #tpu.memory_space<vmem>>, vector<256x64xf32>
    %c0_1 = arith.constant 0 : index
    %c0_2 = arith.constant 0 : index
    %1 = vector.load %arg2[%c0_1, %c0_2] : memref<64x128xf32, #tpu.memory_space<vmem>>, vector<64x128xf32>
    %cst = arith.constant dense<0.000000e+00> : vector<256x128xf32>
    %2 = tpu.matmul %0, %1, %cst {dimension_numbers = #tpu.dot_dimension_numbers<[1], [0], [0], [1], [0, 0, 1, 1], [], []>} : vector<256x64xf32>, vector<64x128xf32>, vector<256x128xf32> -> vector<256x128xf32>
    %c0_3 = arith.constant 0 : index
    %c0_4 = arith.constant 0 : index
    %3 = vector.load %arg3[%c0_3, %c0_4] : memref<1x128xf32, #tpu.memory_space<vmem>>, vector<1x128xf32>
    %4 = vector.broadcast %3 : vector<1x128xf32> to vector<256x128xf32>
    %5 = arith.addf %2, %4 : vector<256x128xf32>
    %cst_5 = arith.constant 0.000000e+00 : f32
    %6 = vector.broadcast %cst_5 : f32 to vector<256x128xf32>
    %7 = arith.cmpf oge, %5, %6 : vector<256x128xf32>
    %cst_6 = arith.constant 2.000000e-01 : f32
    %8 = vector.broadcast %cst_6 : f32 to vector<256x128xf32>
    %9 = arith.mulf %8, %5 : vector<256x128xf32>
    %10 = arith.select %7, %5, %9 : vector<256x128xi1>, vector<256x128xf32>
    %c0_7 = arith.constant 0 : index
    %c0_8 = arith.constant 0 : index
    %11 = vector.load %arg4[%c0_7, %c0_8] : memref<128x256xf32, #tpu.memory_space<vmem>>, vector<128x256xf32>
    %cst_9 = arith.constant dense<0.000000e+00> : vector<256x256xf32>
    %12 = tpu.matmul %10, %11, %cst_9 {dimension_numbers = #tpu.dot_dimension_numbers<[1], [0], [0], [1], [0, 0, 1, 1], [], []>} : vector<256x128xf32>, vector<128x256xf32>, vector<256x256xf32> -> vector<256x256xf32>
    %c0_10 = arith.constant 0 : index
    %c0_11 = arith.constant 0 : index
    %13 = vector.load %arg5[%c0_10, %c0_11] : memref<1x256xf32, #tpu.memory_space<vmem>>, vector<1x256xf32>
    %14 = vector.broadcast %13 : vector<1x256xf32> to vector<256x256xf32>
    %15 = arith.addf %12, %14 : vector<256x256xf32>
    %cst_12 = arith.constant 0.000000e+00 : f32
    %16 = vector.broadcast %cst_12 : f32 to vector<256x256xf32>
    %17 = arith.cmpf oge, %15, %16 : vector<256x256xf32>
    %cst_13 = arith.constant 2.000000e-01 : f32
    %18 = vector.broadcast %cst_13 : f32 to vector<256x256xf32>
    %19 = arith.mulf %18, %15 : vector<256x256xf32>
    %20 = arith.select %17, %15, %19 : vector<256x256xi1>, vector<256x256xf32>
    %c0_14 = arith.constant 0 : index
    %c0_15 = arith.constant 0 : index
    %21 = vector.load %arg6[%c0_14, %c0_15] : memref<256x512xf32, #tpu.memory_space<vmem>>, vector<256x512xf32>
    %cst_16 = arith.constant dense<0.000000e+00> : vector<256x512xf32>
    %22 = tpu.matmul %20, %21, %cst_16 {dimension_numbers = #tpu.dot_dimension_numbers<[1], [0], [0], [1], [0, 0, 1, 1], [], []>} : vector<256x256xf32>, vector<256x512xf32>, vector<256x512xf32> -> vector<256x512xf32>
    %c0_17 = arith.constant 0 : index
    %c0_18 = arith.constant 0 : index
    %23 = vector.load %arg7[%c0_17, %c0_18] : memref<1x512xf32, #tpu.memory_space<vmem>>, vector<1x512xf32>
    %24 = vector.broadcast %23 : vector<1x512xf32> to vector<256x512xf32>
    %25 = arith.addf %22, %24 : vector<256x512xf32>
    %cst_19 = arith.constant 0.000000e+00 : f32
    %26 = vector.broadcast %cst_19 : f32 to vector<256x512xf32>
    %27 = arith.cmpf oge, %25, %26 : vector<256x512xf32>
    %cst_20 = arith.constant 2.000000e-01 : f32
    %28 = vector.broadcast %cst_20 : f32 to vector<256x512xf32>
    %29 = arith.mulf %28, %25 : vector<256x512xf32>
    %30 = arith.select %27, %25, %29 : vector<256x512xi1>, vector<256x512xf32>
    %c0_21 = arith.constant 0 : index
    %c0_22 = arith.constant 0 : index
    %31 = vector.load %arg8[%c0_21, %c0_22] : memref<512x128xf32, #tpu.memory_space<vmem>>, vector<512x128xf32>
    %cst_23 = arith.constant dense<0.000000e+00> : vector<256x128xf32>
    %32 = tpu.matmul %30, %31, %cst_23 {dimension_numbers = #tpu.dot_dimension_numbers<[1], [0], [0], [1], [0, 0, 1, 1], [], []>} : vector<256x512xf32>, vector<512x128xf32>, vector<256x128xf32> -> vector<256x128xf32>
    %c0_24 = arith.constant 0 : index
    %c0_25 = arith.constant 0 : index
    %33 = vector.load %arg9[%c0_24, %c0_25] : memref<1x128xf32, #tpu.memory_space<vmem>>, vector<1x128xf32>
    %34 = vector.broadcast %33 : vector<1x128xf32> to vector<256x128xf32>
    %35 = arith.addf %32, %34 : vector<256x128xf32>
    %36 = math.tanh %35 : vector<256x128xf32>
    %c0_26 = arith.constant 0 : index
    %c0_27 = arith.constant 0 : index
    %37 = vector.load %arg10[%c0_26, %c0_27] : memref<256x128xf32, #tpu.memory_space<vmem>>, vector<256x128xf32>
    tpu.vector_store %arg10[%c0_26, %c0_27], %36 {strides = array<i32>} : memref<256x128xf32, #tpu.memory_space<vmem>>, vector<256x128xf32>,
    return
  }
  func.func @transform_0(%arg0: i32) -> (i32, i32) {
    %c0_i32 = arith.constant 0 : i32
    %c0_i32_0 = arith.constant 0 : i32
    return %arg0, %c0_i32 : i32, i32
  }
  func.func @transform_1(%arg0: i32) -> (i32, i32) {
    %c0_i32 = arith.constant 0 : i32
    %c0_i32_0 = arith.constant 0 : i32
    %c0_i32_1 = arith.constant 0 : i32
    return %c0_i32, %c0_i32_0 : i32, i32
  }
  func.func @transform_2(%arg0: i32) -> (i32, i32) {
    %c0_i32 = arith.constant 0 : i32
    %c0_i32_0 = arith.constant 0 : i32
    %c0_i32_1 = arith.constant 0 : i32
    return %c0_i32, %c0_i32_0 : i32, i32
  }
  func.func @transform_3(%arg0: i32) -> (i32, i32) {
    %c0_i32 = arith.constant 0 : i32
    %c0_i32_0 = arith.constant 0 : i32
    %c0_i32_1 = arith.constant 0 : i32
    return %c0_i32, %c0_i32_0 : i32, i32
  }
  func.func @transform_4(%arg0: i32) -> (i32, i32) {
    %c0_i32 = arith.constant 0 : i32
    %c0_i32_0 = arith.constant 0 : i32
    %c0_i32_1 = arith.constant 0 : i32
    return %c0_i32, %c0_i32_0 : i32, i32
  }
  func.func @transform_5(%arg0: i32) -> (i32, i32) {
    %c0_i32 = arith.constant 0 : i32
    %c0_i32_0 = arith.constant 0 : i32
    %c0_i32_1 = arith.constant 0 : i32
    return %c0_i32, %c0_i32_0 : i32, i32
  }
  func.func @transform_6(%arg0: i32) -> (i32, i32) {
    %c0_i32 = arith.constant 0 : i32
    %c0_i32_0 = arith.constant 0 : i32
    %c0_i32_1 = arith.constant 0 : i32
    return %c0_i32, %c0_i32_0 : i32, i32
  }
  func.func @transform_7(%arg0: i32) -> (i32, i32) {
    %c0_i32 = arith.constant 0 : i32
    %c0_i32_0 = arith.constant 0 : i32
    %c0_i32_1 = arith.constant 0 : i32
    return %c0_i32, %c0_i32_0 : i32, i32
  }
  func.func @transform_8(%arg0: i32) -> (i32, i32) {
    %c0_i32 = arith.constant 0 : i32
    %c0_i32_0 = arith.constant 0 : i32
    %c0_i32_1 = arith.constant 0 : i32
    return %c0_i32, %c0_i32_0 : i32, i32
  }
  func.func @transform_9(%arg0: i32) -> (i32, i32) {
    %c0_i32 = arith.constant 0 : i32
    %c0_i32_0 = arith.constant 0 : i32
    return %arg0, %c0_i32 : i32, i32
  }
}

</mosaic_0001>

<llo_original>
// kernel: tpu_custom_call.1
$region0: #{tpu_custom_call.1}
  #allocation0 [shape = 'u32[]', space=smem, size = 0x4, offset = 0x4, fixed_abs, tag = 'smem constant byte address 0x4 - core index']
  #allocation1 [shape = 'u32[144,128]{1,0:T(1,128)}', space=vmem, size = 0x12000, scoped, tag = 'internal scratch']
  %s0 = inlined_call_operand.vmem [shape: f32[512,64], index: 0, kind: input, shape index: {}]
  %s1 = inlined_call_operand.hbm [shape: f32[64,128], index: 1, kind: input, shape index: {}]
  %s2 = inlined_call_operand.vmem [shape: f32[1,128], index: 2, kind: input, shape index: {}]
  %s3 = inlined_call_operand.vmem [shape: f32[128,256], index: 3, kind: input, shape index: {}]
  %s4 = inlined_call_operand.vmem [shape: f32[1,256], index: 4, kind: input, shape index: {}]
  %s5 = inlined_call_operand.hbm [shape: f32[256,512], index: 5, kind: input, shape index: {}]
  %s6 = inlined_call_operand.vmem [shape: f32[1,512], index: 6, kind: input, shape index: {}]
  %s7 = inlined_call_operand.vmem [shape: f32[512,128], index: 7, kind: input, shape index: {}]
  %s8 = inlined_call_operand.vmem [shape: f32[1,128], index: 8, kind: input, shape index: {}]
  %s9 = inlined_call_operand.hbm [shape: f32[512,128], index: 9, kind: output, shape index: {}]
  %s10 = sld [smem:[#allocation0]]
  $region77: #{tpu_custom_call.1} parent=0
    _
  %s12 = ssub.s32 1, %s10
  %s13 = scalar_select 0, %s12, %s10
  $region1: #{tpu_custom_call.1} parent=0
    #allocation2 [shape = 'u8[32768]{0}', space=vmem, size = 0x8000, scoped, tag = 'input window, operand 1, single buffered']
    #allocation3 [shape = 's32[2]{0}', space=sflag, size = 0x8, scoped, tag = 'scoped memory for tpu_custom_call.1']
    #allocation4 [shape = 's32[2]{0}', space=sflag, size = 0x8, scoped, tag = 'scoped memory for tpu_custom_call.1']
    #allocation5 [shape = 'u8[524288]{0}', space=vmem, size = 0x80000, scoped, tag = 'input window, operand 5, single buffered']
    #allocation6 [shape = 's32[1]{0}', space=sflag, size = 0x4, scoped, tag = 'scoped memory for tpu_custom_call.1']
    #allocation7 [shape = 'u8[262144]{0}', space=vmem, size = 0x40000, scoped, tag = 'output window, operand 0']
    %14 = vsyncpa [#allocation3], 0
    %15 = vsyncpa [#allocation6], 0
    %16 = vsyncpa [#allocation4], 0
    %s17 = scalar_lea.sflag [#allocation4], 1
    %18 = vsyncpa %s17, 0
    loop: start=0, step=1, limit=4
    $region2: #{tpu_custom_call.1} parent=1 // loop_pre_header
      _
    $region3: #{tpu_custom_call.1} parent=1 // loop_header
      %s20 = sphi 0, %s24
      %p21 = scmp.ge.s32.totalorder %s20, 4
      %s30 = sphi 0, %s32
      %s33 = sphi 0, %s30
      %s34 = sphi 0, %s33
      %s50 = sphi 0, %s34
      %s54 = sphi 0, %s54
      %s56 = sphi 0, %s54
      %s57 = sphi 0, %s56
      %s71 = sphi 0, %s57
      %s75 = sphi 0, %s75
      %s77 = sphi 0, %s75
      %s78 = sphi 0, %s77
      %s92 = sphi 0, %s78
      %s96 = sphi 0, %s96
      %s98 = sphi 0, %s96
      %s99 = sphi 0, %s98
      %s113 = sphi 0, %s99
      %s117 = sphi 0, %s117
      %s119 = sphi 0, %s117
      %s120 = sphi 0, %s119
      %s134 = sphi 0, %s120
      %s138 = sphi 0, %s138
      %s140 = sphi 0, %s138
      %s141 = sphi 0, %s140
      %s155 = sphi 0, %s141
      %s159 = sphi 0, %s159
      %s161 = sphi 0, %s159
      %s162 = sphi 0, %s161
      %s176 = sphi 0, %s162
      %s180 = sphi 0, %s180
      %s182 = sphi 0, %s180
      %s183 = sphi 0, %s182
      %s197 = sphi 0, %s183
      %s201 = sphi 0, %s201
      %s203 = sphi 0, %s201
      %s204 = sphi 0, %s203
      %s218 = sphi 0, %s204
      %s224 = sphi 0, %s226
      %s227 = sphi 0, %s224
      %s228 = sphi 0, %s227
      %s244 = sphi 0, %s228
    $region4: #{tpu_custom_call.1} parent=1 // loop_header_branch
      %23 = sbr.rel (%p21) target = $region8
    $region5: #{tpu_custom_call.1} parent=1 // loop_body
      %s25 = ssub.s32 %s20, 1
      %s26 = ssub.s32 %s20, 2
      %s27 = sadd.s32 %s20, 1
      %s28 = ssub.s32 %s20, %s27
      %p29 = scmp.eq.s32.totalorder %s28, 0
      %s31 = sadd.s32 %s30, 1
      %s32 = scalar_select %p29, %s30, %s31
      %p35 = pneg %p29
      %p36 = scmp.eq.s32.totalorder %s20, 1
      %p37 = por %p35, %p36
      %p38 = scmp.ne.s32.totalorder %s30, %s33
      %p39 = scmp.eq.s32.totalorder %s20, 0
      %p40 = por %p38, %p39
      %p41 = scmp.ne.s32.totalorder %s30, %s33
      %p42 = scmp.eq.s32.totalorder %s25, 1
      %p43 = por %p41, %p42
      %p44 = scmp.ne.s32.totalorder %s33, %s34
      %p45 = scmp.eq.s32.totalorder %s25, 0
      %p46 = por %p44, %p45
      %p47 = scmp.ne.s32.totalorder %s33, %s34
      %p48 = scmp.eq.s32.totalorder %s26, 1
      %p49 = por %p47, %p48
      %p51 = scmp.ne.s32.totalorder %s34, %s50
      %p52 = scmp.eq.s32.totalorder %s26, 0
      %p53 = por %p51, %p52
      %s55 = sadd.s32 %s54, 1
      %p58 = scmp.eq.s32.totalorder %s20, 1
      %p59 = scmp.ne.s32.totalorder %s54, %s56
      %p60 = scmp.eq.s32.totalorder %s20, 0
      %p61 = por %p59, %p60
      %p62 = scmp.ne.s32.totalorder %s54, %s56
      %p63 = scmp.eq.s32.totalorder %s25, 1
      %p64 = por %p62, %p63
      %p65 = scmp.ne.s32.totalorder %s56, %s57
      %p66 = scmp.eq.s32.totalorder %s25, 0
      %p67 = por %p65, %p66
      %p68 = scmp.ne.s32.totalorder %s56, %s57
      %p69 = scmp.eq.s32.totalorder %s26, 1
      %p70 = por %p68, %p69
      %p72 = scmp.ne.s32.totalorder %s57, %s71
      %p73 = scmp.eq.s32.totalorder %s26, 0
      %p74 = por %p72, %p73
      %s76 = sadd.s32 %s75, 1
      %p79 = scmp.eq.s32.totalorder %s20, 1
      %p80 = scmp.ne.s32.totalorder %s75, %s77
      %p81 = scmp.eq.s32.totalorder %s20, 0
      %p82 = por %p80, %p81
      %p83 = scmp.ne.s32.totalorder %s75, %s77
      %p84 = scmp.eq.s32.totalorder %s25, 1
      %p85 = por %p83, %p84
      %p86 = scmp.ne.s32.totalorder %s77, %s78
      %p87 = scmp.eq.s32.totalorder %s25, 0
      %p88 = por %p86, %p87
      %p89 = scmp.ne.s32.totalorder %s77, %s78
      %p90 = scmp.eq.s32.totalorder %s26, 1
      %p91 = por %p89, %p90
      %p93 = scmp.ne.s32.totalorder %s78, %s92
      %p94 = scmp.eq.s32.totalorder %s26, 0
      %p95 = por %p93, %p94
      %s97 = sadd.s32 %s96, 1
      %p100 = scmp.eq.s32.totalorder %s20, 1
      %p101 = scmp.ne.s32.totalorder %s96, %s98
      %p102 = scmp.eq.s32.totalorder %s20, 0
      %p103 = por %p101, %p102
      %p104 = scmp.ne.s32.totalorder %s96, %s98
      %p105 = scmp.eq.s32.totalorder %s25, 1
      %p106 = por %p104, %p105
      %p107 = scmp.ne.s32.totalorder %s98, %s99
      %p108 = scmp.eq.s32.totalorder %s25, 0
      %p109 = por %p107, %p108
      %p110 = scmp.ne.s32.totalorder %s98, %s99
      %p111 = scmp.eq.s32.totalorder %s26, 1
      %p112 = por %p110, %p111
      %p114 = scmp.ne.s32.totalorder %s99, %s113
      %p115 = scmp.eq.s32.totalorder %s26, 0
      %p116 = por %p114, %p115
      %s118 = sadd.s32 %s117, 1
      %p121 = scmp.eq.s32.totalorder %s20, 1
      %p122 = scmp.ne.s32.totalorder %s117, %s119
      %p123 = scmp.eq.s32.totalorder %s20, 0
      %p124 = por %p122, %p123
      %p125 = scmp.ne.s32.totalorder %s117, %s119
      %p126 = scmp.eq.s32.totalorder %s25, 1
      %p127 = por %p125, %p126
      %p128 = scmp.ne.s32.totalorder %s119, %s120
      %p129 = scmp.eq.s32.totalorder %s25, 0
      %p130 = por %p128, %p129
      %p131 = scmp.ne.s32.totalorder %s119, %s120
      %p132 = scmp.eq.s32.totalorder %s26, 1
      %p133 = por %p131, %p132
      %p135 = scmp.ne.s32.totalorder %s120, %s134
      %p136 = scmp.eq.s32.totalorder %s26, 0
      %p137 = por %p135, %p136
      %s139 = sadd.s32 %s138, 1
      %p142 = scmp.eq.s32.totalorder %s20, 1
      %p143 = scmp.ne.s32.totalorder %s138, %s140
      %p144 = scmp.eq.s32.totalorder %s20, 0
      %p145 = por %p143, %p144
      %p146 = scmp.ne.s32.totalorder %s138, %s140
      %p147 = scmp.eq.s32.totalorder %s25, 1
      %p148 = por %p146, %p147
      %p149 = scmp.ne.s32.totalorder %s140, %s141
      %p150 = scmp.eq.s32.totalorder %s25, 0
      %p151 = por %p149, %p150
      %p152 = scmp.ne.s32.totalorder %s140, %s141
      %p153 = scmp.eq.s32.totalorder %s26, 1
      %p154 = por %p152, %p153
      %p156 = scmp.ne.s32.totalorder %s141, %s155
      %p157 = scmp.eq.s32.totalorder %s26, 0
      %p158 = por %p156, %p157
      %s160 = sadd.s32 %s159, 1
      %p163 = scmp.eq.s32.totalorder %s20, 1
      %p164 = scmp.ne.s32.totalorder %s159, %s161
      %p165 = scmp.eq.s32.totalorder %s20, 0
      %p166 = por %p164, %p165
      %p167 = scmp.ne.s32.totalorder %s159, %s161
      %p168 = scmp.eq.s32.totalorder %s25, 1
      %p169 = por %p167, %p168
      %p170 = scmp.ne.s32.totalorder %s161, %s162
      %p171 = scmp.eq.s32.totalorder %s25, 0
      %p172 = por %p170, %p171
      %p173 = scmp.ne.s32.totalorder %s161, %s162
      %p174 = scmp.eq.s32.totalorder %s26, 1
      %p175 = por %p173, %p174
      %p177 = scmp.ne.s32.totalorder %s162, %s176
      %p178 = scmp.eq.s32.totalorder %s26, 0
      %p179 = por %p177, %p178
      %s181 = sadd.s32 %s180, 1
      %p184 = scmp.eq.s32.totalorder %s20, 1
      %p185 = scmp.ne.s32.totalorder %s180, %s182
      %p186 = scmp.eq.s32.totalorder %s20, 0
      %p187 = por %p185, %p186
      %p188 = scmp.ne.s32.totalorder %s180, %s182
      %p189 = scmp.eq.s32.totalorder %s25, 1
      %p190 = por %p188, %p189
      %p191 = scmp.ne.s32.totalorder %s182, %s183
      %p192 = scmp.eq.s32.totalorder %s25, 0
      %p193 = por %p191, %p192
      %p194 = scmp.ne.s32.totalorder %s182, %s183
      %p195 = scmp.eq.s32.totalorder %s26, 1
      %p196 = por %p194, %p195
      %p198 = scmp.ne.s32.totalorder %s183, %s197
      %p199 = scmp.eq.s32.totalorder %s26, 0
      %p200 = por %p198, %p199
      %s202 = sadd.s32 %s201, 1
      %p205 = scmp.eq.s32.totalorder %s20, 1
      %p206 = scmp.ne.s32.totalorder %s201, %s203
      %p207 = scmp.eq.s32.totalorder %s20, 0
      %p208 = por %p206, %p207
      %p209 = scmp.ne.s32.totalorder %s201, %s203
      %p210 = scmp.eq.s32.totalorder %s25, 1
      %p211 = por %p209, %p210
      %p212 = scmp.ne.s32.totalorder %s203, %s204
      %p213 = scmp.eq.s32.totalorder %s25, 0
      %p214 = por %p212, %p213
      %p215 = scmp.ne.s32.totalorder %s203, %s204
      %p216 = scmp.eq.s32.totalorder %s26, 1
      %p217 = por %p215, %p216
      %p219 = scmp.ne.s32.totalorder %s204, %s218
      %p220 = scmp.eq.s32.totalorder %s26, 0
      %p221 = por %p219, %p220
      %s222 = ssub.s32 %s20, %s27
      %p223 = scmp.eq.s32.totalorder %s222, 0
      %s225 = sadd.s32 %s224, 1
      %s226 = scalar_select %p223, %s224, %s225
      %p229 = pneg %p223
      %p230 = scmp.eq.s32.totalorder %s20, 1
      %p231 = por %p229, %p230
      %p232 = scmp.ne.s32.totalorder %s224, %s227
      %p233 = scmp.eq.s32.totalorder %s20, 0
      %p234 = por %p232, %p233
      %p235 = scmp.ne.s32.totalorder %s224, %s227
      %p236 = scmp.eq.s32.totalorder %s25, 1
      %p237 = por %p235, %p236
      %p238 = scmp.ne.s32.totalorder %s227, %s228
      %p239 = scmp.eq.s32.totalorder %s25, 0
      %p240 = por %p238, %p239
      %p241 = scmp.ne.s32.totalorder %s227, %s228
      %p242 = scmp.eq.s32.totalorder %s26, 1
      %p243 = por %p241, %p242
      %p245 = scmp.ne.s32.totalorder %s228, %s244
      %p246 = scmp.eq.s32.totalorder %s26, 0
      %p247 = por %p245, %p246
      %p248 = scmp.le.s32.totalorder 1, %s20
      %p249 = scmp.lt.s32.totalorder %s20, 3
      %p250 = pnand %p248, %p249
      %p251 = pneg %p250
      // Predicated region
      $region9: #{tpu_custom_call.1} parent=5 // pred_check
        _
      $region10: #{tpu_custom_call.1} parent=5 // pred_check_branch
        %253 = sbr.rel (%p250) target = $region12
      $region11: #{tpu_custom_call.1} parent=5 // pred_region
        %s254 = ssub.s32 %s20, 1
        // Predicated region
        $region13: #{tpu_custom_call.1} parent=11 // pred_check
          %p255 = pneg %p67
        $region14: #{tpu_custom_call.1} parent=11 // pred_check_branch
          %257 = sbr.rel (%p255) target = $region16
        $region15: #{tpu_custom_call.1} parent=11 // pred_region
          %s259 = ssub.s32 1024, 1024
          %260 = vsyncadd [#allocation3], %s259
          %s261 = sshll.u32 [#allocation2], 4
          %s262 = int_to_ptr.vmem [resolvable:$true] %s261
          %267 = dma.hbm_to_vmem [thread:$0]  %s1, 1024, %s262, [#allocation3], 128, 128, 8
        $region16: #{tpu_custom_call.1} parent=11 // pred_fallthru
          _
        // Predicated region
        $region17: #{tpu_custom_call.1} parent=11 // pred_check
          %p268 = pneg %p88
        $region18: #{tpu_custom_call.1} parent=11 // pred_check_branch
          %270 = sbr.rel (%p268) target = $region20
        $region19: #{tpu_custom_call.1} parent=11 // pred_region
          _
        $region20: #{tpu_custom_call.1} parent=11 // pred_fallthru
          _
        // Predicated region
        $region21: #{tpu_custom_call.1} parent=11 // pred_check
          %p271 = pneg %p109
        $region22: #{tpu_custom_call.1} parent=11 // pred_check_branch
          %273 = sbr.rel (%p271) target = $region24
        $region23: #{tpu_custom_call.1} parent=11 // pred_region
          _
        $region24: #{tpu_custom_call.1} parent=11 // pred_fallthru
          _
        // Predicated region
        $region25: #{tpu_custom_call.1} parent=11 // pred_check
          %p274 = pneg %p130
        $region26: #{tpu_custom_call.1} parent=11 // pred_check_branch
          %276 = sbr.rel (%p274) target = $region28
        $region27: #{tpu_custom_call.1} parent=11 // pred_region
          _
        $region28: #{tpu_custom_call.1} parent=11 // pred_fallthru
          _
        // Predicated region
        $region29: #{tpu_custom_call.1} parent=11 // pred_check
          %p277 = pneg %p151
        $region30: #{tpu_custom_call.1} parent=11 // pred_check_branch
          %279 = sbr.rel (%p277) target = $region32
        $region31: #{tpu_custom_call.1} parent=11 // pred_region
          %s281 = ssub.s32 16384, 16384
          %282 = vsyncadd [#allocation6], %s281
          %s283 = sshll.u32 [#allocation5], 4
          %s284 = int_to_ptr.vmem [resolvable:$true] %s283
          %289 = dma.hbm_to_vmem [thread:$0]  %s5, 16384, %s284, [#allocation6], 512, 512, 32
        $region32: #{tpu_custom_call.1} parent=11 // pred_fallthru
          _
        // Predicated region
        $region33: #{tpu_custom_call.1} parent=11 // pred_check
          %p290 = pneg %p172
        $region34: #{tpu_custom_call.1} parent=11 // pred_check_branch
          %292 = sbr.rel (%p290) target = $region36
        $region35: #{tpu_custom_call.1} parent=11 // pred_region
          _
        $region36: #{tpu_custom_call.1} parent=11 // pred_fallthru
          _
        // Predicated region
        $region37: #{tpu_custom_call.1} parent=11 // pred_check
          %p293 = pneg %p193
        $region38: #{tpu_custom_call.1} parent=11 // pred_check_branch
          %295 = sbr.rel (%p293) target = $region40
        $region39: #{tpu_custom_call.1} parent=11 // pred_region
          _
        $region40: #{tpu_custom_call.1} parent=11 // pred_fallthru
          _
        // Predicated region
        $region41: #{tpu_custom_call.1} parent=11 // pred_check
          %p296 = pneg %p214
        $region42: #{tpu_custom_call.1} parent=11 // pred_check_branch
          %298 = sbr.rel (%p296) target = $region44
        $region43: #{tpu_custom_call.1} parent=11 // pred_region
          _
        $region44: #{tpu_custom_call.1} parent=11 // pred_fallthru
          _
      $region12: #{tpu_custom_call.1} parent=5 // pred_fallthru
        _
      %p299 = scmp.lt.s32.totalorder %s20, 2
      // Predicated region
      $region45: #{tpu_custom_call.1} parent=5 // pred_check
        %p300 = pneg %p299
      $region46: #{tpu_custom_call.1} parent=5 // pred_check_branch
        %302 = sbr.rel (%p300) target = $region48
      $region47: #{tpu_custom_call.1} parent=5 // pred_region
        // Predicated region
        $region49: #{tpu_custom_call.1} parent=47 // pred_check
          %p303 = pneg %p40
        $region50: #{tpu_custom_call.1} parent=47 // pred_check_branch
          %305 = sbr.rel (%p303) target = $region52
        $region51: #{tpu_custom_call.1} parent=47 // pred_region
          %s306 = smul.u32 32, %s20
          %p307 = scmp.lt.s32.totalorder %s306, 63
          %s308 = scalar_select %p307, %s306, 63
          %s309 = smul.addr %s308, 8
          %s310 = scalar_lea.vmem %s0, %s309
          %s311 = smul.u32 32, %s20
        $region52: #{tpu_custom_call.1} parent=47 // pred_fallthru
          _
      $region48: #{tpu_custom_call.1} parent=5 // pred_fallthru
        _
      %p312 = scmp.le.s32.totalorder 1, %s20
      %p313 = scmp.lt.s32.totalorder %s20, 3
      %p314 = pnand %p312, %p313
      %p315 = pneg %p314
      // Predicated region
      $region53: #{tpu_custom_call.1} parent=5 // pred_check
        _
      $region54: #{tpu_custom_call.1} parent=5 // pred_check_branch
        %317 = sbr.rel (%p314) target = $region56
      $region55: #{tpu_custom_call.1} parent=5 // pred_region
        %s318 = ssub.s32 %s20, 1
        // Predicated region
        $region57: #{tpu_custom_call.1} parent=55 // pred_check
          %p319 = pneg %p67
        $region58: #{tpu_custom_call.1} parent=55 // pred_check_branch
          %321 = sbr.rel (%p319) target = $region60
        $region59: #{tpu_custom_call.1} parent=55 // pred_region
          %322 = dma.done [#allocation3], 1024
        $region60: #{tpu_custom_call.1} parent=55 // pred_fallthru
          _
        // Predicated region
        $region61: #{tpu_custom_call.1} parent=55 // pred_check
          %p323 = pneg %p151
        $region62: #{tpu_custom_call.1} parent=55 // pred_check_branch
          %325 = sbr.rel (%p323) target = $region64
        $region63: #{tpu_custom_call.1} parent=55 // pred_region
          %326 = dma.done [#allocation6], 16384
        $region64: #{tpu_custom_call.1} parent=55 // pred_fallthru
          _
        %s327 = smul.u32 32, %s25
        %p328 = scmp.lt.s32.totalorder %s327, 63
        %s329 = scalar_select %p328, %s327, 63
        %s330 = smul.addr %s329, 8
        %s331 = scalar_lea.vmem %s0, %s330
        %p332 = pneg %p46
        %p333 = pneg %p43
        %p334 = pneg %p67
        %p335 = pneg %p64
        %p336 = pneg %p88
        %p337 = pneg %p85
        %p338 = pneg %p109
        %p339 = pneg %p106
        %p340 = pneg %p130
        %p341 = pneg %p127
        %p342 = pneg %p151
        %p343 = pneg %p148
        %p344 = pneg %p172
        %p345 = pneg %p169
        %p346 = pneg %p193
        %p347 = pneg %p190
        %p348 = pneg %p214
        %p349 = pneg %p211
        %p350 = pneg %p240
        %p351 = pneg %p237
        %s352 = sand.u32 %s227, 1
        %s353 = scalar_lea.sflag [#allocation4], %s352
        %s354 = sand.u32 %s227, 1
        %s355 = smul.addr %s354, 256
        %s356 = scalar_lea.vmem [#allocation7], %s355
        %s357 = smul.u32 32, %s25
        %p358 = scmp.lt.s32.totalorder %s357, 63
        %s359 = scalar_select %p358, %s357, 63
        %s360 = smul.addr %s359, 8
        %s361 = scalar_lea.vmem %s0, %s360
        %s362 = smul.u32 32, %s25
        %s363 = smul.u32 32, %s25
        %v364 = vld [vmem:[%s361] sm:$0xff]
        %v365 = vld [vmem:[%s361 + $0x8] sm:$0xff]
        %v366 = vld [vmem:[%s361 + $0x10] sm:$0xff]
        %v367 = vld [vmem:[%s361 + $0x18] sm:$0xff]
        %v368 = vld [vmem:[%s361 + $0x20] sm:$0xff]
        %v369 = vld [vmem:[%s361 + $0x28] sm:$0xff]
        %v370 = vld [vmem:[%s361 + $0x30] sm:$0xff]
        %v371 = vld [vmem:[%s361 + $0x38] sm:$0xff]
        %v372 = vld [vmem:[%s361 + $0x40] sm:$0xff]
        %v373 = vld [vmem:[%s361 + $0x48] sm:$0xff]
        %v374 = vld [vmem:[%s361 + $0x50] sm:$0xff]
        %v375 = vld [vmem:[%s361 + $0x58] sm:$0xff]
        %v376 = vld [vmem:[%s361 + $0x60] sm:$0xff]
        %v377 = vld [vmem:[%s361 + $0x68] sm:$0xff]
        %v378 = vld [vmem:[%s361 + $0x70] sm:$0xff]
        %v379 = vld [vmem:[%s361 + $0x78] sm:$0xff]
        %v380 = vld [vmem:[%s361 + $0x80] sm:$0xff]
        %v381 = vld [vmem:[%s361 + $0x88] sm:$0xff]
        %v382 = vld [vmem:[%s361 + $0x90] sm:$0xff]
        %v383 = vld [vmem:[%s361 + $0x98] sm:$0xff]
        %v384 = vld [vmem:[%s361 + $0xa0] sm:$0xff]
        %v385 = vld [vmem:[%s361 + $0xa8] sm:$0xff]
        %v386 = vld [vmem:[%s361 + $0xb0] sm:$0xff]
        %v387 = vld [vmem:[%s361 + $0xb8] sm:$0xff]
        %v388 = vld [vmem:[%s361 + $0xc0] sm:$0xff]
        %v389 = vld [vmem:[%s361 + $0xc8] sm:$0xff]
        %v390 = vld [vmem:[%s361 + $0xd0] sm:$0xff]
        %v391 = vld [vmem:[%s361 + $0xd8] sm:$0xff]
        %v392 = vld [vmem:[%s361 + $0xe0] sm:$0xff]
        %v393 = vld [vmem:[%s361 + $0xe8] sm:$0xff]
        %v394 = vld [vmem:[%s361 + $0xf0] sm:$0xff]
        %v395 = vld [vmem:[%s361 + $0xf8] sm:$0xff]
        %v396 = vld [vmem:[#allocation2] sm:$0xff]
        %v397 = vld [vmem:[#allocation2 + $0x8] sm:$0xff]
        %v398 = vld [vmem:[#allocation2 + $0x10] sm:$0xff]
        %v399 = vld [vmem:[#allocation2 + $0x18] sm:$0xff]
        %v400 = vld [vmem:[#allocation2 + $0x20] sm:$0xff]
        %v401 = vld [vmem:[#allocation2 + $0x28] sm:$0xff]
        %v402 = vld [vmem:[#allocation2 + $0x30] sm:$0xff]
        %v403 = vld [vmem:[#allocation2 + $0x38] sm:$0xff]
        %v404 = vld [vmem:[%s2] sm:$0x1]
        %v406 = vlaneseq
        %v407 = vshrl.u32 %v406, 7
        %v408 = vsub.s32 0, %v407
        %v409 = vrot.slane %v404, %v408
        %vm411 = vcmask 523264
        %v413 = vsel %vm411, %v364, 0
        %v416 = vsel %vm411, %v365, 0
        %v419 = vsel %vm411, %v366, 0
        %v422 = vsel %vm411, %v367, 0
        %v425 = vsel %vm411, %v368, 0
        %v428 = vsel %vm411, %v369, 0
        %v431 = vsel %vm411, %v370, 0
        %v434 = vsel %vm411, %v371, 0
        %v437 = vsel %vm411, %v372, 0
        %v440 = vsel %vm411, %v373, 0
        %v443 = vsel %vm411, %v374, 0
        %v446 = vsel %vm411, %v375, 0
        %v449 = vsel %vm411, %v376, 0
        %v452 = vsel %vm411, %v377, 0
        %v455 = vsel %vm411, %v378, 0
        %v458 = vsel %vm411, %v379, 0
        %v461 = vsel %vm411, %v380, 0
        %v464 = vsel %vm411, %v381, 0
        %v467 = vsel %vm411, %v382, 0
        %v470 = vsel %vm411, %v383, 0
        %v473 = vsel %vm411, %v384, 0
        %v476 = vsel %vm411, %v385, 0
        %v479 = vsel %vm411, %v386, 0
        %v482 = vsel %vm411, %v387, 0
        %v485 = vsel %vm411, %v388, 0
        %v488 = vsel %vm411, %v389, 0
        %v491 = vsel %vm411, %v390, 0
        %v494 = vsel %vm411, %v391, 0
        %v497 = vsel %vm411, %v392, 0
        %v500 = vsel %vm411, %v393, 0
        %v503 = vsel %vm411, %v394, 0
        %v506 = vsel %vm411, %v395, 0
        %508 = vmatprep.subr.mxu0 0.0
        %509 = vmatpush1.msra.mxu0 0.0
        %510 = vmatprep.subr.mxu0 0.0
        %511 = vmatpush1.msra.mxu0 0.0
        %512 = vmatprep.subr.mxu0 0.0
        %513 = vmatpush1.msra.mxu0 0.0
        %514 = vmatprep.subr.mxu0 0.0
        %515 = vmatpush1.msra.mxu0 0.0
        %516 = vmatprep.subr.mxu0 0.0
        %517 = vmatpush1.msra.mxu0 0.0
        %518 = vmatprep.subr.mxu0 0.0
        %519 = vmatpush1.msra.mxu0 0.0
        %520 = vmatprep.subr.mxu0 0.0
        %521 = vmatpush1.msra.mxu0 0.0
        %522 = vmatprep.subr.mxu0 0.0
        %523 = vmatpush1.msra.mxu0 0.0
        %524 = vmatprep.subr.mxu0 0.0
        %525 = vmatpush1.msra.mxu0 %v403
        %526 = vmatprep.subr.mxu0 0.0
        %527 = vmatpush1.msra.mxu0 %v402
        %528 = vmatprep.subr.mxu0 0.0
        %529 = vmatpush1.msra.mxu0 %v401
        %530 = vmatprep.subr.mxu0 0.0
        %531 = vmatpush1.msra.mxu0 %v400
        %532 = vmatprep.subr.mxu0 0.0
        %533 = vmatpush1.msra.mxu0 %v399
        %534 = vmatprep.subr.mxu0 0.0
        %535 = vmatpush1.msra.mxu0 %v398
        %536 = vmatprep.subr.mxu0 0.0
        %537 = vmatpush1.msra.mxu0 %v397
        %538 = vmatprep.subr.mxu0 0.0
        %539 = vmatpush1.msra.mxu0 %v396
        %540 = vmatprep.subr.mxu0 0.0
        %541 = vmatpush2.msra.mxu0 0.0
        %542 = vmatprep.subr.mxu0 0.0
        %543 = vmatpush2.msra.mxu0 0.0
        %544 = vmatprep.subr.mxu0 0.0
        %545 = vmatpush2.msra.mxu0 0.0
        %546 = vmatprep.subr.mxu0 0.0
        %547 = vmatpush2.msra.mxu0 0.0
        %548 = vmatprep.subr.mxu0 0.0
        %549 = vmatpush2.msra.mxu0 0.0
        %550 = vmatprep.subr.mxu0 0.0
        %551 = vmatpush2.msra.mxu0 0.0
        %552 = vmatprep.subr.mxu0 0.0
        %553 = vmatpush2.msra.mxu0 0.0
        %554 = vmatprep.subr.mxu0 0.0
        %555 = vmatpush2.msra.mxu0 0.0
        %556 = vmatprep.subr.mxu0 0.0
        %557 = vmatpush2.msra.mxu0 0.0
        %558 = vmatprep.subr.mxu0 0.0
        %559 = vmatpush2.msra.mxu0 0.0
        %560 = vmatprep.subr.mxu0 0.0
        %561 = vmatpush2.msra.mxu0 0.0
        %562 = vmatprep.subr.mxu0 0.0
        %563 = vmatpush2.msra.mxu0 0.0
        %564 = vmatprep.subr.mxu0 0.0
        %565 = vmatpush2.msra.mxu0 0.0
        %566 = vmatprep.subr.mxu0 0.0
        %567 = vmatpush2.msra.mxu0 0.0
        %568 = vmatprep.subr.mxu0 0.0
        %569 = vmatpush2.msra.mxu0 0.0
        %570 = vmatprep.subr.mxu0 0.0
        %571 = vmatpush2.msra.mxu0 0.0
        %572 = vmatprep.mubr.f32.mxu0 0.0
        %573 = vmatmul.mubr.f32.gmra.mxu0 %v413
        %v574 = vpop.f32.mrf.mxu0
        %v575 = vadd.f32 %v409, %v574
        %v576 = vpop.f32.mrf.mxu0
        %577 = vmatprep.mubr.f32.mxu0 0.0
        %578 = vmatmul.mubr.f32.gmra.mxu0 %v416
        %v579 = vpop.f32.mrf.mxu0
        %v580 = vadd.f32 %v409, %v579
        %v581 = vpop.f32.mrf.mxu0
        %582 = vmatprep.mubr.f32.mxu0 0.0
        %583 = vmatmul.mubr.f32.gmra.mxu0 %v419
        %v584 = vpop.f32.mrf.mxu0
        %v585 = vadd.f32 %v409, %v584
        %v586 = vpop.f32.mrf.mxu0
        %587 = vmatprep.mubr.f32.mxu0 0.0
        %588 = vmatmul.mubr.f32.gmra.mxu0 %v422
        %v589 = vpop.f32.mrf.mxu0
        %v590 = vadd.f32 %v409, %v589
        %v591 = vpop.f32.mrf.mxu0
        %592 = vmatprep.mubr.f32.mxu0 0.0
        %593 = vmatmul.mubr.f32.gmra.mxu0 %v425
        %v594 = vpop.f32.mrf.mxu0
        %v595 = vadd.f32 %v409, %v594
        %v596 = vpop.f32.mrf.mxu0
        %597 = vmatprep.mubr.f32.mxu0 0.0
        %598 = vmatmul.mubr.f32.gmra.mxu0 %v428
        %v599 = vpop.f32.mrf.mxu0
        %v600 = vadd.f32 %v409, %v599
        %v601 = vpop.f32.mrf.mxu0
        %602 = vmatprep.mubr.f32.mxu0 0.0
        %603 = vmatmul.mubr.f32.gmra.mxu0 %v431
        %v604 = vpop.f32.mrf.mxu0
        %v605 = vadd.f32 %v409, %v604
        %v606 = vpop.f32.mrf.mxu0
        %607 = vmatprep.mubr.f32.mxu0 0.0
        %608 = vmatmul.mubr.f32.gmra.mxu0 %v434
        %v609 = vpop.f32.mrf.mxu0
        %v610 = vadd.f32 %v409, %v609
        %v611 = vpop.f32.mrf.mxu0
        %612 = vmatprep.mubr.f32.mxu0 0.0
        %613 = vmatmul.mubr.f32.gmra.mxu0 %v437
        %v614 = vpop.f32.mrf.mxu0
        %v615 = vadd.f32 %v409, %v614
        %v616 = vpop.f32.mrf.mxu0
        %617 = vmatprep.mubr.f32.mxu0 0.0
        %618 = vmatmul.mubr.f32.gmra.mxu0 %v440
        %v619 = vpop.f32.mrf.mxu0
        %v620 = vadd.f32 %v409, %v619
        %v621 = vpop.f32.mrf.mxu0
        %622 = vmatprep.mubr.f32.mxu0 0.0
        %623 = vmatmul.mubr.f32.gmra.mxu0 %v443
        %v624 = vpop.f32.mrf.mxu0
        %v625 = vadd.f32 %v409, %v624
        %v626 = vpop.f32.mrf.mxu0
        %627 = vmatprep.mubr.f32.mxu0 0.0
        %628 = vmatmul.mubr.f32.gmra.mxu0 %v446
        %v629 = vpop.f32.mrf.mxu0
        %v630 = vadd.f32 %v409, %v629
        %v631 = vpop.f32.mrf.mxu0
        %632 = vmatprep.mubr.f32.mxu0 0.0
        %633 = vmatmul.mubr.f32.gmra.mxu0 %v449
        %v634 = vpop.f32.mrf.mxu0
        %v635 = vadd.f32 %v409, %v634
        %v636 = vpop.f32.mrf.mxu0
        %637 = vmatprep.mubr.f32.mxu0 0.0
        %638 = vmatmul.mubr.f32.gmra.mxu0 %v452
        %v639 = vpop.f32.mrf.mxu0
        %v640 = vadd.f32 %v409, %v639
        %v641 = vpop.f32.mrf.mxu0
        %642 = vmatprep.mubr.f32.mxu0 0.0
        %643 = vmatmul.mubr.f32.gmra.mxu0 %v455
        %v644 = vpop.f32.mrf.mxu0
        %v645 = vadd.f32 %v409, %v644
        %v646 = vpop.f32.mrf.mxu0
        %647 = vmatprep.mubr.f32.mxu0 0.0
        %648 = vmatmul.mubr.f32.gmra.mxu0 %v458
        %v649 = vpop.f32.mrf.mxu0
        %v650 = vadd.f32 %v409, %v649
        %v651 = vpop.f32.mrf.mxu0
        %652 = vmatprep.mubr.f32.mxu0 0.0
        %653 = vmatmul.mubr.f32.gmra.mxu0 %v461
        %v654 = vpop.f32.mrf.mxu0
        %v655 = vadd.f32 %v409, %v654
        %v656 = vpop.f32.mrf.mxu0
        %657 = vmatprep.mubr.f32.mxu0 0.0
        %658 = vmatmul.mubr.f32.gmra.mxu0 %v464
        %v659 = vpop.f32.mrf.mxu0
        %v660 = vadd.f32 %v409, %v659
        %v661 = vpop.f32.mrf.mxu0
        %662 = vmatprep.mubr.f32.mxu0 0.0
        %663 = vmatmul.mubr.f32.gmra.mxu0 %v467
        %v664 = vpop.f32.mrf.mxu0
        %v665 = vadd.f32 %v409, %v664
        %v666 = vpop.f32.mrf.mxu0
        %667 = vmatprep.mubr.f32.mxu0 0.0
        %668 = vmatmul.mubr.f32.gmra.mxu0 %v470
        %v669 = vpop.f32.mrf.mxu0
        %v670 = vadd.f32 %v409, %v669
        %v671 = vpop.f32.mrf.mxu0
        %672 = vmatprep.mubr.f32.mxu0 0.0
        %673 = vmatmul.mubr.f32.gmra.mxu0 %v473
        %v674 = vpop.f32.mrf.mxu0
        %v675 = vadd.f32 %v409, %v674
        %v676 = vpop.f32.mrf.mxu0
        %677 = vmatprep.mubr.f32.mxu0 0.0
        %678 = vmatmul.mubr.f32.gmra.mxu0 %v476
        %v679 = vpop.f32.mrf.mxu0
        %v680 = vadd.f32 %v409, %v679
        %v681 = vpop.f32.mrf.mxu0
        %682 = vmatprep.mubr.f32.mxu0 0.0
        %683 = vmatmul.mubr.f32.gmra.mxu0 %v479
        %v684 = vpop.f32.mrf.mxu0
        %v685 = vadd.f32 %v409, %v684
        %v686 = vpop.f32.mrf.mxu0
        %687 = vmatprep.mubr.f32.mxu0 0.0
        %688 = vmatmul.mubr.f32.gmra.mxu0 %v482
        %v689 = vpop.f32.mrf.mxu0
        %v690 = vadd.f32 %v409, %v689
        %v691 = vpop.f32.mrf.mxu0
        %692 = vmatprep.mubr.f32.mxu0 0.0
        %693 = vmatmul.mubr.f32.gmra.mxu0 %v485
        %v694 = vpop.f32.mrf.mxu0
        %v695 = vadd.f32 %v409, %v694
        %v696 = vpop.f32.mrf.mxu0
        %697 = vmatprep.mubr.f32.mxu0 0.0
        %698 = vmatmul.mubr.f32.gmra.mxu0 %v488
        %v699 = vpop.f32.mrf.mxu0
        %v700 = vadd.f32 %v409, %v699
        %v701 = vpop.f32.mrf.mxu0
        %702 = vmatprep.mubr.f32.mxu0 0.0
        %703 = vmatmul.mubr.f32.gmra.mxu0 %v491
        %v704 = vpop.f32.mrf.mxu0
        %v705 = vadd.f32 %v409, %v704
        %v706 = vpop.f32.mrf.mxu0
        %707 = vmatprep.mubr.f32.mxu0 0.0
        %708 = vmatmul.mubr.f32.gmra.mxu0 %v494
        %v709 = vpop.f32.mrf.mxu0
        %v710 = vadd.f32 %v409, %v709
        %v711 = vpop.f32.mrf.mxu0
        %712 = vmatprep.mubr.f32.mxu0 0.0
        %713 = vmatmul.mubr.f32.gmra.mxu0 %v497
        %v714 = vpop.f32.mrf.mxu0
        %v715 = vadd.f32 %v409, %v714
        %v716 = vpop.f32.mrf.mxu0
        %717 = vmatprep.mubr.f32.mxu0 0.0
        %718 = vmatmul.mubr.f32.gmra.mxu0 %v500
        %v719 = vpop.f32.mrf.mxu0
        %v720 = vadd.f32 %v409, %v719
        %v721 = vpop.f32.mrf.mxu0
        %722 = vmatprep.mubr.f32.mxu0 0.0
        %723 = vmatmul.mubr.f32.gmra.mxu0 %v503
        %v724 = vpop.f32.mrf.mxu0
        %v725 = vadd.f32 %v409, %v724
        %v726 = vpop.f32.mrf.mxu0
        %727 = vmatprep.mubr.f32.mxu0 0.0
        %728 = vmatmul.mubr.f32.gmra.mxu0 %v506
        %v729 = vpop.f32.mrf.mxu0
        %v730 = vadd.f32 %v409, %v729
        %v731 = vpop.f32.mrf.mxu0
        %732 = vdwg.mxu0
        %vm733 = vcmp.ge.f32.partialorder %v575, 0.0
        %vm734 = vcmp.ge.f32.partialorder %v580, 0.0
        %vm735 = vcmp.ge.f32.partialorder %v585, 0.0
        %vm736 = vcmp.ge.f32.partialorder %v590, 0.0
        %vm737 = vcmp.ge.f32.partialorder %v595, 0.0
        %vm738 = vcmp.ge.f32.partialorder %v600, 0.0
        %vm739 = vcmp.ge.f32.partialorder %v605, 0.0
        %vm740 = vcmp.ge.f32.partialorder %v610, 0.0
        %vm741 = vcmp.ge.f32.partialorder %v615, 0.0
        %vm742 = vcmp.ge.f32.partialorder %v620, 0.0
        %vm743 = vcmp.ge.f32.partialorder %v625, 0.0
        %vm744 = vcmp.ge.f32.partialorder %v630, 0.0
        %vm745 = vcmp.ge.f32.partialorder %v635, 0.0
        %vm746 = vcmp.ge.f32.partialorder %v640, 0.0
        %vm747 = vcmp.ge.f32.partialorder %v645, 0.0
        %vm748 = vcmp.ge.f32.partialorder %v650, 0.0
        %vm749 = vcmp.ge.f32.partialorder %v655, 0.0
        %vm750 = vcmp.ge.f32.partialorder %v660, 0.0
        %vm751 = vcmp.ge.f32.partialorder %v665, 0.0
        %vm752 = vcmp.ge.f32.partialorder %v670, 0.0
        %vm753 = vcmp.ge.f32.partialorder %v675, 0.0
        %vm754 = vcmp.ge.f32.partialorder %v680, 0.0
        %vm755 = vcmp.ge.f32.partialorder %v685, 0.0
        %vm756 = vcmp.ge.f32.partialorder %v690, 0.0
        %vm757 = vcmp.ge.f32.partialorder %v695, 0.0
        %vm758 = vcmp.ge.f32.partialorder %v700, 0.0
        %vm759 = vcmp.ge.f32.partialorder %v705, 0.0
        %vm760 = vcmp.ge.f32.partialorder %v710, 0.0
        %vm761 = vcmp.ge.f32.partialorder %v715, 0.0
        %vm762 = vcmp.ge.f32.partialorder %v720, 0.0
        %vm763 = vcmp.ge.f32.partialorder %v725, 0.0
        %vm764 = vcmp.ge.f32.partialorder %v730, 0.0
        %v765 = vmul.f32 %v575, 0.2
        %v766 = vmul.f32 %v580, 0.2
        %v767 = vmul.f32 %v585, 0.2
        %v768 = vmul.f32 %v590, 0.2
        %v769 = vmul.f32 %v595, 0.2
        %v770 = vmul.f32 %v600, 0.2
        %v771 = vmul.f32 %v605, 0.2
        %v772 = vmul.f32 %v610, 0.2
        %v773 = vmul.f32 %v615, 0.2
        %v774 = vmul.f32 %v620, 0.2
        %v775 = vmul.f32 %v625, 0.2
        %v776 = vmul.f32 %v630, 0.2
        %v777 = vmul.f32 %v635, 0.2
        %v778 = vmul.f32 %v640, 0.2
        %v779 = vmul.f32 %v645, 0.2
        %v780 = vmul.f32 %v650, 0.2
        %v781 = vmul.f32 %v655, 0.2
        %v782 = vmul.f32 %v660, 0.2
        %v783 = vmul.f32 %v665, 0.2
        %v784 = vmul.f32 %v670, 0.2
        %v785 = vmul.f32 %v675, 0.2
        %v786 = vmul.f32 %v680, 0.2
        %v787 = vmul.f32 %v685, 0.2
        %v788 = vmul.f32 %v690, 0.2
        %v789 = vmul.f32 %v695, 0.2
        %v790 = vmul.f32 %v700, 0.2
        %v791 = vmul.f32 %v705, 0.2
        %v792 = vmul.f32 %v710, 0.2
        %v793 = vmul.f32 %v715, 0.2
        %v794 = vmul.f32 %v720, 0.2
        %v795 = vmul.f32 %v725, 0.2
        %v796 = vmul.f32 %v730, 0.2
        %v797 = vsel %vm733, %v575, %v765
        %v798 = vsel %vm734, %v580, %v766
        %v799 = vsel %vm735, %v585, %v767
        %v800 = vsel %vm736, %v590, %v768
        %v801 = vsel %vm737, %v595, %v769
        %v802 = vsel %vm738, %v600, %v770
        %v803 = vsel %vm739, %v605, %v771
        %v804 = vsel %vm740, %v610, %v772
        %v805 = vsel %vm741, %v615, %v773
        %v806 = vsel %vm742, %v620, %v774
        %v807 = vsel %vm743, %v625, %v775
        %v808 = vsel %vm744, %v630, %v776
        %v809 = vsel %vm745, %v635, %v777
        %v810 = vsel %vm746, %v640, %v778
        %v811 = vsel %vm747, %v645, %v779
        %v812 = vsel %vm748, %v650, %v780
        %v813 = vsel %vm749, %v655, %v781
        %v814 = vsel %vm750, %v660, %v782
        %v815 = vsel %vm751, %v665, %v783
        %v816 = vsel %vm752, %v670, %v784
        %v817 = vsel %vm753, %v675, %v785
        %v818 = vsel %vm754, %v680, %v786
        %v819 = vsel %vm755, %v685, %v787
        %v820 = vsel %vm756, %v690, %v788
        %v821 = vsel %vm757, %v695, %v789
        %v822 = vsel %vm758, %v700, %v790
        %v823 = vsel %vm759, %v705, %v791
        %v824 = vsel %vm760, %v710, %v792
        %v825 = vsel %vm761, %v715, %v793
        %v826 = vsel %vm762, %v720, %v794
        %v827 = vsel %vm763, %v725, %v795
        %v828 = vsel %vm764, %v730, %v796
        %v829 = vld [vmem:[%s3] sm:$0xff]
        %v830 = vld [vmem:[%s3 + $0x8] sm:$0xff]
        %v831 = vld [vmem:[%s3 + $0x10] sm:$0xff]
        %v832 = vld [vmem:[%s3 + $0x18] sm:$0xff]
        %v833 = vld [vmem:[%s3 + $0x20] sm:$0xff]
        %v834 = vld [vmem:[%s3 + $0x28] sm:$0xff]
        %v835 = vld [vmem:[%s3 + $0x30] sm:$0xff]
        %v836 = vld [vmem:[%s3 + $0x38] sm:$0xff]
        %v837 = vld [vmem:[%s3 + $0x40] sm:$0xff]
        %v838 = vld [vmem:[%s3 + $0x48] sm:$0xff]
        %v839 = vld [vmem:[%s3 + $0x50] sm:$0xff]
        %v840 = vld [vmem:[%s3 + $0x58] sm:$0xff]
        %v841 = vld [vmem:[%s3 + $0x60] sm:$0xff]
        %v842 = vld [vmem:[%s3 + $0x68] sm:$0xff]
        %v843 = vld [vmem:[%s3 + $0x70] sm:$0xff]
        %v844 = vld [vmem:[%s3 + $0x78] sm:$0xff]
        %v845 = vld [vmem:[%s3 + $0x80] sm:$0xff]
        %v846 = vld [vmem:[%s3 + $0x88] sm:$0xff]
        %v847 = vld [vmem:[%s3 + $0x90] sm:$0xff]
        %v848 = vld [vmem:[%s3 + $0x98] sm:$0xff]
        %v849 = vld [vmem:[%s3 + $0xa0] sm:$0xff]
        %v850 = vld [vmem:[%s3 + $0xa8] sm:$0xff]
        %v851 = vld [vmem:[%s3 + $0xb0] sm:$0xff]
        %v852 = vld [vmem:[%s3 + $0xb8] sm:$0xff]
        %v853 = vld [vmem:[%s3 + $0xc0] sm:$0xff]
        %v854 = vld [vmem:[%s3 + $0xc8] sm:$0xff]
        %v855 = vld [vmem:[%s3 + $0xd0] sm:$0xff]
        %v856 = vld [vmem:[%s3 + $0xd8] sm:$0xff]
        %v857 = vld [vmem:[%s3 + $0xe0] sm:$0xff]
        %v858 = vld [vmem:[%s3 + $0xe8] sm:$0xff]
        %v859 = vld [vmem:[%s3 + $0xf0] sm:$0xff]
        %v860 = vld [vmem:[%s3 + $0xf8] sm:$0xff]
        %v861 = vld [vmem:[%s4] sm:$0x3]
        %v863 = vlaneseq
        %v864 = vshrl.u32 %v863, 7
        %v865 = vsub.s32 0, %v864
        %v866 = vrot.slane %v861, %v865
        %v867 = vlaneseq
        %v868 = vshrl.u32 %v867, 7
        %v869 = vsub.s32 1, %v868
        %v870 = vrot.slane %v861, %v869
        %873 = vmatprep.subr.mxu0 %v860
        %874 = vmatpush1.msra.mxu0 %v859
        %875 = vmatprep.subr.mxu0 %v858
        %876 = vmatpush1.msra.mxu0 %v857
        %877 = vmatprep.subr.mxu0 %v856
        %878 = vmatpush1.msra.mxu0 %v855
        %879 = vmatprep.subr.mxu0 %v854
        %880 = vmatpush1.msra.mxu0 %v853
        %881 = vmatprep.subr.mxu0 %v852
        %882 = vmatpush1.msra.mxu0 %v851
        %883 = vmatprep.subr.mxu0 %v850
        %884 = vmatpush1.msra.mxu0 %v849
        %885 = vmatprep.subr.mxu0 %v848
        %886 = vmatpush1.msra.mxu0 %v847
        %887 = vmatprep.subr.mxu0 %v846
        %888 = vmatpush1.msra.mxu0 %v845
        %889 = vmatprep.subr.mxu0 %v844
        %890 = vmatpush1.msra.mxu0 %v843
        %891 = vmatprep.subr.mxu0 %v842
        %892 = vmatpush1.msra.mxu0 %v841
        %893 = vmatprep.subr.mxu0 %v840
        %894 = vmatpush1.msra.mxu0 %v839
        %895 = vmatprep.subr.mxu0 %v838
        %896 = vmatpush1.msra.mxu0 %v837
        %897 = vmatprep.subr.mxu0 %v836
        %898 = vmatpush1.msra.mxu0 %v835
        %899 = vmatprep.subr.mxu0 %v834
        %900 = vmatpush1.msra.mxu0 %v833
        %901 = vmatprep.subr.mxu0 %v832
        %902 = vmatpush1.msra.mxu0 %v831
        %903 = vmatprep.subr.mxu0 %v830
        %904 = vmatpush1.msra.mxu0 %v829
        %905 = vmatprep.subr.mxu0 0.0
        %906 = vmatpush2.msra.mxu0 0.0
        %907 = vmatprep.subr.mxu0 0.0
        %908 = vmatpush2.msra.mxu0 0.0
        %909 = vmatprep.subr.mxu0 0.0
        %910 = vmatpush2.msra.mxu0 0.0
        %911 = vmatprep.subr.mxu0 0.0
        %912 = vmatpush2.msra.mxu0 0.0
        %913 = vmatprep.subr.mxu0 0.0
        %914 = vmatpush2.msra.mxu0 0.0
        %915 = vmatprep.subr.mxu0 0.0
        %916 = vmatpush2.msra.mxu0 0.0
        %917 = vmatprep.subr.mxu0 0.0
        %918 = vmatpush2.msra.mxu0 0.0
        %919 = vmatprep.subr.mxu0 0.0
        %920 = vmatpush2.msra.mxu0 0.0
        %921 = vmatprep.subr.mxu0 0.0
        %922 = vmatpush2.msra.mxu0 0.0
        %923 = vmatprep.subr.mxu0 0.0
        %924 = vmatpush2.msra.mxu0 0.0
        %925 = vmatprep.subr.mxu0 0.0
        %926 = vmatpush2.msra.mxu0 0.0
        %927 = vmatprep.subr.mxu0 0.0
        %928 = vmatpush2.msra.mxu0 0.0
        %929 = vmatprep.subr.mxu0 0.0
        %930 = vmatpush2.msra.mxu0 0.0
        %931 = vmatprep.subr.mxu0 0.0
        %932 = vmatpush2.msra.mxu0 0.0
        %933 = vmatprep.subr.mxu0 0.0
        %934 = vmatpush2.msra.mxu0 0.0
        %935 = vmatprep.subr.mxu0 0.0
        %936 = vmatpush2.msra.mxu0 0.0
        %937 = vmatprep.mubr.f32.mxu0 0.0
        %938 = vmatmul.mubr.f32.gmra.mxu0 %v797
        %v939 = vpop.f32.mrf.mxu0
        %v940 = vadd.f32 %v866, %v939
        %v941 = vpop.f32.mrf.mxu0
        %v942 = vadd.f32 %v870, %v941
        %943 = vmatprep.mubr.f32.mxu0 0.0
        %944 = vmatmul.mubr.f32.gmra.mxu0 %v798
        %v945 = vpop.f32.mrf.mxu0
        %v946 = vadd.f32 %v866, %v945
        %v947 = vpop.f32.mrf.mxu0
        %v948 = vadd.f32 %v870, %v947
        %949 = vmatprep.mubr.f32.mxu0 0.0
        %950 = vmatmul.mubr.f32.gmra.mxu0 %v799
        %v951 = vpop.f32.mrf.mxu0
        %v952 = vadd.f32 %v866, %v951
        %v953 = vpop.f32.mrf.mxu0
        %v954 = vadd.f32 %v870, %v953
        %955 = vmatprep.mubr.f32.mxu0 0.0
        %956 = vmatmul.mubr.f32.gmra.mxu0 %v800
        %v957 = vpop.f32.mrf.mxu0
        %v958 = vadd.f32 %v866, %v957
        %v959 = vpop.f32.mrf.mxu0
        %v960 = vadd.f32 %v870, %v959
        %961 = vmatprep.mubr.f32.mxu0 0.0
        %962 = vmatmul.mubr.f32.gmra.mxu0 %v801
        %v963 = vpop.f32.mrf.mxu0
        %v964 = vadd.f32 %v866, %v963
        %v965 = vpop.f32.mrf.mxu0
        %v966 = vadd.f32 %v870, %v965
        %967 = vmatprep.mubr.f32.mxu0 0.0
        %968 = vmatmul.mubr.f32.gmra.mxu0 %v802
        %v969 = vpop.f32.mrf.mxu0
        %v970 = vadd.f32 %v866, %v969
        %v971 = vpop.f32.mrf.mxu0
        %v972 = vadd.f32 %v870, %v971
        %973 = vmatprep.mubr.f32.mxu0 0.0
        %974 = vmatmul.mubr.f32.gmra.mxu0 %v803
        %v975 = vpop.f32.mrf.mxu0
        %v976 = vadd.f32 %v866, %v975
        %v977 = vpop.f32.mrf.mxu0
        %v978 = vadd.f32 %v870, %v977
        %979 = vmatprep.mubr.f32.mxu0 0.0
        %980 = vmatmul.mubr.f32.gmra.mxu0 %v804
        %v981 = vpop.f32.mrf.mxu0
        %v982 = vadd.f32 %v866, %v981
        %v983 = vpop.f32.mrf.mxu0
        %v984 = vadd.f32 %v870, %v983
        %985 = vmatprep.mubr.f32.mxu0 0.0
        %986 = vmatmul.mubr.f32.gmra.mxu0 %v805
        %v987 = vpop.f32.mrf.mxu0
        %v988 = vadd.f32 %v866, %v987
        %v989 = vpop.f32.mrf.mxu0
        %v990 = vadd.f32 %v870, %v989
        %991 = vmatprep.mubr.f32.mxu0 0.0
        %992 = vmatmul.mubr.f32.gmra.mxu0 %v806
        %v993 = vpop.f32.mrf.mxu0
        %v994 = vadd.f32 %v866, %v993
        %v995 = vpop.f32.mrf.mxu0
        %v996 = vadd.f32 %v870, %v995
        %997 = vmatprep.mubr.f32.mxu0 0.0
        %998 = vmatmul.mubr.f32.gmra.mxu0 %v807
        %v999 = vpop.f32.mrf.mxu0
        %v1000 = vadd.f32 %v866, %v999
        %v1001 = vpop.f32.mrf.mxu0
        %v1002 = vadd.f32 %v870, %v1001
        %1003 = vmatprep.mubr.f32.mxu0 0.0
        %1004 = vmatmul.mubr.f32.gmra.mxu0 %v808
        %v1005 = vpop.f32.mrf.mxu0
        %v1006 = vadd.f32 %v866, %v1005
        %v1007 = vpop.f32.mrf.mxu0
        %v1008 = vadd.f32 %v870, %v1007
        %1009 = vmatprep.mubr.f32.mxu0 0.0
        %1010 = vmatmul.mubr.f32.gmra.mxu0 %v809
        %v1011 = vpop.f32.mrf.mxu0
        %v1012 = vadd.f32 %v866, %v1011
        %v1013 = vpop.f32.mrf.mxu0
        %v1014 = vadd.f32 %v870, %v1013
        %1015 = vmatprep.mubr.f32.mxu0 0.0
        %1016 = vmatmul.mubr.f32.gmra.mxu0 %v810
        %v1017 = vpop.f32.mrf.mxu0
        %v1018 = vadd.f32 %v866, %v1017
        %v1019 = vpop.f32.mrf.mxu0
        %v1020 = vadd.f32 %v870, %v1019
        %1021 = vmatprep.mubr.f32.mxu0 0.0
        %1022 = vmatmul.mubr.f32.gmra.mxu0 %v811
        %v1023 = vpop.f32.mrf.mxu0
        %v1024 = vadd.f32 %v866, %v1023
        %v1025 = vpop.f32.mrf.mxu0
        %v1026 = vadd.f32 %v870, %v1025
        %1027 = vmatprep.mubr.f32.mxu0 0.0
        %1028 = vmatmul.mubr.f32.gmra.mxu0 %v812
        %v1029 = vpop.f32.mrf.mxu0
        %v1030 = vadd.f32 %v866, %v1029
        %v1031 = vpop.f32.mrf.mxu0
        %v1032 = vadd.f32 %v870, %v1031
        %1033 = vmatprep.mubr.f32.mxu0 0.0
        %1034 = vmatmul.mubr.f32.gmra.mxu0 %v813
        %v1035 = vpop.f32.mrf.mxu0
        %v1036 = vadd.f32 %v866, %v1035
        %v1037 = vpop.f32.mrf.mxu0
        %v1038 = vadd.f32 %v870, %v1037
        %1039 = vmatprep.mubr.f32.mxu0 0.0
        %1040 = vmatmul.mubr.f32.gmra.mxu0 %v814
        %v1041 = vpop.f32.mrf.mxu0
        %v1042 = vadd.f32 %v866, %v1041
        %v1043 = vpop.f32.mrf.mxu0
        %v1044 = vadd.f32 %v870, %v1043
        %1045 = vmatprep.mubr.f32.mxu0 0.0
        %1046 = vmatmul.mubr.f32.gmra.mxu0 %v815
        %v1047 = vpop.f32.mrf.mxu0
        %v1048 = vadd.f32 %v866, %v1047
        %v1049 = vpop.f32.mrf.mxu0
        %v1050 = vadd.f32 %v870, %v1049
        %1051 = vmatprep.mubr.f32.mxu0 0.0
        %1052 = vmatmul.mubr.f32.gmra.mxu0 %v816
        %v1053 = vpop.f32.mrf.mxu0
        %v1054 = vadd.f32 %v866, %v1053
        %v1055 = vpop.f32.mrf.mxu0
        %v1056 = vadd.f32 %v870, %v1055
        %1057 = vmatprep.mubr.f32.mxu0 0.0
        %1058 = vmatmul.mubr.f32.gmra.mxu0 %v817
        %v1059 = vpop.f32.mrf.mxu0
        %v1060 = vadd.f32 %v866, %v1059
        %v1061 = vpop.f32.mrf.mxu0
        %v1062 = vadd.f32 %v870, %v1061
        %1063 = vmatprep.mubr.f32.mxu0 0.0
        %1064 = vmatmul.mubr.f32.gmra.mxu0 %v818
        %v1065 = vpop.f32.mrf.mxu0
        %v1066 = vadd.f32 %v866, %v1065
        %v1067 = vpop.f32.mrf.mxu0
        %v1068 = vadd.f32 %v870, %v1067
        %1069 = vmatprep.mubr.f32.mxu0 0.0
        %1070 = vmatmul.mubr.f32.gmra.mxu0 %v819
        %v1071 = vpop.f32.mrf.mxu0
        %v1072 = vadd.f32 %v866, %v1071
        %v1073 = vpop.f32.mrf.mxu0
        %v1074 = vadd.f32 %v870, %v1073
        %1075 = vmatprep.mubr.f32.mxu0 0.0
        %1076 = vmatmul.mubr.f32.gmra.mxu0 %v820
        %v1077 = vpop.f32.mrf.mxu0
        %v1078 = vadd.f32 %v866, %v1077
        %v1079 = vpop.f32.mrf.mxu0
        %v1080 = vadd.f32 %v870, %v1079
        %1081 = vmatprep.mubr.f32.mxu0 0.0
        %1082 = vmatmul.mubr.f32.gmra.mxu0 %v821
        %v1083 = vpop.f32.mrf.mxu0
        %v1084 = vadd.f32 %v866, %v1083
        %v1085 = vpop.f32.mrf.mxu0
        %v1086 = vadd.f32 %v870, %v1085
        %1087 = vmatprep.mubr.f32.mxu0 0.0
        %1088 = vmatmul.mubr.f32.gmra.mxu0 %v822
        %v1089 = vpop.f32.mrf.mxu0
        %v1090 = vadd.f32 %v866, %v1089
        %v1091 = vpop.f32.mrf.mxu0
        %v1092 = vadd.f32 %v870, %v1091
        %1093 = vmatprep.mubr.f32.mxu0 0.0
        %1094 = vmatmul.mubr.f32.gmra.mxu0 %v823
        %v1095 = vpop.f32.mrf.mxu0
        %v1096 = vadd.f32 %v866, %v1095
        %v1097 = vpop.f32.mrf.mxu0
        %v1098 = vadd.f32 %v870, %v1097
        %1099 = vmatprep.mubr.f32.mxu0 0.0
        %1100 = vmatmul.mubr.f32.gmra.mxu0 %v824
        %v1101 = vpop.f32.mrf.mxu0
        %v1102 = vadd.f32 %v866, %v1101
        %v1103 = vpop.f32.mrf.mxu0
        %v1104 = vadd.f32 %v870, %v1103
        %1105 = vmatprep.mubr.f32.mxu0 0.0
        %1106 = vmatmul.mubr.f32.gmra.mxu0 %v825
        %v1107 = vpop.f32.mrf.mxu0
        %v1108 = vadd.f32 %v866, %v1107
        %v1109 = vpop.f32.mrf.mxu0
        %v1110 = vadd.f32 %v870, %v1109
        %1111 = vmatprep.mubr.f32.mxu0 0.0
        %1112 = vmatmul.mubr.f32.gmra.mxu0 %v826
        %v1113 = vpop.f32.mrf.mxu0
        %v1114 = vadd.f32 %v866, %v1113
        %v1115 = vpop.f32.mrf.mxu0
        %v1116 = vadd.f32 %v870, %v1115
        %1117 = vmatprep.mubr.f32.mxu0 0.0
        %1118 = vmatmul.mubr.f32.gmra.mxu0 %v827
        %v1119 = vpop.f32.mrf.mxu0
        %v1120 = vadd.f32 %v866, %v1119
        %v1121 = vpop.f32.mrf.mxu0
        %v1122 = vadd.f32 %v870, %v1121
        %1123 = vmatprep.mubr.f32.mxu0 0.0
        %1124 = vmatmul.mubr.f32.gmra.mxu0 %v828
        %v1125 = vpop.f32.mrf.mxu0
        %v1126 = vadd.f32 %v866, %v1125
        %v1127 = vpop.f32.mrf.mxu0
        %v1128 = vadd.f32 %v870, %v1127
        %1129 = vdwg.mxu0
        %vm1130 = vcmp.ge.f32.partialorder %v940, 0.0
        %vm1131 = vcmp.ge.f32.partialorder %v942, 0.0
        %vm1132 = vcmp.ge.f32.partialorder %v946, 0.0
        %vm1133 = vcmp.ge.f32.partialorder %v948, 0.0
        %vm1134 = vcmp.ge.f32.partialorder %v952, 0.0
        %vm1135 = vcmp.ge.f32.partialorder %v954, 0.0
        %vm1136 = vcmp.ge.f32.partialorder %v958, 0.0
        %vm1137 = vcmp.ge.f32.partialorder %v960, 0.0
        %vm1138 = vcmp.ge.f32.partialorder %v964, 0.0
        %vm1139 = vcmp.ge.f32.partialorder %v966, 0.0
        %vm1140 = vcmp.ge.f32.partialorder %v970, 0.0
        %vm1141 = vcmp.ge.f32.partialorder %v972, 0.0
        %vm1142 = vcmp.ge.f32.partialorder %v976, 0.0
        %vm1143 = vcmp.ge.f32.partialorder %v978, 0.0
        %vm1144 = vcmp.ge.f32.partialorder %v982, 0.0
        %vm1145 = vcmp.ge.f32.partialorder %v984, 0.0
        %vm1146 = vcmp.ge.f32.partialorder %v988, 0.0
        %vm1147 = vcmp.ge.f32.partialorder %v990, 0.0
        %vm1148 = vcmp.ge.f32.partialorder %v994, 0.0
        %vm1149 = vcmp.ge.f32.partialorder %v996, 0.0
        %vm1150 = vcmp.ge.f32.partialorder %v1000, 0.0
        %vm1151 = vcmp.ge.f32.partialorder %v1002, 0.0
        %vm1152 = vcmp.ge.f32.partialorder %v1006, 0.0
        %vm1153 = vcmp.ge.f32.partialorder %v1008, 0.0
        %vm1154 = vcmp.ge.f32.partialorder %v1012, 0.0
        %vm1155 = vcmp.ge.f32.partialorder %v1014, 0.0
        %vm1156 = vcmp.ge.f32.partialorder %v1018, 0.0
        %vm1157 = vcmp.ge.f32.partialorder %v1020, 0.0
        %vm1158 = vcmp.ge.f32.partialorder %v1024, 0.0
        %vm1159 = vcmp.ge.f32.partialorder %v1026, 0.0
        %vm1160 = vcmp.ge.f32.partialorder %v1030, 0.0
        %vm1161 = vcmp.ge.f32.partialorder %v1032, 0.0
        %vm1162 = vcmp.ge.f32.partialorder %v1036, 0.0
        %vm1163 = vcmp.ge.f32.partialorder %v1038, 0.0
        %vm1164 = vcmp.ge.f32.partialorder %v1042, 0.0
        %vm1165 = vcmp.ge.f32.partialorder %v1044, 0.0
        %vm1166 = vcmp.ge.f32.partialorder %v1048, 0.0
        %vm1167 = vcmp.ge.f32.partialorder %v1050, 0.0
        %vm1168 = vcmp.ge.f32.partialorder %v1054, 0.0
        %vm1169 = vcmp.ge.f32.partialorder %v1056, 0.0
        %vm1170 = vcmp.ge.f32.partialorder %v1060, 0.0
        %vm1171 = vcmp.ge.f32.partialorder %v1062, 0.0
        %vm1172 = vcmp.ge.f32.partialorder %v1066, 0.0
        %vm1173 = vcmp.ge.f32.partialorder %v1068, 0.0
        %vm1174 = vcmp.ge.f32.partialorder %v1072, 0.0
        %vm1175 = vcmp.ge.f32.partialorder %v1074, 0.0
        %vm1176 = vcmp.ge.f32.partialorder %v1078, 0.0
        %vm1177 = vcmp.ge.f32.partialorder %v1080, 0.0
        %vm1178 = vcmp.ge.f32.partialorder %v1084, 0.0
        %vm1179 = vcmp.ge.f32.partialorder %v1086, 0.0
        %vm1180 = vcmp.ge.f32.partialorder %v1090, 0.0
        %vm1181 = vcmp.ge.f32.partialorder %v1092, 0.0
        %vm1182 = vcmp.ge.f32.partialorder %v1096, 0.0
        %vm1183 = vcmp.ge.f32.partialorder %v1098, 0.0
        %vm1184 = vcmp.ge.f32.partialorder %v1102, 0.0
        %vm1185 = vcmp.ge.f32.partialorder %v1104, 0.0
        %vm1186 = vcmp.ge.f32.partialorder %v1108, 0.0
        %vm1187 = vcmp.ge.f32.partialorder %v1110, 0.0
        %vm1188 = vcmp.ge.f32.partialorder %v1114, 0.0
        %vm1189 = vcmp.ge.f32.partialorder %v1116, 0.0
        %vm1190 = vcmp.ge.f32.partialorder %v1120, 0.0
        %vm1191 = vcmp.ge.f32.partialorder %v1122, 0.0
        %vm1192 = vcmp.ge.f32.partialorder %v1126, 0.0
        %vm1193 = vcmp.ge.f32.partialorder %v1128, 0.0
        %v1194 = vmul.f32 %v940, 0.2
        %v1195 = vmul.f32 %v942, 0.2
        %v1196 = vmul.f32 %v946, 0.2
        %v1197 = vmul.f32 %v948, 0.2
        %v1198 = vmul.f32 %v952, 0.2
        %v1199 = vmul.f32 %v954, 0.2
        %v1200 = vmul.f32 %v958, 0.2
        %v1201 = vmul.f32 %v960, 0.2
        %v1202 = vmul.f32 %v964, 0.2
        %v1203 = vmul.f32 %v966, 0.2
        %v1204 = vmul.f32 %v970, 0.2
        %v1205 = vmul.f32 %v972, 0.2
        %v1206 = vmul.f32 %v976, 0.2
        %v1207 = vmul.f32 %v978, 0.2
        %v1208 = vmul.f32 %v982, 0.2
        %v1209 = vmul.f32 %v984, 0.2
        %v1210 = vmul.f32 %v988, 0.2
        %v1211 = vmul.f32 %v990, 0.2
        %v1212 = vmul.f32 %v994, 0.2
        %v1213 = vmul.f32 %v996, 0.2
        %v1214 = vmul.f32 %v1000, 0.2
        %v1215 = vmul.f32 %v1002, 0.2
        %v1216 = vmul.f32 %v1006, 0.2
        %v1217 = vmul.f32 %v1008, 0.2
        %v1218 = vmul.f32 %v1012, 0.2
        %v1219 = vmul.f32 %v1014, 0.2
        %v1220 = vmul.f32 %v1018, 0.2
        %v1221 = vmul.f32 %v1020, 0.2
        %v1222 = vmul.f32 %v1024, 0.2
        %v1223 = vmul.f32 %v1026, 0.2
        %v1224 = vmul.f32 %v1030, 0.2
        %v1225 = vmul.f32 %v1032, 0.2
        %v1226 = vmul.f32 %v1036, 0.2
        %v1227 = vmul.f32 %v1038, 0.2
        %v1228 = vmul.f32 %v1042, 0.2
        %v1229 = vmul.f32 %v1044, 0.2
        %v1230 = vmul.f32 %v1048, 0.2
        %v1231 = vmul.f32 %v1050, 0.2
        %v1232 = vmul.f32 %v1054, 0.2
        %v1233 = vmul.f32 %v1056, 0.2
        %v1234 = vmul.f32 %v1060, 0.2
        %v1235 = vmul.f32 %v1062, 0.2
        %v1236 = vmul.f32 %v1066, 0.2
        %v1237 = vmul.f32 %v1068, 0.2
        %v1238 = vmul.f32 %v1072, 0.2
        %v1239 = vmul.f32 %v1074, 0.2
        %v1240 = vmul.f32 %v1078, 0.2
        %v1241 = vmul.f32 %v1080, 0.2
        %v1242 = vmul.f32 %v1084, 0.2
        %v1243 = vmul.f32 %v1086, 0.2
        %v1244 = vmul.f32 %v1090, 0.2
        %v1245 = vmul.f32 %v1092, 0.2
        %v1246 = vmul.f32 %v1096, 0.2
        %v1247 = vmul.f32 %v1098, 0.2
        %v1248 = vmul.f32 %v1102, 0.2
        %v1249 = vmul.f32 %v1104, 0.2
        %v1250 = vmul.f32 %v1108, 0.2
        %v1251 = vmul.f32 %v1110, 0.2
        %v1252 = vmul.f32 %v1114, 0.2
        %v1253 = vmul.f32 %v1116, 0.2
        %v1254 = vmul.f32 %v1120, 0.2
        %v1255 = vmul.f32 %v1122, 0.2
        %v1256 = vmul.f32 %v1126, 0.2
        %v1257 = vmul.f32 %v1128, 0.2
        %v1258 = vsel %vm1130, %v940, %v1194
        %v1259 = vsel %vm1131, %v942, %v1195
        %v1260 = vsel %vm1132, %v946, %v1196
        %v1261 = vsel %vm1133, %v948, %v1197
        %v1262 = vsel %vm1134, %v952, %v1198
        %v1263 = vsel %vm1135, %v954, %v1199
        %v1264 = vsel %vm1136, %v958, %v1200
        %v1265 = vsel %vm1137, %v960, %v1201
        %v1266 = vsel %vm1138, %v964, %v1202
        %v1267 = vsel %vm1139, %v966, %v1203
        %v1268 = vsel %vm1140, %v970, %v1204
        %v1269 = vsel %vm1141, %v972, %v1205
        %v1270 = vsel %vm1142, %v976, %v1206
        %v1271 = vsel %vm1143, %v978, %v1207
        %v1272 = vsel %vm1144, %v982, %v1208
        %v1273 = vsel %vm1145, %v984, %v1209
        %v1274 = vsel %vm1146, %v988, %v1210
        %v1275 = vsel %vm1147, %v990, %v1211
        %v1276 = vsel %vm1148, %v994, %v1212
        %v1277 = vsel %vm1149, %v996, %v1213
        %v1278 = vsel %vm1150, %v1000, %v1214
        %v1279 = vsel %vm1151, %v1002, %v1215
        %v1280 = vsel %vm1152, %v1006, %v1216
        %v1281 = vsel %vm1153, %v1008, %v1217
        %v1282 = vsel %vm1154, %v1012, %v1218
        %v1283 = vsel %vm1155, %v1014, %v1219
        %v1284 = vsel %vm1156, %v1018, %v1220
        %v1285 = vsel %vm1157, %v1020, %v1221
        %v1286 = vsel %vm1158, %v1024, %v1222
        %v1287 = vsel %vm1159, %v1026, %v1223
        %v1288 = vsel %vm1160, %v1030, %v1224
        %v1289 = vsel %vm1161, %v1032, %v1225
        %v1290 = vsel %vm1162, %v1036, %v1226
        %v1291 = vsel %vm1163, %v1038, %v1227
        %v1292 = vsel %vm1164, %v1042, %v1228
        %v1293 = vsel %vm1165, %v1044, %v1229
        %v1294 = vsel %vm1166, %v1048, %v1230
        %v1295 = vsel %vm1167, %v1050, %v1231
        %v1296 = vsel %vm1168, %v1054, %v1232
        %v1297 = vsel %vm1169, %v1056, %v1233
        %v1298 = vsel %vm1170, %v1060, %v1234
        %v1299 = vsel %vm1171, %v1062, %v1235
        %v1300 = vsel %vm1172, %v1066, %v1236
        %v1301 = vsel %vm1173, %v1068, %v1237
        %v1302 = vsel %vm1174, %v1072, %v1238
        %v1303 = vsel %vm1175, %v1074, %v1239
        %v1304 = vsel %vm1176, %v1078, %v1240
        %v1305 = vsel %vm1177, %v1080, %v1241
        %v1306 = vsel %vm1178, %v1084, %v1242
        %v1307 = vsel %vm1179, %v1086, %v1243
        %v1308 = vsel %vm1180, %v1090, %v1244
        %v1309 = vsel %vm1181, %v1092, %v1245
        %v1310 = vsel %vm1182, %v1096, %v1246
        %v1311 = vsel %vm1183, %v1098, %v1247
        %v1312 = vsel %vm1184, %v1102, %v1248
        %v1313 = vsel %vm1185, %v1104, %v1249
        %v1314 = vsel %vm1186, %v1108, %v1250
        %v1315 = vsel %vm1187, %v1110, %v1251
        %v1316 = vsel %vm1188, %v1114, %v1252
        %v1317 = vsel %vm1189, %v1116, %v1253
        %v1318 = vsel %vm1190, %v1120, %v1254
        %v1319 = vsel %vm1191, %v1122, %v1255
        %v1320 = vsel %vm1192, %v1126, %v1256
        %v1321 = vsel %vm1193, %v1128, %v1257
        %v1322 = vld [vmem:[#allocation5] sm:$0xff]
        %v1323 = vld [vmem:[#allocation5 + $0x8] sm:$0xff]
        %v1324 = vld [vmem:[#allocation5 + $0x10] sm:$0xff]
        %v1325 = vld [vmem:[#allocation5 + $0x18] sm:$0xff]
        %v1326 = vld [vmem:[#allocation5 + $0x20] sm:$0xff]
        %v1327 = vld [vmem:[#allocation5 + $0x28] sm:$0xff]
        %v1328 = vld [vmem:[#allocation5 + $0x30] sm:$0xff]
        %v1329 = vld [vmem:[#allocation5 + $0x38] sm:$0xff]
        %v1330 = vld [vmem:[#allocation5 + $0x40] sm:$0xff]
        %v1331 = vld [vmem:[#allocation5 + $0x48] sm:$0xff]
        %v1332 = vld [vmem:[#allocation5 + $0x50] sm:$0xff]
        %v1333 = vld [vmem:[#allocation5 + $0x58] sm:$0xff]
        %v1334 = vld [vmem:[#allocation5 + $0x60] sm:$0xff]
        %v1335 = vld [vmem:[#allocation5 + $0x68] sm:$0xff]
        %v1336 = vld [vmem:[#allocation5 + $0x70] sm:$0xff]
        %v1337 = vld [vmem:[#allocation5 + $0x78] sm:$0xff]
        %v1338 = vld [vmem:[#allocation5 + $0x80] sm:$0xff]
        %v1339 = vld [vmem:[#allocation5 + $0x88] sm:$0xff]
        %v1340 = vld [vmem:[#allocation5 + $0x90] sm:$0xff]
        %v1341 = vld [vmem:[#allocation5 + $0x98] sm:$0xff]
        %v1342 = vld [vmem:[#allocation5 + $0xa0] sm:$0xff]
        %v1343 = vld [vmem:[#allocation5 + $0xa8] sm:$0xff]
        %v1344 = vld [vmem:[#allocation5 + $0xb0] sm:$0xff]
        %v1345 = vld [vmem:[#allocation5 + $0xb8] sm:$0xff]
        %v1346 = vld [vmem:[#allocation5 + $0xc0] sm:$0xff]
        %v1347 = vld [vmem:[#allocation5 + $0xc8] sm:$0xff]
        %v1348 = vld [vmem:[#allocation5 + $0xd0] sm:$0xff]
        %v1349 = vld [vmem:[#allocation5 + $0xd8] sm:$0xff]
        %v1350 = vld [vmem:[#allocation5 + $0xe0] sm:$0xff]
        %v1351 = vld [vmem:[#allocation5 + $0xe8] sm:$0xff]
        %v1352 = vld [vmem:[#allocation5 + $0xf0] sm:$0xff]
        %v1353 = vld [vmem:[#allocation5 + $0xf8] sm:$0xff]
        %v1354 = vld [vmem:[#allocation5 + $0x100] sm:$0xff]
        %v1355 = vld [vmem:[#allocation5 + $0x108] sm:$0xff]
        %v1356 = vld [vmem:[#allocation5 + $0x110] sm:$0xff]
        %v1357 = vld [vmem:[#allocation5 + $0x118] sm:$0xff]
        %v1358 = vld [vmem:[#allocation5 + $0x120] sm:$0xff]
        %v1359 = vld [vmem:[#allocation5 + $0x128] sm:$0xff]
        %v1360 = vld [vmem:[#allocation5 + $0x130] sm:$0xff]
        %v1361 = vld [vmem:[#allocation5 + $0x138] sm:$0xff]
        %v1362 = vld [vmem:[#allocation5 + $0x140] sm:$0xff]
        %v1363 = vld [vmem:[#allocation5 + $0x148] sm:$0xff]
        %v1364 = vld [vmem:[#allocation5 + $0x150] sm:$0xff]
        %v1365 = vld [vmem:[#allocation5 + $0x158] sm:$0xff]
        %v1366 = vld [vmem:[#allocation5 + $0x160] sm:$0xff]
        %v1367 = vld [vmem:[#allocation5 + $0x168] sm:$0xff]
        %v1368 = vld [vmem:[#allocation5 + $0x170] sm:$0xff]
        %v1369 = vld [vmem:[#allocation5 + $0x178] sm:$0xff]
        %v1370 = vld [vmem:[#allocation5 + $0x180] sm:$0xff]
        %v1371 = vld [vmem:[#allocation5 + $0x188] sm:$0xff]
        %v1372 = vld [vmem:[#allocation5 + $0x190] sm:$0xff]
        %v1373 = vld [vmem:[#allocation5 + $0x198] sm:$0xff]
        %v1374 = vld [vmem:[#allocation5 + $0x1a0] sm:$0xff]
        %v1375 = vld [vmem:[#allocation5 + $0x1a8] sm:$0xff]
        %v1376 = vld [vmem:[#allocation5 + $0x1b0] sm:$0xff]
        %v1377 = vld [vmem:[#allocation5 + $0x1b8] sm:$0xff]
        %v1378 = vld [vmem:[#allocation5 + $0x1c0] sm:$0xff]
        %v1379 = vld [vmem:[#allocation5 + $0x1c8] sm:$0xff]
        %v1380 = vld [vmem:[#allocation5 + $0x1d0] sm:$0xff]
        %v1381 = vld [vmem:[#allocation5 + $0x1d8] sm:$0xff]
        %v1382 = vld [vmem:[#allocation5 + $0x1e0] sm:$0xff]
        %v1383 = vld [vmem:[#allocation5 + $0x1e8] sm:$0xff]
        %v1384 = vld [vmem:[#allocation5 + $0x1f0] sm:$0xff]
        %v1385 = vld [vmem:[#allocation5 + $0x1f8] sm:$0xff]
        %v1386 = vld [vmem:[#allocation5 + $0x200] sm:$0xff]
        %v1387 = vld [vmem:[#allocation5 + $0x208] sm:$0xff]
        %v1388 = vld [vmem:[#allocation5 + $0x210] sm:$0xff]
        %v1389 = vld [vmem:[#allocation5 + $0x218] sm:$0xff]
        %v1390 = vld [vmem:[#allocation5 + $0x220] sm:$0xff]
        %v1391 = vld [vmem:[#allocation5 + $0x228] sm:$0xff]
        %v1392 = vld [vmem:[#allocation5 + $0x230] sm:$0xff]
        %v1393 = vld [vmem:[#allocation5 + $0x238] sm:$0xff]
        %v1394 = vld [vmem:[#allocation5 + $0x240] sm:$0xff]
        %v1395 = vld [vmem:[#allocation5 + $0x248] sm:$0xff]
        %v1396 = vld [vmem:[#allocation5 + $0x250] sm:$0xff]
        %v1397 = vld [vmem:[#allocation5 + $0x258] sm:$0xff]
        %v1398 = vld [vmem:[#allocation5 + $0x260] sm:$0xff]
        %v1399 = vld [vmem:[#allocation5 + $0x268] sm:$0xff]
        %v1400 = vld [vmem:[#allocation5 + $0x270] sm:$0xff]
        %v1401 = vld [vmem:[#allocation5 + $0x278] sm:$0xff]
        %v1402 = vld [vmem:[#allocation5 + $0x280] sm:$0xff]
        %v1403 = vld [vmem:[#allocation5 + $0x288] sm:$0xff]
        %v1404 = vld [vmem:[#allocation5 + $0x290] sm:$0xff]
        %v1405 = vld [vmem:[#allocation5 + $0x298] sm:$0xff]
        %v1406 = vld [vmem:[#allocation5 + $0x2a0] sm:$0xff]
        %v1407 = vld [vmem:[#allocation5 + $0x2a8] sm:$0xff]
        %v1408 = vld [vmem:[#allocation5 + $0x2b0] sm:$0xff]
        %v1409 = vld [vmem:[#allocation5 + $0x2b8] sm:$0xff]
        %v1410 = vld [vmem:[#allocation5 + $0x2c0] sm:$0xff]
        %v1411 = vld [vmem:[#allocation5 + $0x2c8] sm:$0xff]
        %v1412 = vld [vmem:[#allocation5 + $0x2d0] sm:$0xff]
        %v1413 = vld [vmem:[#allocation5 + $0x2d8] sm:$0xff]
        %v1414 = vld [vmem:[#allocation5 + $0x2e0] sm:$0xff]
        %v1415 = vld [vmem:[#allocation5 + $0x2e8] sm:$0xff]
        %v1416 = vld [vmem:[#allocation5 + $0x2f0] sm:$0xff]
        %v1417 = vld [vmem:[#allocation5 + $0x2f8] sm:$0xff]
        %v1418 = vld [vmem:[#allocation5 + $0x300] sm:$0xff]
        %v1419 = vld [vmem:[#allocation5 + $0x308] sm:$0xff]
        %v1420 = vld [vmem:[#allocation5 + $0x310] sm:$0xff]
        %v1421 = vld [vmem:[#allocation5 + $0x318] sm:$0xff]
        %v1422 = vld [vmem:[#allocation5 + $0x320] sm:$0xff]
        %v1423 = vld [vmem:[#allocation5 + $0x328] sm:$0xff]
        %v1424 = vld [vmem:[#allocation5 + $0x330] sm:$0xff]
        %v1425 = vld [vmem:[#allocation5 + $0x338] sm:$0xff]
        %v1426 = vld [vmem:[#allocation5 + $0x340] sm:$0xff]
        %v1427 = vld [vmem:[#allocation5 + $0x348] sm:$0xff]
        %v1428 = vld [vmem:[#allocation5 + $0x350] sm:$0xff]
        %v1429 = vld [vmem:[#allocation5 + $0x358] sm:$0xff]
        %v1430 = vld [vmem:[#allocation5 + $0x360] sm:$0xff]
        %v1431 = vld [vmem:[#allocation5 + $0x368] sm:$0xff]
        %v1432 = vld [vmem:[#allocation5 + $0x370] sm:$0xff]
        %v1433 = vld [vmem:[#allocation5 + $0x378] sm:$0xff]
        %v1434 = vld [vmem:[#allocation5 + $0x380] sm:$0xff]
        %v1435 = vld [vmem:[#allocation5 + $0x388] sm:$0xff]
        %v1436 = vld [vmem:[#allocation5 + $0x390] sm:$0xff]
        %v1437 = vld [vmem:[#allocation5 + $0x398] sm:$0xff]
        %v1438 = vld [vmem:[#allocation5 + $0x3a0] sm:$0xff]
        %v1439 = vld [vmem:[#allocation5 + $0x3a8] sm:$0xff]
        %v1440 = vld [vmem:[#allocation5 + $0x3b0] sm:$0xff]
        %v1441 = vld [vmem:[#allocation5 + $0x3b8] sm:$0xff]
        %v1442 = vld [vmem:[#allocation5 + $0x3c0] sm:$0xff]
        %v1443 = vld [vmem:[#allocation5 + $0x3c8] sm:$0xff]
        %v1444 = vld [vmem:[#allocation5 + $0x3d0] sm:$0xff]
        %v1445 = vld [vmem:[#allocation5 + $0x3d8] sm:$0xff]
        %v1446 = vld [vmem:[#allocation5 + $0x3e0] sm:$0xff]
        %v1447 = vld [vmem:[#allocation5 + $0x3e8] sm:$0xff]
        %v1448 = vld [vmem:[#allocation5 + $0x3f0] sm:$0xff]
        %v1449 = vld [vmem:[#allocation5 + $0x3f8] sm:$0xff]
        %v1450 = vld [vmem:[%s6] sm:$0xf]
        %v1452 = vlaneseq
        %v1453 = vshrl.u32 %v1452, 7
        %v1454 = vsub.s32 0, %v1453
        %v1455 = vrot.slane %v1450, %v1454
        %v1456 = vlaneseq
        %v1457 = vshrl.u32 %v1456, 7
        %v1458 = vsub.s32 1, %v1457
        %v1459 = vrot.slane %v1450, %v1458
        %v1460 = vlaneseq
        %v1461 = vshrl.u32 %v1460, 7
        %v1462 = vsub.s32 2, %v1461
        %v1463 = vrot.slane %v1450, %v1462
        %v1464 = vlaneseq
        %v1465 = vshrl.u32 %v1464, 7
        %v1466 = vsub.s32 3, %v1465
        %v1467 = vrot.slane %v1450, %v1466
        %1472 = vmatprep.subr.mxu0 %v1383
        %1473 = vmatpush1.msra.mxu0 %v1382
        %1474 = vmatprep.subr.mxu0 %v1379
        %1475 = vmatpush1.msra.mxu0 %v1378
        %1476 = vmatprep.subr.mxu0 %v1375
        %1477 = vmatpush1.msra.mxu0 %v1374
        %1478 = vmatprep.subr.mxu0 %v1371
        %1479 = vmatpush1.msra.mxu0 %v1370
        %1480 = vmatprep.subr.mxu0 %v1367
        %1481 = vmatpush1.msra.mxu0 %v1366
        %1482 = vmatprep.subr.mxu0 %v1363
        %1483 = vmatpush1.msra.mxu0 %v1362
        %1484 = vmatprep.subr.mxu0 %v1359
        %1485 = vmatpush1.msra.mxu0 %v1358
        %1486 = vmatprep.subr.mxu0 %v1355
        %1487 = vmatpush1.msra.mxu0 %v1354
        %1488 = vmatprep.subr.mxu0 %v1351
        %1489 = vmatpush1.msra.mxu0 %v1350
        %1490 = vmatprep.subr.mxu0 %v1347
        %1491 = vmatpush1.msra.mxu0 %v1346
        %1492 = vmatprep.subr.mxu0 %v1343
        %1493 = vmatpush1.msra.mxu0 %v1342
        %1494 = vmatprep.subr.mxu0 %v1339
        %1495 = vmatpush1.msra.mxu0 %v1338
        %1496 = vmatprep.subr.mxu0 %v1335
        %1497 = vmatpush1.msra.mxu0 %v1334
        %1498 = vmatprep.subr.mxu0 %v1331
        %1499 = vmatpush1.msra.mxu0 %v1330
        %1500 = vmatprep.subr.mxu0 %v1327
        %1501 = vmatpush1.msra.mxu0 %v1326
        %1502 = vmatprep.subr.mxu0 %v1323
        %1503 = vmatpush1.msra.mxu0 %v1322
        %1504 = vmatprep.subr.mxu0 %v1447
        %1505 = vmatpush2.msra.mxu0 %v1446
        %1506 = vmatprep.subr.mxu0 %v1443
        %1507 = vmatpush2.msra.mxu0 %v1442
        %1508 = vmatprep.subr.mxu0 %v1439
        %1509 = vmatpush2.msra.mxu0 %v1438
        %1510 = vmatprep.subr.mxu0 %v1435
        %1511 = vmatpush2.msra.mxu0 %v1434
        %1512 = vmatprep.subr.mxu0 %v1431
        %1513 = vmatpush2.msra.mxu0 %v1430
        %1514 = vmatprep.subr.mxu0 %v1427
        %1515 = vmatpush2.msra.mxu0 %v1426
        %1516 = vmatprep.subr.mxu0 %v1423
        %1517 = vmatpush2.msra.mxu0 %v1422
        %1518 = vmatprep.subr.mxu0 %v1419
        %1519 = vmatpush2.msra.mxu0 %v1418
        %1520 = vmatprep.subr.mxu0 %v1415
        %1521 = vmatpush2.msra.mxu0 %v1414
        %1522 = vmatprep.subr.mxu0 %v1411
        %1523 = vmatpush2.msra.mxu0 %v1410
        %1524 = vmatprep.subr.mxu0 %v1407
        %1525 = vmatpush2.msra.mxu0 %v1406
        %1526 = vmatprep.subr.mxu0 %v1403
        %1527 = vmatpush2.msra.mxu0 %v1402
        %1528 = vmatprep.subr.mxu0 %v1399
        %1529 = vmatpush2.msra.mxu0 %v1398
        %1530 = vmatprep.subr.mxu0 %v1395
        %1531 = vmatpush2.msra.mxu0 %v1394
        %1532 = vmatprep.subr.mxu0 %v1391
        %1533 = vmatpush2.msra.mxu0 %v1390
        %1534 = vmatprep.subr.mxu0 %v1387
        %1535 = vmatpush2.msra.mxu0 %v1386
        %1536 = vmatprep.mubr.f32.mxu0 %v1259
        %1537 = vmatmul.mubr.f32.gmra.mxu0 %v1258
        %v1538 = vpop.f32.mrf.mxu0
        %v1539 = vadd.f32 %v1455, %v1538
        %v1540 = vpop.f32.mrf.mxu0
        %v1541 = vadd.f32 %v1459, %v1540
        %1542 = vmatprep.mubr.f32.mxu0 %v1261
        %1543 = vmatmul.mubr.f32.gmra.mxu0 %v1260
        %v1544 = vpop.f32.mrf.mxu0
        %v1545 = vadd.f32 %v1455, %v1544
        %v1546 = vpop.f32.mrf.mxu0
        %v1547 = vadd.f32 %v1459, %v1546
        %1548 = vmatprep.mubr.f32.mxu0 %v1263
        %1549 = vmatmul.mubr.f32.gmra.mxu0 %v1262
        %v1550 = vpop.f32.mrf.mxu0
        %v1551 = vadd.f32 %v1455, %v1550
        %v1552 = vpop.f32.mrf.mxu0
        %v1553 = vadd.f32 %v1459, %v1552
        %1554 = vmatprep.mubr.f32.mxu0 %v1265
        %1555 = vmatmul.mubr.f32.gmra.mxu0 %v1264
        %v1556 = vpop.f32.mrf.mxu0
        %v1557 = vadd.f32 %v1455, %v1556
        %v1558 = vpop.f32.mrf.mxu0
        %v1559 = vadd.f32 %v1459, %v1558
        %1560 = vmatprep.mubr.f32.mxu0 %v1267
        %1561 = vmatmul.mubr.f32.gmra.mxu0 %v1266
        %v1562 = vpop.f32.mrf.mxu0
        %v1563 = vadd.f32 %v1455, %v1562
        %v1564 = vpop.f32.mrf.mxu0
        %v1565 = vadd.f32 %v1459, %v1564
        %1566 = vmatprep.mubr.f32.mxu0 %v1269
        %1567 = vmatmul.mubr.f32.gmra.mxu0 %v1268
        %v1568 = vpop.f32.mrf.mxu0
        %v1569 = vadd.f32 %v1455, %v1568
        %v1570 = vpop.f32.mrf.mxu0
        %v1571 = vadd.f32 %v1459, %v1570
        %1572 = vmatprep.mubr.f32.mxu0 %v1271
        %1573 = vmatmul.mubr.f32.gmra.mxu0 %v1270
        %v1574 = vpop.f32.mrf.mxu0
        %v1575 = vadd.f32 %v1455, %v1574
        %v1576 = vpop.f32.mrf.mxu0
        %v1577 = vadd.f32 %v1459, %v1576
        %1578 = vmatprep.mubr.f32.mxu0 %v1273
        %1579 = vmatmul.mubr.f32.gmra.mxu0 %v1272
        %v1580 = vpop.f32.mrf.mxu0
        %v1581 = vadd.f32 %v1455, %v1580
        %v1582 = vpop.f32.mrf.mxu0
        %v1583 = vadd.f32 %v1459, %v1582
        %1584 = vmatprep.mubr.f32.mxu0 %v1275
        %1585 = vmatmul.mubr.f32.gmra.mxu0 %v1274
        %v1586 = vpop.f32.mrf.mxu0
        %v1587 = vadd.f32 %v1455, %v1586
        %v1588 = vpop.f32.mrf.mxu0
        %v1589 = vadd.f32 %v1459, %v1588
        %1590 = vmatprep.mubr.f32.mxu0 %v1277
        %1591 = vmatmul.mubr.f32.gmra.mxu0 %v1276
        %v1592 = vpop.f32.mrf.mxu0
        %v1593 = vadd.f32 %v1455, %v1592
        %v1594 = vpop.f32.mrf.mxu0
        %v1595 = vadd.f32 %v1459, %v1594
        %1596 = vmatprep.mubr.f32.mxu0 %v1279
        %1597 = vmatmul.mubr.f32.gmra.mxu0 %v1278
        %v1598 = vpop.f32.mrf.mxu0
        %v1599 = vadd.f32 %v1455, %v1598
        %v1600 = vpop.f32.mrf.mxu0
        %v1601 = vadd.f32 %v1459, %v1600
        %1602 = vmatprep.mubr.f32.mxu0 %v1281
        %1603 = vmatmul.mubr.f32.gmra.mxu0 %v1280
        %v1604 = vpop.f32.mrf.mxu0
        %v1605 = vadd.f32 %v1455, %v1604
        %v1606 = vpop.f32.mrf.mxu0
        %v1607 = vadd.f32 %v1459, %v1606
        %1608 = vmatprep.mubr.f32.mxu0 %v1283
        %1609 = vmatmul.mubr.f32.gmra.mxu0 %v1282
        %v1610 = vpop.f32.mrf.mxu0
        %v1611 = vadd.f32 %v1455, %v1610
        %v1612 = vpop.f32.mrf.mxu0
        %v1613 = vadd.f32 %v1459, %v1612
        %1614 = vmatprep.mubr.f32.mxu0 %v1285
        %1615 = vmatmul.mubr.f32.gmra.mxu0 %v1284
        %v1616 = vpop.f32.mrf.mxu0
        %v1617 = vadd.f32 %v1455, %v1616
        %v1618 = vpop.f32.mrf.mxu0
        %v1619 = vadd.f32 %v1459, %v1618
        %1620 = vmatprep.mubr.f32.mxu0 %v1287
        %1621 = vmatmul.mubr.f32.gmra.mxu0 %v1286
        %v1622 = vpop.f32.mrf.mxu0
        %v1623 = vadd.f32 %v1455, %v1622
        %v1624 = vpop.f32.mrf.mxu0
        %v1625 = vadd.f32 %v1459, %v1624
        %1626 = vmatprep.mubr.f32.mxu0 %v1289
        %1627 = vmatmul.mubr.f32.gmra.mxu0 %v1288
        %v1628 = vpop.f32.mrf.mxu0
        %v1629 = vadd.f32 %v1455, %v1628
        %v1630 = vpop.f32.mrf.mxu0
        %v1631 = vadd.f32 %v1459, %v1630
        %1632 = vmatprep.mubr.f32.mxu0 %v1291
        %1633 = vmatmul.mubr.f32.gmra.mxu0 %v1290
        %v1634 = vpop.f32.mrf.mxu0
        %v1635 = vadd.f32 %v1455, %v1634
        %v1636 = vpop.f32.mrf.mxu0
        %v1637 = vadd.f32 %v1459, %v1636
        %1638 = vmatprep.mubr.f32.mxu0 %v1293
        %1639 = vmatmul.mubr.f32.gmra.mxu0 %v1292
        %v1640 = vpop.f32.mrf.mxu0
        %v1641 = vadd.f32 %v1455, %v1640
        %v1642 = vpop.f32.mrf.mxu0
        %v1643 = vadd.f32 %v1459, %v1642
        %1644 = vmatprep.mubr.f32.mxu0 %v1295
        %1645 = vmatmul.mubr.f32.gmra.mxu0 %v1294
        %v1646 = vpop.f32.mrf.mxu0
        %v1647 = vadd.f32 %v1455, %v1646
        %v1648 = vpop.f32.mrf.mxu0
        %v1649 = vadd.f32 %v1459, %v1648
        %1650 = vmatprep.mubr.f32.mxu0 %v1297
        %1651 = vmatmul.mubr.f32.gmra.mxu0 %v1296
        %v1652 = vpop.f32.mrf.mxu0
        %v1653 = vadd.f32 %v1455, %v1652
        %v1654 = vpop.f32.mrf.mxu0
        %v1655 = vadd.f32 %v1459, %v1654
        %1656 = vmatprep.mubr.f32.mxu0 %v1299
        %1657 = vmatmul.mubr.f32.gmra.mxu0 %v1298
        %v1658 = vpop.f32.mrf.mxu0
        %v1659 = vadd.f32 %v1455, %v1658
        %v1660 = vpop.f32.mrf.mxu0
        %v1661 = vadd.f32 %v1459, %v1660
        %1662 = vmatprep.mubr.f32.mxu0 %v1301
        %1663 = vmatmul.mubr.f32.gmra.mxu0 %v1300
        %v1664 = vpop.f32.mrf.mxu0
        %v1665 = vadd.f32 %v1455, %v1664
        %v1666 = vpop.f32.mrf.mxu0
        %v1667 = vadd.f32 %v1459, %v1666
        %1668 = vmatprep.mubr.f32.mxu0 %v1303
        %1669 = vmatmul.mubr.f32.gmra.mxu0 %v1302
        %v1670 = vpop.f32.mrf.mxu0
        %v1671 = vadd.f32 %v1455, %v1670
        %v1672 = vpop.f32.mrf.mxu0
        %v1673 = vadd.f32 %v1459, %v1672
        %1674 = vmatprep.mubr.f32.mxu0 %v1305
        %1675 = vmatmul.mubr.f32.gmra.mxu0 %v1304
        %v1676 = vpop.f32.mrf.mxu0
        %v1677 = vadd.f32 %v1455, %v1676
        %v1678 = vpop.f32.mrf.mxu0
        %v1679 = vadd.f32 %v1459, %v1678
        %1680 = vmatprep.mubr.f32.mxu0 %v1307
        %1681 = vmatmul.mubr.f32.gmra.mxu0 %v1306
        %v1682 = vpop.f32.mrf.mxu0
        %v1683 = vadd.f32 %v1455, %v1682
        %v1684 = vpop.f32.mrf.mxu0
        %v1685 = vadd.f32 %v1459, %v1684
        %1686 = vmatprep.mubr.f32.mxu0 %v1309
        %1687 = vmatmul.mubr.f32.gmra.mxu0 %v1308
        %v1688 = vpop.f32.mrf.mxu0
        %v1689 = vadd.f32 %v1455, %v1688
        %v1690 = vpop.f32.mrf.mxu0
        %v1691 = vadd.f32 %v1459, %v1690
        %1692 = vmatprep.mubr.f32.mxu0 %v1311
        %1693 = vmatmul.mubr.f32.gmra.mxu0 %v1310
        %v1694 = vpop.f32.mrf.mxu0
        %v1695 = vadd.f32 %v1455, %v1694
        %v1696 = vpop.f32.mrf.mxu0
        %v1697 = vadd.f32 %v1459, %v1696
        %1698 = vmatprep.mubr.f32.mxu0 %v1313
        %1699 = vmatmul.mubr.f32.gmra.mxu0 %v1312
        %v1700 = vpop.f32.mrf.mxu0
        %v1701 = vadd.f32 %v1455, %v1700
        %v1702 = vpop.f32.mrf.mxu0
        %v1703 = vadd.f32 %v1459, %v1702
        %1704 = vmatprep.mubr.f32.mxu0 %v1315
        %1705 = vmatmul.mubr.f32.gmra.mxu0 %v1314
        %v1706 = vpop.f32.mrf.mxu0
        %v1707 = vadd.f32 %v1455, %v1706
        %v1708 = vpop.f32.mrf.mxu0
        %v1709 = vadd.f32 %v1459, %v1708
        %1710 = vmatprep.mubr.f32.mxu0 %v1317
        %1711 = vmatmul.mubr.f32.gmra.mxu0 %v1316
        %v1712 = vpop.f32.mrf.mxu0
        %v1713 = vadd.f32 %v1455, %v1712
        %v1714 = vpop.f32.mrf.mxu0
        %v1715 = vadd.f32 %v1459, %v1714
        %1716 = vmatprep.mubr.f32.mxu0 %v1319
        %1717 = vmatmul.mubr.f32.gmra.mxu0 %v1318
        %v1718 = vpop.f32.mrf.mxu0
        %v1719 = vadd.f32 %v1455, %v1718
        %v1720 = vpop.f32.mrf.mxu0
        %v1721 = vadd.f32 %v1459, %v1720
        %1722 = vmatprep.mubr.f32.mxu0 %v1321
        %1723 = vmatmul.mubr.f32.gmra.mxu0 %v1320
        %v1724 = vpop.f32.mrf.mxu0
        %v1725 = vadd.f32 %v1455, %v1724
        %v1726 = vpop.f32.mrf.mxu0
        %v1727 = vadd.f32 %v1459, %v1726
        %1728 = vdwg.mxu0
        %1729 = vmatprep.subr.mxu0 %v1385
        %1730 = vmatpush1.msra.mxu0 %v1384
        %1731 = vmatprep.subr.mxu0 %v1381
        %1732 = vmatpush1.msra.mxu0 %v1380
        %1733 = vmatprep.subr.mxu0 %v1377
        %1734 = vmatpush1.msra.mxu0 %v1376
        %1735 = vmatprep.subr.mxu0 %v1373
        %1736 = vmatpush1.msra.mxu0 %v1372
        %1737 = vmatprep.subr.mxu0 %v1369
        %1738 = vmatpush1.msra.mxu0 %v1368
        %1739 = vmatprep.subr.mxu0 %v1365
        %1740 = vmatpush1.msra.mxu0 %v1364
        %1741 = vmatprep.subr.mxu0 %v1361
        %1742 = vmatpush1.msra.mxu0 %v1360
        %1743 = vmatprep.subr.mxu0 %v1357
        %1744 = vmatpush1.msra.mxu0 %v1356
        %1745 = vmatprep.subr.mxu0 %v1353
        %1746 = vmatpush1.msra.mxu0 %v1352
        %1747 = vmatprep.subr.mxu0 %v1349
        %1748 = vmatpush1.msra.mxu0 %v1348
        %1749 = vmatprep.subr.mxu0 %v1345
        %1750 = vmatpush1.msra.mxu0 %v1344
        %1751 = vmatprep.subr.mxu0 %v1341
        %1752 = vmatpush1.msra.mxu0 %v1340
        %1753 = vmatprep.subr.mxu0 %v1337
        %1754 = vmatpush1.msra.mxu0 %v1336
        %1755 = vmatprep.subr.mxu0 %v1333
        %1756 = vmatpush1.msra.mxu0 %v1332
        %1757 = vmatprep.subr.mxu0 %v1329
        %1758 = vmatpush1.msra.mxu0 %v1328
        %1759 = vmatprep.subr.mxu0 %v1325
        %1760 = vmatpush1.msra.mxu0 %v1324
        %1761 = vmatprep.subr.mxu0 %v1449
        %1762 = vmatpush2.msra.mxu0 %v1448
        %1763 = vmatprep.subr.mxu0 %v1445
        %1764 = vmatpush2.msra.mxu0 %v1444
        %1765 = vmatprep.subr.mxu0 %v1441
        %1766 = vmatpush2.msra.mxu0 %v1440
        %1767 = vmatprep.subr.mxu0 %v1437
        %1768 = vmatpush2.msra.mxu0 %v1436
        %1769 = vmatprep.subr.mxu0 %v1433
        %1770 = vmatpush2.msra.mxu0 %v1432
        %1771 = vmatprep.subr.mxu0 %v1429
        %1772 = vmatpush2.msra.mxu0 %v1428
        %1773 = vmatprep.subr.mxu0 %v1425
        %1774 = vmatpush2.msra.mxu0 %v1424
        %1775 = vmatprep.subr.mxu0 %v1421
        %1776 = vmatpush2.msra.mxu0 %v1420
        %1777 = vmatprep.subr.mxu0 %v1417
        %1778 = vmatpush2.msra.mxu0 %v1416
        %1779 = vmatprep.subr.mxu0 %v1413
        %1780 = vmatpush2.msra.mxu0 %v1412
        %1781 = vmatprep.subr.mxu0 %v1409
        %1782 = vmatpush2.msra.mxu0 %v1408
        %1783 = vmatprep.subr.mxu0 %v1405
        %1784 = vmatpush2.msra.mxu0 %v1404
        %1785 = vmatprep.subr.mxu0 %v1401
        %1786 = vmatpush2.msra.mxu0 %v1400
        %1787 = vmatprep.subr.mxu0 %v1397
        %1788 = vmatpush2.msra.mxu0 %v1396
        %1789 = vmatprep.subr.mxu0 %v1393
        %1790 = vmatpush2.msra.mxu0 %v1392
        %1791 = vmatprep.subr.mxu0 %v1389
        %1792 = vmatpush2.msra.mxu0 %v1388
        %1793 = vmatprep.mubr.f32.mxu0 %v1259
        %1794 = vmatmul.mubr.f32.gmra.mxu0 %v1258
        %v1795 = vpop.f32.mrf.mxu0
        %v1796 = vadd.f32 %v1463, %v1795
        %v1797 = vpop.f32.mrf.mxu0
        %v1798 = vadd.f32 %v1467, %v1797
        %1799 = vmatprep.mubr.f32.mxu0 %v1261
        %1800 = vmatmul.mubr.f32.gmra.mxu0 %v1260
        %v1801 = vpop.f32.mrf.mxu0
        %v1802 = vadd.f32 %v1463, %v1801
        %v1803 = vpop.f32.mrf.mxu0
        %v1804 = vadd.f32 %v1467, %v1803
        %1805 = vmatprep.mubr.f32.mxu0 %v1263
        %1806 = vmatmul.mubr.f32.gmra.mxu0 %v1262
        %v1807 = vpop.f32.mrf.mxu0
        %v1808 = vadd.f32 %v1463, %v1807
        %v1809 = vpop.f32.mrf.mxu0
        %v1810 = vadd.f32 %v1467, %v1809
        %1811 = vmatprep.mubr.f32.mxu0 %v1265
        %1812 = vmatmul.mubr.f32.gmra.mxu0 %v1264
        %v1813 = vpop.f32.mrf.mxu0
        %v1814 = vadd.f32 %v1463, %v1813
        %v1815 = vpop.f32.mrf.mxu0
        %v1816 = vadd.f32 %v1467, %v1815
        %1817 = vmatprep.mubr.f32.mxu0 %v1267
        %1818 = vmatmul.mubr.f32.gmra.mxu0 %v1266
        %v1819 = vpop.f32.mrf.mxu0
        %v1820 = vadd.f32 %v1463, %v1819
        %v1821 = vpop.f32.mrf.mxu0
        %v1822 = vadd.f32 %v1467, %v1821
        %1823 = vmatprep.mubr.f32.mxu0 %v1269
        %1824 = vmatmul.mubr.f32.gmra.mxu0 %v1268
        %v1825 = vpop.f32.mrf.mxu0
        %v1826 = vadd.f32 %v1463, %v1825
        %v1827 = vpop.f32.mrf.mxu0
        %v1828 = vadd.f32 %v1467, %v1827
        %1829 = vmatprep.mubr.f32.mxu0 %v1271
        %1830 = vmatmul.mubr.f32.gmra.mxu0 %v1270
        %v1831 = vpop.f32.mrf.mxu0
        %v1832 = vadd.f32 %v1463, %v1831
        %v1833 = vpop.f32.mrf.mxu0
        %v1834 = vadd.f32 %v1467, %v1833
        %1835 = vmatprep.mubr.f32.mxu0 %v1273
        %1836 = vmatmul.mubr.f32.gmra.mxu0 %v1272
        %v1837 = vpop.f32.mrf.mxu0
        %v1838 = vadd.f32 %v1463, %v1837
        %v1839 = vpop.f32.mrf.mxu0
        %v1840 = vadd.f32 %v1467, %v1839
        %1841 = vmatprep.mubr.f32.mxu0 %v1275
        %1842 = vmatmul.mubr.f32.gmra.mxu0 %v1274
        %v1843 = vpop.f32.mrf.mxu0
        %v1844 = vadd.f32 %v1463, %v1843
        %v1845 = vpop.f32.mrf.mxu0
        %v1846 = vadd.f32 %v1467, %v1845
        %1847 = vmatprep.mubr.f32.mxu0 %v1277
        %1848 = vmatmul.mubr.f32.gmra.mxu0 %v1276
        %v1849 = vpop.f32.mrf.mxu0
        %v1850 = vadd.f32 %v1463, %v1849
        %v1851 = vpop.f32.mrf.mxu0
        %v1852 = vadd.f32 %v1467, %v1851
        %1853 = vmatprep.mubr.f32.mxu0 %v1279
        %1854 = vmatmul.mubr.f32.gmra.mxu0 %v1278
        %v1855 = vpop.f32.mrf.mxu0
        %v1856 = vadd.f32 %v1463, %v1855
        %v1857 = vpop.f32.mrf.mxu0
        %v1858 = vadd.f32 %v1467, %v1857
        %1859 = vmatprep.mubr.f32.mxu0 %v1281
        %1860 = vmatmul.mubr.f32.gmra.mxu0 %v1280
        %v1861 = vpop.f32.mrf.mxu0
        %v1862 = vadd.f32 %v1463, %v1861
        %v1863 = vpop.f32.mrf.mxu0
        %v1864 = vadd.f32 %v1467, %v1863
        %1865 = vmatprep.mubr.f32.mxu0 %v1283
        %1866 = vmatmul.mubr.f32.gmra.mxu0 %v1282
        %v1867 = vpop.f32.mrf.mxu0
        %v1868 = vadd.f32 %v1463, %v1867
        %v1869 = vpop.f32.mrf.mxu0
        %v1870 = vadd.f32 %v1467, %v1869
        %1871 = vmatprep.mubr.f32.mxu0 %v1285
        %1872 = vmatmul.mubr.f32.gmra.mxu0 %v1284
        %v1873 = vpop.f32.mrf.mxu0
        %v1874 = vadd.f32 %v1463, %v1873
        %v1875 = vpop.f32.mrf.mxu0
        %v1876 = vadd.f32 %v1467, %v1875
        %1877 = vmatprep.mubr.f32.mxu0 %v1287
        %1878 = vmatmul.mubr.f32.gmra.mxu0 %v1286
        %v1879 = vpop.f32.mrf.mxu0
        %v1880 = vadd.f32 %v1463, %v1879
        %v1881 = vpop.f32.mrf.mxu0
        %v1882 = vadd.f32 %v1467, %v1881
        %1883 = vmatprep.mubr.f32.mxu0 %v1289
        %1884 = vmatmul.mubr.f32.gmra.mxu0 %v1288
        %v1885 = vpop.f32.mrf.mxu0
        %v1886 = vadd.f32 %v1463, %v1885
        %v1887 = vpop.f32.mrf.mxu0
        %v1888 = vadd.f32 %v1467, %v1887
        %1889 = vmatprep.mubr.f32.mxu0 %v1291
        %1890 = vmatmul.mubr.f32.gmra.mxu0 %v1290
        %v1891 = vpop.f32.mrf.mxu0
        %v1892 = vadd.f32 %v1463, %v1891
        %v1893 = vpop.f32.mrf.mxu0
        %v1894 = vadd.f32 %v1467, %v1893
        %1895 = vmatprep.mubr.f32.mxu0 %v1293
        %1896 = vmatmul.mubr.f32.gmra.mxu0 %v1292
        %v1897 = vpop.f32.mrf.mxu0
        %v1898 = vadd.f32 %v1463, %v1897
        %v1899 = vpop.f32.mrf.mxu0
        %v1900 = vadd.f32 %v1467, %v1899
        %1901 = vmatprep.mubr.f32.mxu0 %v1295
        %1902 = vmatmul.mubr.f32.gmra.mxu0 %v1294
        %v1903 = vpop.f32.mrf.mxu0
        %v1904 = vadd.f32 %v1463, %v1903
        %v1905 = vpop.f32.mrf.mxu0
        %v1906 = vadd.f32 %v1467, %v1905
        %1907 = vmatprep.mubr.f32.mxu0 %v1297
        %1908 = vmatmul.mubr.f32.gmra.mxu0 %v1296
        %v1909 = vpop.f32.mrf.mxu0
        %v1910 = vadd.f32 %v1463, %v1909
        %v1911 = vpop.f32.mrf.mxu0
        %v1912 = vadd.f32 %v1467, %v1911
        %1913 = vmatprep.mubr.f32.mxu0 %v1299
        %1914 = vmatmul.mubr.f32.gmra.mxu0 %v1298
        %v1915 = vpop.f32.mrf.mxu0
        %v1916 = vadd.f32 %v1463, %v1915
        %v1917 = vpop.f32.mrf.mxu0
        %v1918 = vadd.f32 %v1467, %v1917
        %1919 = vmatprep.mubr.f32.mxu0 %v1301
        %1920 = vmatmul.mubr.f32.gmra.mxu0 %v1300
        %v1921 = vpop.f32.mrf.mxu0
        %v1922 = vadd.f32 %v1463, %v1921
        %v1923 = vpop.f32.mrf.mxu0
        %v1924 = vadd.f32 %v1467, %v1923
        %1925 = vmatprep.mubr.f32.mxu0 %v1303
        %1926 = vmatmul.mubr.f32.gmra.mxu0 %v1302
        %v1927 = vpop.f32.mrf.mxu0
        %v1928 = vadd.f32 %v1463, %v1927
        %v1929 = vpop.f32.mrf.mxu0
        %v1930 = vadd.f32 %v1467, %v1929
        %1931 = vmatprep.mubr.f32.mxu0 %v1305
        %1932 = vmatmul.mubr.f32.gmra.mxu0 %v1304
        %v1933 = vpop.f32.mrf.mxu0
        %v1934 = vadd.f32 %v1463, %v1933
        %v1935 = vpop.f32.mrf.mxu0
        %v1936 = vadd.f32 %v1467, %v1935
        %1937 = vmatprep.mubr.f32.mxu0 %v1307
        %1938 = vmatmul.mubr.f32.gmra.mxu0 %v1306
        %v1939 = vpop.f32.mrf.mxu0
        %v1940 = vadd.f32 %v1463, %v1939
        %v1941 = vpop.f32.mrf.mxu0
        %v1942 = vadd.f32 %v1467, %v1941
        %1943 = vmatprep.mubr.f32.mxu0 %v1309
        %1944 = vmatmul.mubr.f32.gmra.mxu0 %v1308
        %v1945 = vpop.f32.mrf.mxu0
        %v1946 = vadd.f32 %v1463, %v1945
        %v1947 = vpop.f32.mrf.mxu0
        %v1948 = vadd.f32 %v1467, %v1947
        %1949 = vmatprep.mubr.f32.mxu0 %v1311
        %1950 = vmatmul.mubr.f32.gmra.mxu0 %v1310
        %v1951 = vpop.f32.mrf.mxu0
        %v1952 = vadd.f32 %v1463, %v1951
        %v1953 = vpop.f32.mrf.mxu0
        %v1954 = vadd.f32 %v1467, %v1953
        %1955 = vmatprep.mubr.f32.mxu0 %v1313
        %1956 = vmatmul.mubr.f32.gmra.mxu0 %v1312
        %v1957 = vpop.f32.mrf.mxu0
        %v1958 = vadd.f32 %v1463, %v1957
        %v1959 = vpop.f32.mrf.mxu0
        %v1960 = vadd.f32 %v1467, %v1959
        %1961 = vmatprep.mubr.f32.mxu0 %v1315
        %1962 = vmatmul.mubr.f32.gmra.mxu0 %v1314
        %v1963 = vpop.f32.mrf.mxu0
        %v1964 = vadd.f32 %v1463, %v1963
        %v1965 = vpop.f32.mrf.mxu0
        %v1966 = vadd.f32 %v1467, %v1965
        %1967 = vmatprep.mubr.f32.mxu0 %v1317
        %1968 = vmatmul.mubr.f32.gmra.mxu0 %v1316
        %v1969 = vpop.f32.mrf.mxu0
        %v1970 = vadd.f32 %v1463, %v1969
        %v1971 = vpop.f32.mrf.mxu0
        %v1972 = vadd.f32 %v1467, %v1971
        %1973 = vmatprep.mubr.f32.mxu0 %v1319
        %1974 = vmatmul.mubr.f32.gmra.mxu0 %v1318
        %v1975 = vpop.f32.mrf.mxu0
        %v1976 = vadd.f32 %v1463, %v1975
        %v1977 = vpop.f32.mrf.mxu0
        %v1978 = vadd.f32 %v1467, %v1977
        %1979 = vmatprep.mubr.f32.mxu0 %v1321
        %1980 = vmatmul.mubr.f32.gmra.mxu0 %v1320
        %v1981 = vpop.f32.mrf.mxu0
        %v1982 = vadd.f32 %v1463, %v1981
        %v1983 = vpop.f32.mrf.mxu0
        %v1984 = vadd.f32 %v1467, %v1983
        %1985 = vdwg.mxu0
        %vm1986 = vcmp.ge.f32.partialorder %v1539, 0.0
        %vm1987 = vcmp.ge.f32.partialorder %v1541, 0.0
        %vm1988 = vcmp.ge.f32.partialorder %v1796, 0.0
        %vm1989 = vcmp.ge.f32.partialorder %v1798, 0.0
        %vm1990 = vcmp.ge.f32.partialorder %v1545, 0.0
        %vm1991 = vcmp.ge.f32.partialorder %v1547, 0.0
        %vm1992 = vcmp.ge.f32.partialorder %v1802, 0.0
        %vm1993 = vcmp.ge.f32.partialorder %v1804, 0.0
        %vm1994 = vcmp.ge.f32.partialorder %v1551, 0.0
        %vm1995 = vcmp.ge.f32.partialorder %v1553, 0.0
        %vm1996 = vcmp.ge.f32.partialorder %v1808, 0.0
        %vm1997 = vcmp.ge.f32.partialorder %v1810, 0.0
        %vm1998 = vcmp.ge.f32.partialorder %v1557, 0.0
        %vm1999 = vcmp.ge.f32.partialorder %v1559, 0.0
        %vm2000 = vcmp.ge.f32.partialorder %v1814, 0.0
        %vm2001 = vcmp.ge.f32.partialorder %v1816, 0.0
        %vm2002 = vcmp.ge.f32.partialorder %v1563, 0.0
        %vm2003 = vcmp.ge.f32.partialorder %v1565, 0.0
        %vm2004 = vcmp.ge.f32.partialorder %v1820, 0.0
        %vm2005 = vcmp.ge.f32.partialorder %v1822, 0.0
        %vm2006 = vcmp.ge.f32.partialorder %v1569, 0.0
        %vm2007 = vcmp.ge.f32.partialorder %v1571, 0.0
        %vm2008 = vcmp.ge.f32.partialorder %v1826, 0.0
        %vm2009 = vcmp.ge.f32.partialorder %v1828, 0.0
        %vm2010 = vcmp.ge.f32.partialorder %v1575, 0.0
        %vm2011 = vcmp.ge.f32.partialorder %v1577, 0.0
        %vm2012 = vcmp.ge.f32.partialorder %v1832, 0.0
        %vm2013 = vcmp.ge.f32.partialorder %v1834, 0.0
        %vm2014 = vcmp.ge.f32.partialorder %v1581, 0.0
        %vm2015 = vcmp.ge.f32.partialorder %v1583, 0.0
        %vm2016 = vcmp.ge.f32.partialorder %v1838, 0.0
        %vm2017 = vcmp.ge.f32.partialorder %v1840, 0.0
        %vm2018 = vcmp.ge.f32.partialorder %v1587, 0.0
        %vm2019 = vcmp.ge.f32.partialorder %v1589, 0.0
        %vm2020 = vcmp.ge.f32.partialorder %v1844, 0.0
        %vm2021 = vcmp.ge.f32.partialorder %v1846, 0.0
        %vm2022 = vcmp.ge.f32.partialorder %v1593, 0.0
        %vm2023 = vcmp.ge.f32.partialorder %v1595, 0.0
        %vm2024 = vcmp.ge.f32.partialorder %v1850, 0.0
        %vm2025 = vcmp.ge.f32.partialorder %v1852, 0.0
        %vm2026 = vcmp.ge.f32.partialorder %v1599, 0.0
        %vm2027 = vcmp.ge.f32.partialorder %v1601, 0.0
        %vm2028 = vcmp.ge.f32.partialorder %v1856, 0.0
        %vm2029 = vcmp.ge.f32.partialorder %v1858, 0.0
        %vm2030 = vcmp.ge.f32.partialorder %v1605, 0.0
        %vm2031 = vcmp.ge.f32.partialorder %v1607, 0.0
        %vm2032 = vcmp.ge.f32.partialorder %v1862, 0.0
        %vm2033 = vcmp.ge.f32.partialorder %v1864, 0.0
        %vm2034 = vcmp.ge.f32.partialorder %v1611, 0.0
        %vm2035 = vcmp.ge.f32.partialorder %v1613, 0.0
        %vm2036 = vcmp.ge.f32.partialorder %v1868, 0.0
        %vm2037 = vcmp.ge.f32.partialorder %v1870, 0.0
        %vm2038 = vcmp.ge.f32.partialorder %v1617, 0.0
        %vm2039 = vcmp.ge.f32.partialorder %v1619, 0.0
        %vm2040 = vcmp.ge.f32.partialorder %v1874, 0.0
        %vm2041 = vcmp.ge.f32.partialorder %v1876, 0.0
        %vm2042 = vcmp.ge.f32.partialorder %v1623, 0.0
        %vm2043 = vcmp.ge.f32.partialorder %v1625, 0.0
        %vm2044 = vcmp.ge.f32.partialorder %v1880, 0.0
        %vm2045 = vcmp.ge.f32.partialorder %v1882, 0.0
        %vm2046 = vcmp.ge.f32.partialorder %v1629, 0.0
        %vm2047 = vcmp.ge.f32.partialorder %v1631, 0.0
        %vm2048 = vcmp.ge.f32.partialorder %v1886, 0.0
        %vm2049 = vcmp.ge.f32.partialorder %v1888, 0.0
        %vm2050 = vcmp.ge.f32.partialorder %v1635, 0.0
        %vm2051 = vcmp.ge.f32.partialorder %v1637, 0.0
        %vm2052 = vcmp.ge.f32.partialorder %v1892, 0.0
        %vm2053 = vcmp.ge.f32.partialorder %v1894, 0.0
        %vm2054 = vcmp.ge.f32.partialorder %v1641, 0.0
        %vm2055 = vcmp.ge.f32.partialorder %v1643, 0.0
        %vm2056 = vcmp.ge.f32.partialorder %v1898, 0.0
        %vm2057 = vcmp.ge.f32.partialorder %v1900, 0.0
        %vm2058 = vcmp.ge.f32.partialorder %v1647, 0.0
        %vm2059 = vcmp.ge.f32.partialorder %v1649, 0.0
        %vm2060 = vcmp.ge.f32.partialorder %v1904, 0.0
        %vm2061 = vcmp.ge.f32.partialorder %v1906, 0.0
        %vm2062 = vcmp.ge.f32.partialorder %v1653, 0.0
        %vm2063 = vcmp.ge.f32.partialorder %v1655, 0.0
        %vm2064 = vcmp.ge.f32.partialorder %v1910, 0.0
        %vm2065 = vcmp.ge.f32.partialorder %v1912, 0.0
        %vm2066 = vcmp.ge.f32.partialorder %v1659, 0.0
        %vm2067 = vcmp.ge.f32.partialorder %v1661, 0.0
        %vm2068 = vcmp.ge.f32.partialorder %v1916, 0.0
        %vm2069 = vcmp.ge.f32.partialorder %v1918, 0.0
        %vm2070 = vcmp.ge.f32.partialorder %v1665, 0.0
        %vm2071 = vcmp.ge.f32.partialorder %v1667, 0.0
        %vm2072 = vcmp.ge.f32.partialorder %v1922, 0.0
        %vm2073 = vcmp.ge.f32.partialorder %v1924, 0.0
        %vm2074 = vcmp.ge.f32.partialorder %v1671, 0.0
        %vm2075 = vcmp.ge.f32.partialorder %v1673, 0.0
        %vm2076 = vcmp.ge.f32.partialorder %v1928, 0.0
        %vm2077 = vcmp.ge.f32.partialorder %v1930, 0.0
        %vm2078 = vcmp.ge.f32.partialorder %v1677, 0.0
        %vm2079 = vcmp.ge.f32.partialorder %v1679, 0.0
        %vm2080 = vcmp.ge.f32.partialorder %v1934, 0.0
        %vm2081 = vcmp.ge.f32.partialorder %v1936, 0.0
        %vm2082 = vcmp.ge.f32.partialorder %v1683, 0.0
        %vm2083 = vcmp.ge.f32.partialorder %v1685, 0.0
        %vm2084 = vcmp.ge.f32.partialorder %v1940, 0.0
        %vm2085 = vcmp.ge.f32.partialorder %v1942, 0.0
        %vm2086 = vcmp.ge.f32.partialorder %v1689, 0.0
        %vm2087 = vcmp.ge.f32.partialorder %v1691, 0.0
        %vm2088 = vcmp.ge.f32.partialorder %v1946, 0.0
        %vm2089 = vcmp.ge.f32.partialorder %v1948, 0.0
        %vm2090 = vcmp.ge.f32.partialorder %v1695, 0.0
        %vm2091 = vcmp.ge.f32.partialorder %v1697, 0.0
        %vm2092 = vcmp.ge.f32.partialorder %v1952, 0.0
        %vm2093 = vcmp.ge.f32.partialorder %v1954, 0.0
        %vm2094 = vcmp.ge.f32.partialorder %v1701, 0.0
        %vm2095 = vcmp.ge.f32.partialorder %v1703, 0.0
        %vm2096 = vcmp.ge.f32.partialorder %v1958, 0.0
        %vm2097 = vcmp.ge.f32.partialorder %v1960, 0.0
        %vm2098 = vcmp.ge.f32.partialorder %v1707, 0.0
        %vm2099 = vcmp.ge.f32.partialorder %v1709, 0.0
        %vm2100 = vcmp.ge.f32.partialorder %v1964, 0.0
        %vm2101 = vcmp.ge.f32.partialorder %v1966, 0.0
        %vm2102 = vcmp.ge.f32.partialorder %v1713, 0.0
        %vm2103 = vcmp.ge.f32.partialorder %v1715, 0.0
        %vm2104 = vcmp.ge.f32.partialorder %v1970, 0.0
        %vm2105 = vcmp.ge.f32.partialorder %v1972, 0.0
        %vm2106 = vcmp.ge.f32.partialorder %v1719, 0.0
        %vm2107 = vcmp.ge.f32.partialorder %v1721, 0.0
        %vm2108 = vcmp.ge.f32.partialorder %v1976, 0.0
        %vm2109 = vcmp.ge.f32.partialorder %v1978, 0.0
        %vm2110 = vcmp.ge.f32.partialorder %v1725, 0.0
        %vm2111 = vcmp.ge.f32.partialorder %v1727, 0.0
        %vm2112 = vcmp.ge.f32.partialorder %v1982, 0.0
        %vm2113 = vcmp.ge.f32.partialorder %v1984, 0.0
        %v2114 = vmul.f32 %v1539, 0.2
        %v2115 = vmul.f32 %v1541, 0.2
        %v2116 = vmul.f32 %v1796, 0.2
        %v2117 = vmul.f32 %v1798, 0.2
        %v2118 = vmul.f32 %v1545, 0.2
        %v2119 = vmul.f32 %v1547, 0.2
        %v2120 = vmul.f32 %v1802, 0.2
        %v2121 = vmul.f32 %v1804, 0.2
        %v2122 = vmul.f32 %v1551, 0.2
        %v2123 = vmul.f32 %v1553, 0.2
        %v2124 = vmul.f32 %v1808, 0.2
        %v2125 = vmul.f32 %v1810, 0.2
        %v2126 = vmul.f32 %v1557, 0.2
        %v2127 = vmul.f32 %v1559, 0.2
        %v2128 = vmul.f32 %v1814, 0.2
        %v2129 = vmul.f32 %v1816, 0.2
        %v2130 = vmul.f32 %v1563, 0.2
        %v2131 = vmul.f32 %v1565, 0.2
        %v2132 = vmul.f32 %v1820, 0.2
        %v2133 = vmul.f32 %v1822, 0.2
        %v2134 = vmul.f32 %v1569, 0.2
        %v2135 = vmul.f32 %v1571, 0.2
        %v2136 = vmul.f32 %v1826, 0.2
        %v2137 = vmul.f32 %v1828, 0.2
        %v2138 = vmul.f32 %v1575, 0.2
        %v2139 = vmul.f32 %v1577, 0.2
        %v2140 = vmul.f32 %v1832, 0.2
        %v2141 = vmul.f32 %v1834, 0.2
        %v2142 = vmul.f32 %v1581, 0.2
        %v2143 = vmul.f32 %v1583, 0.2
        %v2144 = vmul.f32 %v1838, 0.2
        %v2145 = vmul.f32 %v1840, 0.2
        %v2146 = vmul.f32 %v1587, 0.2
        %v2147 = vmul.f32 %v1589, 0.2
        %v2148 = vmul.f32 %v1844, 0.2
        %v2149 = vmul.f32 %v1846, 0.2
        %v2150 = vmul.f32 %v1593, 0.2
        %v2151 = vmul.f32 %v1595, 0.2
        %v2152 = vmul.f32 %v1850, 0.2
        %v2153 = vmul.f32 %v1852, 0.2
        %v2154 = vmul.f32 %v1599, 0.2
        %v2155 = vmul.f32 %v1601, 0.2
        %v2156 = vmul.f32 %v1856, 0.2
        %v2157 = vmul.f32 %v1858, 0.2
        %v2158 = vmul.f32 %v1605, 0.2
        %v2159 = vmul.f32 %v1607, 0.2
        %v2160 = vmul.f32 %v1862, 0.2
        %v2161 = vmul.f32 %v1864, 0.2
        %v2162 = vmul.f32 %v1611, 0.2
        %v2163 = vmul.f32 %v1613, 0.2
        %v2164 = vmul.f32 %v1868, 0.2
        %v2165 = vmul.f32 %v1870, 0.2
        %v2166 = vmul.f32 %v1617, 0.2
        %v2167 = vmul.f32 %v1619, 0.2
        %v2168 = vmul.f32 %v1874, 0.2
        %v2169 = vmul.f32 %v1876, 0.2
        %v2170 = vmul.f32 %v1623, 0.2
        %v2171 = vmul.f32 %v1625, 0.2
        %v2172 = vmul.f32 %v1880, 0.2
        %v2173 = vmul.f32 %v1882, 0.2
        %v2174 = vmul.f32 %v1629, 0.2
        %v2175 = vmul.f32 %v1631, 0.2
        %v2176 = vmul.f32 %v1886, 0.2
        %v2177 = vmul.f32 %v1888, 0.2
        %v2178 = vmul.f32 %v1635, 0.2
        %v2179 = vmul.f32 %v1637, 0.2
        %v2180 = vmul.f32 %v1892, 0.2
        %v2181 = vmul.f32 %v1894, 0.2
        %v2182 = vmul.f32 %v1641, 0.2
        %v2183 = vmul.f32 %v1643, 0.2
        %v2184 = vmul.f32 %v1898, 0.2
        %v2185 = vmul.f32 %v1900, 0.2
        %v2186 = vmul.f32 %v1647, 0.2
        %v2187 = vmul.f32 %v1649, 0.2
        %v2188 = vmul.f32 %v1904, 0.2
        %v2189 = vmul.f32 %v1906, 0.2
        %v2190 = vmul.f32 %v1653, 0.2
        %v2191 = vmul.f32 %v1655, 0.2
        %v2192 = vmul.f32 %v1910, 0.2
        %v2193 = vmul.f32 %v1912, 0.2
        %v2194 = vmul.f32 %v1659, 0.2
        %v2195 = vmul.f32 %v1661, 0.2
        %v2196 = vmul.f32 %v1916, 0.2
        %v2197 = vmul.f32 %v1918, 0.2
        %v2198 = vmul.f32 %v1665, 0.2
        %v2199 = vmul.f32 %v1667, 0.2
        %v2200 = vmul.f32 %v1922, 0.2
        %v2201 = vmul.f32 %v1924, 0.2
        %v2202 = vmul.f32 %v1671, 0.2
        %v2203 = vmul.f32 %v1673, 0.2
        %v2204 = vmul.f32 %v1928, 0.2
        %v2205 = vmul.f32 %v1930, 0.2
        %v2206 = vmul.f32 %v1677, 0.2
        %v2207 = vmul.f32 %v1679, 0.2
        %v2208 = vmul.f32 %v1934, 0.2
        %v2209 = vmul.f32 %v1936, 0.2
        %v2210 = vmul.f32 %v1683, 0.2
        %v2211 = vmul.f32 %v1685, 0.2
        %v2212 = vmul.f32 %v1940, 0.2
        %v2213 = vmul.f32 %v1942, 0.2
        %v2214 = vmul.f32 %v1689, 0.2
        %v2215 = vmul.f32 %v1691, 0.2
        %v2216 = vmul.f32 %v1946, 0.2
        %v2217 = vmul.f32 %v1948, 0.2
        %v2218 = vmul.f32 %v1695, 0.2
        %v2219 = vmul.f32 %v1697, 0.2
        %v2220 = vmul.f32 %v1952, 0.2
        %v2221 = vmul.f32 %v1954, 0.2
        %v2222 = vmul.f32 %v1701, 0.2
        %v2223 = vmul.f32 %v1703, 0.2
        %v2224 = vmul.f32 %v1958, 0.2
        %v2225 = vmul.f32 %v1960, 0.2
        %v2226 = vmul.f32 %v1707, 0.2
        %v2227 = vmul.f32 %v1709, 0.2
        %v2228 = vmul.f32 %v1964, 0.2
        %v2229 = vmul.f32 %v1966, 0.2
        %v2230 = vmul.f32 %v1713, 0.2
        %v2231 = vmul.f32 %v1715, 0.2
        %v2232 = vmul.f32 %v1970, 0.2
        %v2233 = vmul.f32 %v1972, 0.2
        %v2234 = vmul.f32 %v1719, 0.2
        %v2235 = vmul.f32 %v1721, 0.2
        %v2236 = vmul.f32 %v1976, 0.2
        %v2237 = vmul.f32 %v1978, 0.2
        %v2238 = vmul.f32 %v1725, 0.2
        %v2239 = vmul.f32 %v1727, 0.2
        %v2240 = vmul.f32 %v1982, 0.2
        %v2241 = vmul.f32 %v1984, 0.2
        %v2242 = vsel %vm1986, %v1539, %v2114
        %v2243 = vsel %vm1987, %v1541, %v2115
        %v2244 = vsel %vm1988, %v1796, %v2116
        %v2245 = vsel %vm1989, %v1798, %v2117
        %v2246 = vsel %vm1990, %v1545, %v2118
        %v2247 = vsel %vm1991, %v1547, %v2119
        %v2248 = vsel %vm1992, %v1802, %v2120
        %v2249 = vsel %vm1993, %v1804, %v2121
        %v2250 = vsel %vm1994, %v1551, %v2122
        %v2251 = vsel %vm1995, %v1553, %v2123
        %v2252 = vsel %vm1996, %v1808, %v2124
        %v2253 = vsel %vm1997, %v1810, %v2125
        %v2254 = vsel %vm1998, %v1557, %v2126
        %v2255 = vsel %vm1999, %v1559, %v2127
        %v2256 = vsel %vm2000, %v1814, %v2128
        %v2257 = vsel %vm2001, %v1816, %v2129
        %v2258 = vsel %vm2002, %v1563, %v2130
        %v2259 = vsel %vm2003, %v1565, %v2131
        %v2260 = vsel %vm2004, %v1820, %v2132
        %v2261 = vsel %vm2005, %v1822, %v2133
        %v2262 = vsel %vm2006, %v1569, %v2134
        %v2263 = vsel %vm2007, %v1571, %v2135
        %v2264 = vsel %vm2008, %v1826, %v2136
        %v2265 = vsel %vm2009, %v1828, %v2137
        %v2266 = vsel %vm2010, %v1575, %v2138
        %v2267 = vsel %vm2011, %v1577, %v2139
        %v2268 = vsel %vm2012, %v1832, %v2140
        %v2269 = vsel %vm2013, %v1834, %v2141
        %v2270 = vsel %vm2014, %v1581, %v2142
        %v2271 = vsel %vm2015, %v1583, %v2143
        %v2272 = vsel %vm2016, %v1838, %v2144
        %v2273 = vsel %vm2017, %v1840, %v2145
        %v2274 = vsel %vm2018, %v1587, %v2146
        %v2275 = vsel %vm2019, %v1589, %v2147
        %v2276 = vsel %vm2020, %v1844, %v2148
        %v2277 = vsel %vm2021, %v1846, %v2149
        %v2278 = vsel %vm2022, %v1593, %v2150
        %v2279 = vsel %vm2023, %v1595, %v2151
        %v2280 = vsel %vm2024, %v1850, %v2152
        %v2281 = vsel %vm2025, %v1852, %v2153
        %v2282 = vsel %vm2026, %v1599, %v2154
        %v2283 = vsel %vm2027, %v1601, %v2155
        %v2284 = vsel %vm2028, %v1856, %v2156
        %v2285 = vsel %vm2029, %v1858, %v2157
        %v2286 = vsel %vm2030, %v1605, %v2158
        %v2287 = vsel %vm2031, %v1607, %v2159
        %v2288 = vsel %vm2032, %v1862, %v2160
        %v2289 = vsel %vm2033, %v1864, %v2161
        %v2290 = vsel %vm2034, %v1611, %v2162
        %v2291 = vsel %vm2035, %v1613, %v2163
        %v2292 = vsel %vm2036, %v1868, %v2164
        %v2293 = vsel %vm2037, %v1870, %v2165
        %v2294 = vsel %vm2038, %v1617, %v2166
        %v2295 = vsel %vm2039, %v1619, %v2167
        %v2296 = vsel %vm2040, %v1874, %v2168
        %v2297 = vsel %vm2041, %v1876, %v2169
        %v2298 = vsel %vm2042, %v1623, %v2170
        %v2299 = vsel %vm2043, %v1625, %v2171
        %v2300 = vsel %vm2044, %v1880, %v2172
        %v2301 = vsel %vm2045, %v1882, %v2173
        %v2302 = vsel %vm2046, %v1629, %v2174
        %v2303 = vsel %vm2047, %v1631, %v2175
        %v2304 = vsel %vm2048, %v1886, %v2176
        %v2305 = vsel %vm2049, %v1888, %v2177
        %v2306 = vsel %vm2050, %v1635, %v2178
        %v2307 = vsel %vm2051, %v1637, %v2179
        %v2308 = vsel %vm2052, %v1892, %v2180
        %v2309 = vsel %vm2053, %v1894, %v2181
        %v2310 = vsel %vm2054, %v1641, %v2182
        %v2311 = vsel %vm2055, %v1643, %v2183
        %v2312 = vsel %vm2056, %v1898, %v2184
        %v2313 = vsel %vm2057, %v1900, %v2185
        %v2314 = vsel %vm2058, %v1647, %v2186
        %v2315 = vsel %vm2059, %v1649, %v2187
        %v2316 = vsel %vm2060, %v1904, %v2188
        %v2317 = vsel %vm2061, %v1906, %v2189
        %v2318 = vsel %vm2062, %v1653, %v2190
        %v2319 = vsel %vm2063, %v1655, %v2191
        %v2320 = vsel %vm2064, %v1910, %v2192
        %v2321 = vsel %vm2065, %v1912, %v2193
        %v2322 = vsel %vm2066, %v1659, %v2194
        %v2323 = vsel %vm2067, %v1661, %v2195
        %v2324 = vsel %vm2068, %v1916, %v2196
        %v2325 = vsel %vm2069, %v1918, %v2197
        %v2326 = vsel %vm2070, %v1665, %v2198
        %v2327 = vsel %vm2071, %v1667, %v2199
        %v2328 = vsel %vm2072, %v1922, %v2200
        %v2329 = vsel %vm2073, %v1924, %v2201
        %v2330 = vsel %vm2074, %v1671, %v2202
        %v2331 = vsel %vm2075, %v1673, %v2203
        %v2332 = vsel %vm2076, %v1928, %v2204
        %v2333 = vsel %vm2077, %v1930, %v2205
        %v2334 = vsel %vm2078, %v1677, %v2206
        %v2335 = vsel %vm2079, %v1679, %v2207
        %v2336 = vsel %vm2080, %v1934, %v2208
        %v2337 = vsel %vm2081, %v1936, %v2209
        %v2338 = vsel %vm2082, %v1683, %v2210
        %v2339 = vsel %vm2083, %v1685, %v2211
        %v2340 = vsel %vm2084, %v1940, %v2212
        %v2341 = vsel %vm2085, %v1942, %v2213
        %v2342 = vsel %vm2086, %v1689, %v2214
        %v2343 = vsel %vm2087, %v1691, %v2215
        %v2344 = vsel %vm2088, %v1946, %v2216
        %v2345 = vsel %vm2089, %v1948, %v2217
        %v2346 = vsel %vm2090, %v1695, %v2218
        %v2347 = vsel %vm2091, %v1697, %v2219
        %v2348 = vsel %vm2092, %v1952, %v2220
        %v2349 = vsel %vm2093, %v1954, %v2221
        %v2350 = vsel %vm2094, %v1701, %v2222
        %v2351 = vsel %vm2095, %v1703, %v2223
        %v2352 = vsel %vm2096, %v1958, %v2224
        %v2353 = vsel %vm2097, %v1960, %v2225
        %v2354 = vsel %vm2098, %v1707, %v2226
        %v2355 = vsel %vm2099, %v1709, %v2227
        %v2356 = vsel %vm2100, %v1964, %v2228
        %v2357 = vsel %vm2101, %v1966, %v2229
        %v2358 = vsel %vm2102, %v1713, %v2230
        %v2359 = vsel %vm2103, %v1715, %v2231
        %v2360 = vsel %vm2104, %v1970, %v2232
        %v2361 = vsel %vm2105, %v1972, %v2233
        %v2362 = vsel %vm2106, %v1719, %v2234
        %v2363 = vsel %vm2107, %v1721, %v2235
        %v2364 = vsel %vm2108, %v1976, %v2236
        %v2365 = vsel %vm2109, %v1978, %v2237
        %v2366 = vsel %vm2110, %v1725, %v2238
        %v2367 = vsel %vm2111, %v1727, %v2239
        %v2368 = vsel %vm2112, %v1982, %v2240
        %v2369 = vsel %vm2113, %v1984, %v2241
        %v2370 = vld [vmem:[%s7] sm:$0xff]
        %v2371 = vld [vmem:[%s7 + $0x8] sm:$0xff]
        %v2372 = vld [vmem:[%s7 + $0x10] sm:$0xff]
        %v2373 = vld [vmem:[%s7 + $0x18] sm:$0xff]
        %v2374 = vld [vmem:[%s7 + $0x20] sm:$0xff]
        %v2375 = vld [vmem:[%s7 + $0x28] sm:$0xff]
        %v2376 = vld [vmem:[%s7 + $0x30] sm:$0xff]
        %v2377 = vld [vmem:[%s7 + $0x38] sm:$0xff]
        %v2378 = vld [vmem:[%s7 + $0x40] sm:$0xff]
        %v2379 = vld [vmem:[%s7 + $0x48] sm:$0xff]
        %v2380 = vld [vmem:[%s7 + $0x50] sm:$0xff]
        %v2381 = vld [vmem:[%s7 + $0x58] sm:$0xff]
        %v2382 = vld [vmem:[%s7 + $0x60] sm:$0xff]
        %v2383 = vld [vmem:[%s7 + $0x68] sm:$0xff]
        %v2384 = vld [vmem:[%s7 + $0x70] sm:$0xff]
        %v2385 = vld [vmem:[%s7 + $0x78] sm:$0xff]
        %v2386 = vld [vmem:[%s7 + $0x80] sm:$0xff]
        %v2387 = vld [vmem:[%s7 + $0x88] sm:$0xff]
        %v2388 = vld [vmem:[%s7 + $0x90] sm:$0xff]
        %v2389 = vld [vmem:[%s7 + $0x98] sm:$0xff]
        %v2390 = vld [vmem:[%s7 + $0xa0] sm:$0xff]
        %v2391 = vld [vmem:[%s7 + $0xa8] sm:$0xff]
        %v2392 = vld [vmem:[%s7 + $0xb0] sm:$0xff]
        %v2393 = vld [vmem:[%s7 + $0xb8] sm:$0xff]
        %v2394 = vld [vmem:[%s7 + $0xc0] sm:$0xff]
        %v2395 = vld [vmem:[%s7 + $0xc8] sm:$0xff]
        %v2396 = vld [vmem:[%s7 + $0xd0] sm:$0xff]
        %v2397 = vld [vmem:[%s7 + $0xd8] sm:$0xff]
        %v2398 = vld [vmem:[%s7 + $0xe0] sm:$0xff]
        %v2399 = vld [vmem:[%s7 + $0xe8] sm:$0xff]
        %v2400 = vld [vmem:[%s7 + $0xf0] sm:$0xff]
        %v2401 = vld [vmem:[%s7 + $0xf8] sm:$0xff]
        %v2402 = vld [vmem:[%s7 + $0x100] sm:$0xff]
        %v2403 = vld [vmem:[%s7 + $0x108] sm:$0xff]
        %v2404 = vld [vmem:[%s7 + $0x110] sm:$0xff]
        %v2405 = vld [vmem:[%s7 + $0x118] sm:$0xff]
        %v2406 = vld [vmem:[%s7 + $0x120] sm:$0xff]
        %v2407 = vld [vmem:[%s7 + $0x128] sm:$0xff]
        %v2408 = vld [vmem:[%s7 + $0x130] sm:$0xff]
        %v2409 = vld [vmem:[%s7 + $0x138] sm:$0xff]
        %v2410 = vld [vmem:[%s7 + $0x140] sm:$0xff]
        %v2411 = vld [vmem:[%s7 + $0x148] sm:$0xff]
        %v2412 = vld [vmem:[%s7 + $0x150] sm:$0xff]
        %v2413 = vld [vmem:[%s7 + $0x158] sm:$0xff]
        %v2414 = vld [vmem:[%s7 + $0x160] sm:$0xff]
        %v2415 = vld [vmem:[%s7 + $0x168] sm:$0xff]
        %v2416 = vld [vmem:[%s7 + $0x170] sm:$0xff]
        %v2417 = vld [vmem:[%s7 + $0x178] sm:$0xff]
        %v2418 = vld [vmem:[%s7 + $0x180] sm:$0xff]
        %v2419 = vld [vmem:[%s7 + $0x188] sm:$0xff]
        %v2420 = vld [vmem:[%s7 + $0x190] sm:$0xff]
        %v2421 = vld [vmem:[%s7 + $0x198] sm:$0xff]
        %v2422 = vld [vmem:[%s7 + $0x1a0] sm:$0xff]
        %v2423 = vld [vmem:[%s7 + $0x1a8] sm:$0xff]
        %v2424 = vld [vmem:[%s7 + $0x1b0] sm:$0xff]
        %v2425 = vld [vmem:[%s7 + $0x1b8] sm:$0xff]
        %v2426 = vld [vmem:[%s7 + $0x1c0] sm:$0xff]
        %v2427 = vld [vmem:[%s7 + $0x1c8] sm:$0xff]
        %v2428 = vld [vmem:[%s7 + $0x1d0] sm:$0xff]
        %v2429 = vld [vmem:[%s7 + $0x1d8] sm:$0xff]
        %v2430 = vld [vmem:[%s7 + $0x1e0] sm:$0xff]
        %v2431 = vld [vmem:[%s7 + $0x1e8] sm:$0xff]
        %v2432 = vld [vmem:[%s7 + $0x1f0] sm:$0xff]
        %v2433 = vld [vmem:[%s7 + $0x1f8] sm:$0xff]
        %v2434 = vld [vmem:[%s8] sm:$0x1]
        %v2436 = vlaneseq
        %v2437 = vshrl.u32 %v2436, 7
        %v2438 = vsub.s32 0, %v2437
        %v2439 = vrot.slane %v2434, %v2438
        %2441 = vmatprep.subr.mxu0 0.0
        %2442 = vmatpush1.msra.mxu0 %v2385
        %2443 = vmatprep.subr.mxu0 0.0
        %2444 = vmatpush1.msra.mxu0 %v2384
        %2445 = vmatprep.subr.mxu0 0.0
        %2446 = vmatpush1.msra.mxu0 %v2383
        %2447 = vmatprep.subr.mxu0 0.0
        %2448 = vmatpush1.msra.mxu0 %v2382
        %2449 = vmatprep.subr.mxu0 0.0
        %2450 = vmatpush1.msra.mxu0 %v2381
        %2451 = vmatprep.subr.mxu0 0.0
        %2452 = vmatpush1.msra.mxu0 %v2380
        %2453 = vmatprep.subr.mxu0 0.0
        %2454 = vmatpush1.msra.mxu0 %v2379
        %2455 = vmatprep.subr.mxu0 0.0
        %2456 = vmatpush1.msra.mxu0 %v2378
        %2457 = vmatprep.subr.mxu0 0.0
        %2458 = vmatpush1.msra.mxu0 %v2377
        %2459 = vmatprep.subr.mxu0 0.0
        %2460 = vmatpush1.msra.mxu0 %v2376
        %2461 = vmatprep.subr.mxu0 0.0
        %2462 = vmatpush1.msra.mxu0 %v2375
        %2463 = vmatprep.subr.mxu0 0.0
        %2464 = vmatpush1.msra.mxu0 %v2374
        %2465 = vmatprep.subr.mxu0 0.0
        %2466 = vmatpush1.msra.mxu0 %v2373
        %2467 = vmatprep.subr.mxu0 0.0
        %2468 = vmatpush1.msra.mxu0 %v2372
        %2469 = vmatprep.subr.mxu0 0.0
        %2470 = vmatpush1.msra.mxu0 %v2371
        %2471 = vmatprep.subr.mxu0 0.0
        %2472 = vmatpush1.msra.mxu0 %v2370
        %2473 = vmatprep.subr.mxu0 0.0
        %2474 = vmatpush2.msra.mxu0 %v2401
        %2475 = vmatprep.subr.mxu0 0.0
        %2476 = vmatpush2.msra.mxu0 %v2400
        %2477 = vmatprep.subr.mxu0 0.0
        %2478 = vmatpush2.msra.mxu0 %v2399
        %2479 = vmatprep.subr.mxu0 0.0
        %2480 = vmatpush2.msra.mxu0 %v2398
        %2481 = vmatprep.subr.mxu0 0.0
        %2482 = vmatpush2.msra.mxu0 %v2397
        %2483 = vmatprep.subr.mxu0 0.0
        %2484 = vmatpush2.msra.mxu0 %v2396
        %2485 = vmatprep.subr.mxu0 0.0
        %2486 = vmatpush2.msra.mxu0 %v2395
        %2487 = vmatprep.subr.mxu0 0.0
        %2488 = vmatpush2.msra.mxu0 %v2394
        %2489 = vmatprep.subr.mxu0 0.0
        %2490 = vmatpush2.msra.mxu0 %v2393
        %2491 = vmatprep.subr.mxu0 0.0
        %2492 = vmatpush2.msra.mxu0 %v2392
        %2493 = vmatprep.subr.mxu0 0.0
        %2494 = vmatpush2.msra.mxu0 %v2391
        %2495 = vmatprep.subr.mxu0 0.0
        %2496 = vmatpush2.msra.mxu0 %v2390
        %2497 = vmatprep.subr.mxu0 0.0
        %2498 = vmatpush2.msra.mxu0 %v2389
        %2499 = vmatprep.subr.mxu0 0.0
        %2500 = vmatpush2.msra.mxu0 %v2388
        %2501 = vmatprep.subr.mxu0 0.0
        %2502 = vmatpush2.msra.mxu0 %v2387
        %2503 = vmatprep.subr.mxu0 0.0
        %2504 = vmatpush2.msra.mxu0 %v2386
        %2505 = vmatprep.mubr.f32.mxu0 %v2243
        %2506 = vmatmul.mubr.f32.gmra.mxu0 %v2242
        %v2507 = vpop.f32.mrf.mxu0
        %v2508 = vadd.f32 %v2439, %v2507
        %v2509 = vpop.f32.mrf.mxu0
        %2510 = vmatprep.mubr.f32.mxu0 %v2247
        %2511 = vmatmul.mubr.f32.gmra.mxu0 %v2246
        %v2512 = vpop.f32.mrf.mxu0
        %v2513 = vadd.f32 %v2439, %v2512
        %v2514 = vpop.f32.mrf.mxu0
        %2515 = vmatprep.mubr.f32.mxu0 %v2251
        %2516 = vmatmul.mubr.f32.gmra.mxu0 %v2250
        %v2517 = vpop.f32.mrf.mxu0
        %v2518 = vadd.f32 %v2439, %v2517
        %v2519 = vpop.f32.mrf.mxu0
        %2520 = vmatprep.mubr.f32.mxu0 %v2255
        %2521 = vmatmul.mubr.f32.gmra.mxu0 %v2254
        %v2522 = vpop.f32.mrf.mxu0
        %v2523 = vadd.f32 %v2439, %v2522
        %v2524 = vpop.f32.mrf.mxu0
        %2525 = vmatprep.mubr.f32.mxu0 %v2259
        %2526 = vmatmul.mubr.f32.gmra.mxu0 %v2258
        %v2527 = vpop.f32.mrf.mxu0
        %v2528 = vadd.f32 %v2439, %v2527
        %v2529 = vpop.f32.mrf.mxu0
        %2530 = vmatprep.mubr.f32.mxu0 %v2263
        %2531 = vmatmul.mubr.f32.gmra.mxu0 %v2262
        %v2532 = vpop.f32.mrf.mxu0
        %v2533 = vadd.f32 %v2439, %v2532
        %v2534 = vpop.f32.mrf.mxu0
        %2535 = vmatprep.mubr.f32.mxu0 %v2267
        %2536 = vmatmul.mubr.f32.gmra.mxu0 %v2266
        %v2537 = vpop.f32.mrf.mxu0
        %v2538 = vadd.f32 %v2439, %v2537
        %v2539 = vpop.f32.mrf.mxu0
        %2540 = vmatprep.mubr.f32.mxu0 %v2271
        %2541 = vmatmul.mubr.f32.gmra.mxu0 %v2270
        %v2542 = vpop.f32.mrf.mxu0
        %v2543 = vadd.f32 %v2439, %v2542
        %v2544 = vpop.f32.mrf.mxu0
        %2545 = vmatprep.mubr.f32.mxu0 %v2275
        %2546 = vmatmul.mubr.f32.gmra.mxu0 %v2274
        %v2547 = vpop.f32.mrf.mxu0
        %v2548 = vadd.f32 %v2439, %v2547
        %v2549 = vpop.f32.mrf.mxu0
        %2550 = vmatprep.mubr.f32.mxu0 %v2279
        %2551 = vmatmul.mubr.f32.gmra.mxu0 %v2278
        %v2552 = vpop.f32.mrf.mxu0
        %v2553 = vadd.f32 %v2439, %v2552
        %v2554 = vpop.f32.mrf.mxu0
        %2555 = vmatprep.mubr.f32.mxu0 %v2283
        %2556 = vmatmul.mubr.f32.gmra.mxu0 %v2282
        %v2557 = vpop.f32.mrf.mxu0
        %v2558 = vadd.f32 %v2439, %v2557
        %v2559 = vpop.f32.mrf.mxu0
        %2560 = vmatprep.mubr.f32.mxu0 %v2287
        %2561 = vmatmul.mubr.f32.gmra.mxu0 %v2286
        %v2562 = vpop.f32.mrf.mxu0
        %v2563 = vadd.f32 %v2439, %v2562
        %v2564 = vpop.f32.mrf.mxu0
        %2565 = vmatprep.mubr.f32.mxu0 %v2291
        %2566 = vmatmul.mubr.f32.gmra.mxu0 %v2290
        %v2567 = vpop.f32.mrf.mxu0
        %v2568 = vadd.f32 %v2439, %v2567
        %v2569 = vpop.f32.mrf.mxu0
        %2570 = vmatprep.mubr.f32.mxu0 %v2295
        %2571 = vmatmul.mubr.f32.gmra.mxu0 %v2294
        %v2572 = vpop.f32.mrf.mxu0
        %v2573 = vadd.f32 %v2439, %v2572
        %v2574 = vpop.f32.mrf.mxu0
        %2575 = vmatprep.mubr.f32.mxu0 %v2299
        %2576 = vmatmul.mubr.f32.gmra.mxu0 %v2298
        %v2577 = vpop.f32.mrf.mxu0
        %v2578 = vadd.f32 %v2439, %v2577
        %v2579 = vpop.f32.mrf.mxu0
        %2580 = vmatprep.mubr.f32.mxu0 %v2303
        %2581 = vmatmul.mubr.f32.gmra.mxu0 %v2302
        %v2582 = vpop.f32.mrf.mxu0
        %v2583 = vadd.f32 %v2439, %v2582
        %v2584 = vpop.f32.mrf.mxu0
        %2585 = vmatprep.mubr.f32.mxu0 %v2307
        %2586 = vmatmul.mubr.f32.gmra.mxu0 %v2306
        %v2587 = vpop.f32.mrf.mxu0
        %v2588 = vadd.f32 %v2439, %v2587
        %v2589 = vpop.f32.mrf.mxu0
        %2590 = vmatprep.mubr.f32.mxu0 %v2311
        %2591 = vmatmul.mubr.f32.gmra.mxu0 %v2310
        %v2592 = vpop.f32.mrf.mxu0
        %v2593 = vadd.f32 %v2439, %v2592
        %v2594 = vpop.f32.mrf.mxu0
        %2595 = vmatprep.mubr.f32.mxu0 %v2315
        %2596 = vmatmul.mubr.f32.gmra.mxu0 %v2314
        %v2597 = vpop.f32.mrf.mxu0
        %v2598 = vadd.f32 %v2439, %v2597
        %v2599 = vpop.f32.mrf.mxu0
        %2600 = vmatprep.mubr.f32.mxu0 %v2319
        %2601 = vmatmul.mubr.f32.gmra.mxu0 %v2318
        %v2602 = vpop.f32.mrf.mxu0
        %v2603 = vadd.f32 %v2439, %v2602
        %v2604 = vpop.f32.mrf.mxu0
        %2605 = vmatprep.mubr.f32.mxu0 %v2323
        %2606 = vmatmul.mubr.f32.gmra.mxu0 %v2322
        %v2607 = vpop.f32.mrf.mxu0
        %v2608 = vadd.f32 %v2439, %v2607
        %v2609 = vpop.f32.mrf.mxu0
        %2610 = vmatprep.mubr.f32.mxu0 %v2327
        %2611 = vmatmul.mubr.f32.gmra.mxu0 %v2326
        %v2612 = vpop.f32.mrf.mxu0
        %v2613 = vadd.f32 %v2439, %v2612
        %v2614 = vpop.f32.mrf.mxu0
        %2615 = vmatprep.mubr.f32.mxu0 %v2331
        %2616 = vmatmul.mubr.f32.gmra.mxu0 %v2330
        %v2617 = vpop.f32.mrf.mxu0
        %v2618 = vadd.f32 %v2439, %v2617
        %v2619 = vpop.f32.mrf.mxu0
        %2620 = vmatprep.mubr.f32.mxu0 %v2335
        %2621 = vmatmul.mubr.f32.gmra.mxu0 %v2334
        %v2622 = vpop.f32.mrf.mxu0
        %v2623 = vadd.f32 %v2439, %v2622
        %v2624 = vpop.f32.mrf.mxu0
        %2625 = vmatprep.mubr.f32.mxu0 %v2339
        %2626 = vmatmul.mubr.f32.gmra.mxu0 %v2338
        %v2627 = vpop.f32.mrf.mxu0
        %v2628 = vadd.f32 %v2439, %v2627
        %v2629 = vpop.f32.mrf.mxu0
        %2630 = vmatprep.mubr.f32.mxu0 %v2343
        %2631 = vmatmul.mubr.f32.gmra.mxu0 %v2342
        %v2632 = vpop.f32.mrf.mxu0
        %v2633 = vadd.f32 %v2439, %v2632
        %v2634 = vpop.f32.mrf.mxu0
        %2635 = vmatprep.mubr.f32.mxu0 %v2347
        %2636 = vmatmul.mubr.f32.gmra.mxu0 %v2346
        %v2637 = vpop.f32.mrf.mxu0
        %v2638 = vadd.f32 %v2439, %v2637
        %v2639 = vpop.f32.mrf.mxu0
        %2640 = vmatprep.mubr.f32.mxu0 %v2351
        %2641 = vmatmul.mubr.f32.gmra.mxu0 %v2350
        %v2642 = vpop.f32.mrf.mxu0
        %v2643 = vadd.f32 %v2439, %v2642
        %v2644 = vpop.f32.mrf.mxu0
        %2645 = vmatprep.mubr.f32.mxu0 %v2355
        %2646 = vmatmul.mubr.f32.gmra.mxu0 %v2354
        %v2647 = vpop.f32.mrf.mxu0
        %v2648 = vadd.f32 %v2439, %v2647
        %v2649 = vpop.f32.mrf.mxu0
        %2650 = vmatprep.mubr.f32.mxu0 %v2359
        %2651 = vmatmul.mubr.f32.gmra.mxu0 %v2358
        %v2652 = vpop.f32.mrf.mxu0
        %v2653 = vadd.f32 %v2439, %v2652
        %v2654 = vpop.f32.mrf.mxu0
        %2655 = vmatprep.mubr.f32.mxu0 %v2363
        %2656 = vmatmul.mubr.f32.gmra.mxu0 %v2362
        %v2657 = vpop.f32.mrf.mxu0
        %v2658 = vadd.f32 %v2439, %v2657
        %v2659 = vpop.f32.mrf.mxu0
        %2660 = vmatprep.mubr.f32.mxu0 %v2367
        %2661 = vmatmul.mubr.f32.gmra.mxu0 %v2366
        %v2662 = vpop.f32.mrf.mxu0
        %v2663 = vadd.f32 %v2439, %v2662
        %v2664 = vpop.f32.mrf.mxu0
        %2665 = vdwg.mxu0
        %2666 = vmatprep.subr.mxu0 0.0
        %2667 = vmatpush1.msra.mxu0 %v2417
        %2668 = vmatprep.subr.mxu0 0.0
        %2669 = vmatpush1.msra.mxu0 %v2416
        %2670 = vmatprep.subr.mxu0 0.0
        %2671 = vmatpush1.msra.mxu0 %v2415
        %2672 = vmatprep.subr.mxu0 0.0
        %2673 = vmatpush1.msra.mxu0 %v2414
        %2674 = vmatprep.subr.mxu0 0.0
        %2675 = vmatpush1.msra.mxu0 %v2413
        %2676 = vmatprep.subr.mxu0 0.0
        %2677 = vmatpush1.msra.mxu0 %v2412
        %2678 = vmatprep.subr.mxu0 0.0
        %2679 = vmatpush1.msra.mxu0 %v2411
        %2680 = vmatprep.subr.mxu0 0.0
        %2681 = vmatpush1.msra.mxu0 %v2410
        %2682 = vmatprep.subr.mxu0 0.0
        %2683 = vmatpush1.msra.mxu0 %v2409
        %2684 = vmatprep.subr.mxu0 0.0
        %2685 = vmatpush1.msra.mxu0 %v2408
        %2686 = vmatprep.subr.mxu0 0.0
        %2687 = vmatpush1.msra.mxu0 %v2407
        %2688 = vmatprep.subr.mxu0 0.0
        %2689 = vmatpush1.msra.mxu0 %v2406
        %2690 = vmatprep.subr.mxu0 0.0
        %2691 = vmatpush1.msra.mxu0 %v2405
        %2692 = vmatprep.subr.mxu0 0.0
        %2693 = vmatpush1.msra.mxu0 %v2404
        %2694 = vmatprep.subr.mxu0 0.0
        %2695 = vmatpush1.msra.mxu0 %v2403
        %2696 = vmatprep.subr.mxu0 0.0
        %2697 = vmatpush1.msra.mxu0 %v2402
        %2698 = vmatprep.subr.mxu0 0.0
        %2699 = vmatpush2.msra.mxu0 %v2433
        %2700 = vmatprep.subr.mxu0 0.0
        %2701 = vmatpush2.msra.mxu0 %v2432
        %2702 = vmatprep.subr.mxu0 0.0
        %2703 = vmatpush2.msra.mxu0 %v2431
        %2704 = vmatprep.subr.mxu0 0.0
        %2705 = vmatpush2.msra.mxu0 %v2430
        %2706 = vmatprep.subr.mxu0 0.0
        %2707 = vmatpush2.msra.mxu0 %v2429
        %2708 = vmatprep.subr.mxu0 0.0
        %2709 = vmatpush2.msra.mxu0 %v2428
        %2710 = vmatprep.subr.mxu0 0.0
        %2711 = vmatpush2.msra.mxu0 %v2427
        %2712 = vmatprep.subr.mxu0 0.0
        %2713 = vmatpush2.msra.mxu0 %v2426
        %2714 = vmatprep.subr.mxu0 0.0
        %2715 = vmatpush2.msra.mxu0 %v2425
        %2716 = vmatprep.subr.mxu0 0.0
        %2717 = vmatpush2.msra.mxu0 %v2424
        %2718 = vmatprep.subr.mxu0 0.0
        %2719 = vmatpush2.msra.mxu0 %v2423
        %2720 = vmatprep.subr.mxu0 0.0
        %2721 = vmatpush2.msra.mxu0 %v2422
        %2722 = vmatprep.subr.mxu0 0.0
        %2723 = vmatpush2.msra.mxu0 %v2421
        %2724 = vmatprep.subr.mxu0 0.0
        %2725 = vmatpush2.msra.mxu0 %v2420
        %2726 = vmatprep.subr.mxu0 0.0
        %2727 = vmatpush2.msra.mxu0 %v2419
        %2728 = vmatprep.subr.mxu0 0.0
        %2729 = vmatpush2.msra.mxu0 %v2418
        %2730 = vmatprep.mubr.f32.mxu0 %v2245
        %2731 = vmatmul.mubr.f32.gmra.mxu0 %v2244
        %v2732 = vpop.f32.mrf.mxu0
        %v2733 = vadd.f32 %v2508, %v2732
        %v2734 = vpop.f32.mrf.mxu0
        %2735 = vmatprep.mubr.f32.mxu0 %v2249
        %2736 = vmatmul.mubr.f32.gmra.mxu0 %v2248
        %v2737 = vpop.f32.mrf.mxu0
        %v2738 = vadd.f32 %v2513, %v2737
        %v2739 = vpop.f32.mrf.mxu0
        %2740 = vmatprep.mubr.f32.mxu0 %v2253
        %2741 = vmatmul.mubr.f32.gmra.mxu0 %v2252
        %v2742 = vpop.f32.mrf.mxu0
        %v2743 = vadd.f32 %v2518, %v2742
        %v2744 = vpop.f32.mrf.mxu0
        %2745 = vmatprep.mubr.f32.mxu0 %v2257
        %2746 = vmatmul.mubr.f32.gmra.mxu0 %v2256
        %v2747 = vpop.f32.mrf.mxu0
        %v2748 = vadd.f32 %v2523, %v2747
        %v2749 = vpop.f32.mrf.mxu0
        %2750 = vmatprep.mubr.f32.mxu0 %v2261
        %2751 = vmatmul.mubr.f32.gmra.mxu0 %v2260
        %v2752 = vpop.f32.mrf.mxu0
        %v2753 = vadd.f32 %v2528, %v2752
        %v2754 = vpop.f32.mrf.mxu0
        %2755 = vmatprep.mubr.f32.mxu0 %v2265
        %2756 = vmatmul.mubr.f32.gmra.mxu0 %v2264
        %v2757 = vpop.f32.mrf.mxu0
        %v2758 = vadd.f32 %v2533, %v2757
        %v2759 = vpop.f32.mrf.mxu0
        %2760 = vmatprep.mubr.f32.mxu0 %v2269
        %2761 = vmatmul.mubr.f32.gmra.mxu0 %v2268
        %v2762 = vpop.f32.mrf.mxu0
        %v2763 = vadd.f32 %v2538, %v2762
        %v2764 = vpop.f32.mrf.mxu0
        %2765 = vmatprep.mubr.f32.mxu0 %v2273
        %2766 = vmatmul.mubr.f32.gmra.mxu0 %v2272
        %v2767 = vpop.f32.mrf.mxu0
        %v2768 = vadd.f32 %v2543, %v2767
        %v2769 = vpop.f32.mrf.mxu0
        %2770 = vmatprep.mubr.f32.mxu0 %v2277
        %2771 = vmatmul.mubr.f32.gmra.mxu0 %v2276
        %v2772 = vpop.f32.mrf.mxu0
        %v2773 = vadd.f32 %v2548, %v2772
        %v2774 = vpop.f32.mrf.mxu0
        %2775 = vmatprep.mubr.f32.mxu0 %v2281
        %2776 = vmatmul.mubr.f32.gmra.mxu0 %v2280
        %v2777 = vpop.f32.mrf.mxu0
        %v2778 = vadd.f32 %v2553, %v2777
        %v2779 = vpop.f32.mrf.mxu0
        %2780 = vmatprep.mubr.f32.mxu0 %v2285
        %2781 = vmatmul.mubr.f32.gmra.mxu0 %v2284
        %v2782 = vpop.f32.mrf.mxu0
        %v2783 = vadd.f32 %v2558, %v2782
        %v2784 = vpop.f32.mrf.mxu0
        %2785 = vmatprep.mubr.f32.mxu0 %v2289
        %2786 = vmatmul.mubr.f32.gmra.mxu0 %v2288
        %v2787 = vpop.f32.mrf.mxu0
        %v2788 = vadd.f32 %v2563, %v2787
        %v2789 = vpop.f32.mrf.mxu0
        %2790 = vmatprep.mubr.f32.mxu0 %v2293
        %2791 = vmatmul.mubr.f32.gmra.mxu0 %v2292
        %v2792 = vpop.f32.mrf.mxu0
        %v2793 = vadd.f32 %v2568, %v2792
        %v2794 = vpop.f32.mrf.mxu0
        %2795 = vmatprep.mubr.f32.mxu0 %v2297
        %2796 = vmatmul.mubr.f32.gmra.mxu0 %v2296
        %v2797 = vpop.f32.mrf.mxu0
        %v2798 = vadd.f32 %v2573, %v2797
        %v2799 = vpop.f32.mrf.mxu0
        %2800 = vmatprep.mubr.f32.mxu0 %v2301
        %2801 = vmatmul.mubr.f32.gmra.mxu0 %v2300
        %v2802 = vpop.f32.mrf.mxu0
        %v2803 = vadd.f32 %v2578, %v2802
        %v2804 = vpop.f32.mrf.mxu0
        %2805 = vmatprep.mubr.f32.mxu0 %v2305
        %2806 = vmatmul.mubr.f32.gmra.mxu0 %v2304
        %v2807 = vpop.f32.mrf.mxu0
        %v2808 = vadd.f32 %v2583, %v2807
        %v2809 = vpop.f32.mrf.mxu0
        %2810 = vmatprep.mubr.f32.mxu0 %v2309
        %2811 = vmatmul.mubr.f32.gmra.mxu0 %v2308
        %v2812 = vpop.f32.mrf.mxu0
        %v2813 = vadd.f32 %v2588, %v2812
        %v2814 = vpop.f32.mrf.mxu0
        %2815 = vmatprep.mubr.f32.mxu0 %v2313
        %2816 = vmatmul.mubr.f32.gmra.mxu0 %v2312
        %v2817 = vpop.f32.mrf.mxu0
        %v2818 = vadd.f32 %v2593, %v2817
        %v2819 = vpop.f32.mrf.mxu0
        %2820 = vmatprep.mubr.f32.mxu0 %v2317
        %2821 = vmatmul.mubr.f32.gmra.mxu0 %v2316
        %v2822 = vpop.f32.mrf.mxu0
        %v2823 = vadd.f32 %v2598, %v2822
        %v2824 = vpop.f32.mrf.mxu0
        %2825 = vmatprep.mubr.f32.mxu0 %v2321
        %2826 = vmatmul.mubr.f32.gmra.mxu0 %v2320
        %v2827 = vpop.f32.mrf.mxu0
        %v2828 = vadd.f32 %v2603, %v2827
        %v2829 = vpop.f32.mrf.mxu0
        %2830 = vmatprep.mubr.f32.mxu0 %v2325
        %2831 = vmatmul.mubr.f32.gmra.mxu0 %v2324
        %v2832 = vpop.f32.mrf.mxu0
        %v2833 = vadd.f32 %v2608, %v2832
        %v2834 = vpop.f32.mrf.mxu0
        %2835 = vmatprep.mubr.f32.mxu0 %v2329
        %2836 = vmatmul.mubr.f32.gmra.mxu0 %v2328
        %v2837 = vpop.f32.mrf.mxu0
        %v2838 = vadd.f32 %v2613, %v2837
        %v2839 = vpop.f32.mrf.mxu0
        %2840 = vmatprep.mubr.f32.mxu0 %v2333
        %2841 = vmatmul.mubr.f32.gmra.mxu0 %v2332
        %v2842 = vpop.f32.mrf.mxu0
        %v2843 = vadd.f32 %v2618, %v2842
        %v2844 = vpop.f32.mrf.mxu0
        %2845 = vmatprep.mubr.f32.mxu0 %v2337
        %2846 = vmatmul.mubr.f32.gmra.mxu0 %v2336
        %v2847 = vpop.f32.mrf.mxu0
        %v2848 = vadd.f32 %v2623, %v2847
        %v2849 = vpop.f32.mrf.mxu0
        %2850 = vmatprep.mubr.f32.mxu0 %v2341
        %2851 = vmatmul.mubr.f32.gmra.mxu0 %v2340
        %v2852 = vpop.f32.mrf.mxu0
        %v2853 = vadd.f32 %v2628, %v2852
        %v2854 = vpop.f32.mrf.mxu0
        %2855 = vmatprep.mubr.f32.mxu0 %v2345
        %2856 = vmatmul.mubr.f32.gmra.mxu0 %v2344
        %v2857 = vpop.f32.mrf.mxu0
        %v2858 = vadd.f32 %v2633, %v2857
        %v2859 = vpop.f32.mrf.mxu0
        %2860 = vmatprep.mubr.f32.mxu0 %v2349
        %2861 = vmatmul.mubr.f32.gmra.mxu0 %v2348
        %v2862 = vpop.f32.mrf.mxu0
        %v2863 = vadd.f32 %v2638, %v2862
        %v2864 = vpop.f32.mrf.mxu0
        %2865 = vmatprep.mubr.f32.mxu0 %v2353
        %2866 = vmatmul.mubr.f32.gmra.mxu0 %v2352
        %v2867 = vpop.f32.mrf.mxu0
        %v2868 = vadd.f32 %v2643, %v2867
        %v2869 = vpop.f32.mrf.mxu0
        %2870 = vmatprep.mubr.f32.mxu0 %v2357
        %2871 = vmatmul.mubr.f32.gmra.mxu0 %v2356
        %v2872 = vpop.f32.mrf.mxu0
        %v2873 = vadd.f32 %v2648, %v2872
        %v2874 = vpop.f32.mrf.mxu0
        %2875 = vmatprep.mubr.f32.mxu0 %v2361
        %2876 = vmatmul.mubr.f32.gmra.mxu0 %v2360
        %v2877 = vpop.f32.mrf.mxu0
        %v2878 = vadd.f32 %v2653, %v2877
        %v2879 = vpop.f32.mrf.mxu0
        %2880 = vmatprep.mubr.f32.mxu0 %v2365
        %2881 = vmatmul.mubr.f32.gmra.mxu0 %v2364
        %v2882 = vpop.f32.mrf.mxu0
        %v2883 = vadd.f32 %v2658, %v2882
        %v2884 = vpop.f32.mrf.mxu0
        %2885 = vmatprep.mubr.f32.mxu0 %v2369
        %2886 = vmatmul.mubr.f32.gmra.mxu0 %v2368
        %v2887 = vpop.f32.mrf.mxu0
        %v2888 = vadd.f32 %v2663, %v2887
        %v2889 = vpop.f32.mrf.mxu0
        %2890 = vdwg.mxu0
        %v2891 = vtanh.pop %v2733
        %v2892 = vtanh.pop %v2738
        %v2893 = vtanh.pop %v2743
        %v2894 = vtanh.pop %v2748
        %v2895 = vtanh.pop %v2753
        %v2896 = vtanh.pop %v2758
        %v2897 = vtanh.pop %v2763
        %v2898 = vtanh.pop %v2768
        %v2899 = vtanh.pop %v2773
        %v2900 = vtanh.pop %v2778
        %v2901 = vtanh.pop %v2783
        %v2902 = vtanh.pop %v2788
        %v2903 = vtanh.pop %v2793
        %v2904 = vtanh.pop %v2798
        %v2905 = vtanh.pop %v2803
        %v2906 = vtanh.pop %v2808
        %v2907 = vtanh.pop %v2813
        %v2908 = vtanh.pop %v2818
        %v2909 = vtanh.pop %v2823
        %v2910 = vtanh.pop %v2828
        %v2911 = vtanh.pop %v2833
        %v2912 = vtanh.pop %v2838
        %v2913 = vtanh.pop %v2843
        %v2914 = vtanh.pop %v2848
        %v2915 = vtanh.pop %v2853
        %v2916 = vtanh.pop %v2858
        %v2917 = vtanh.pop %v2863
        %v2918 = vtanh.pop %v2868
        %v2919 = vtanh.pop %v2873
        %v2920 = vtanh.pop %v2878
        %v2921 = vtanh.pop %v2883
        %v2922 = vtanh.pop %v2888
        %2923 = vst [vmem:[%s356] sm:$0xff] %v2891
        %2924 = vst [vmem:[%s356 + $0x8] sm:$0xff] %v2892
        %2925 = vst [vmem:[%s356 + $0x10] sm:$0xff] %v2893
        %2926 = vst [vmem:[%s356 + $0x18] sm:$0xff] %v2894
        %2927 = vst [vmem:[%s356 + $0x20] sm:$0xff] %v2895
        %2928 = vst [vmem:[%s356 + $0x28] sm:$0xff] %v2896
        %2929 = vst [vmem:[%s356 + $0x30] sm:$0xff] %v2897
        %2930 = vst [vmem:[%s356 + $0x38] sm:$0xff] %v2898
        %2931 = vst [vmem:[%s356 + $0x40] sm:$0xff] %v2899
        %2932 = vst [vmem:[%s356 + $0x48] sm:$0xff] %v2900
        %2933 = vst [vmem:[%s356 + $0x50] sm:$0xff] %v2901
        %2934 = vst [vmem:[%s356 + $0x58] sm:$0xff] %v2902
        %2935 = vst [vmem:[%s356 + $0x60] sm:$0xff] %v2903
        %2936 = vst [vmem:[%s356 + $0x68] sm:$0xff] %v2904
        %2937 = vst [vmem:[%s356 + $0x70] sm:$0xff] %v2905
        %2938 = vst [vmem:[%s356 + $0x78] sm:$0xff] %v2906
        %2939 = vst [vmem:[%s356 + $0x80] sm:$0xff] %v2907
        %2940 = vst [vmem:[%s356 + $0x88] sm:$0xff] %v2908
        %2941 = vst [vmem:[%s356 + $0x90] sm:$0xff] %v2909
        %2942 = vst [vmem:[%s356 + $0x98] sm:$0xff] %v2910
        %2943 = vst [vmem:[%s356 + $0xa0] sm:$0xff] %v2911
        %2944 = vst [vmem:[%s356 + $0xa8] sm:$0xff] %v2912
        %2945 = vst [vmem:[%s356 + $0xb0] sm:$0xff] %v2913
        %2946 = vst [vmem:[%s356 + $0xb8] sm:$0xff] %v2914
        %2947 = vst [vmem:[%s356 + $0xc0] sm:$0xff] %v2915
        %2948 = vst [vmem:[%s356 + $0xc8] sm:$0xff] %v2916
        %2949 = vst [vmem:[%s356 + $0xd0] sm:$0xff] %v2917
        %2950 = vst [vmem:[%s356 + $0xd8] sm:$0xff] %v2918
        %2951 = vst [vmem:[%s356 + $0xe0] sm:$0xff] %v2919
        %2952 = vst [vmem:[%s356 + $0xe8] sm:$0xff] %v2920
        %2953 = vst [vmem:[%s356 + $0xf0] sm:$0xff] %v2921
        %2954 = vst [vmem:[%s356 + $0xf8] sm:$0xff] %v2922
        %s2955 = sand.u32 %s227, 1
        %s2956 = scalar_lea.sflag [#allocation4], %s2955
        %s2957 = sand.u32 %s227, 1
        %s2958 = smul.addr %s2957, 256
        %s2959 = scalar_lea.vmem [#allocation7], %s2958
        // Predicated region
        $region65: #{tpu_custom_call.1} parent=55 // pred_check
          %p2960 = pneg %p237
        $region66: #{tpu_custom_call.1} parent=55 // pred_check_branch
          %2962 = sbr.rel (%p2960) target = $region68
        $region67: #{tpu_custom_call.1} parent=55 // pred_region
          %s2963 = smul.u32 32, %s25
          %s2965 = ssub.s32 4096, 4096
          %2966 = vsyncadd %s2956, %s2965
          %s2967 = smul.addr %s2963, 128
          %s2968 = scalar_lea.hbm %s9, %s2967
          %s2969 = sshll.u32 %s2959, 4
          %s2970 = int_to_ptr.vmem [resolvable:$true] %s2969
          %2975 = dma.vmem_to_hbm [thread:$0]  %s2970, 4096, %s2968, %s2956, 128, 128, 8
        $region68: #{tpu_custom_call.1} parent=55 // pred_fallthru
          _
      $region56: #{tpu_custom_call.1} parent=5 // pred_fallthru
        _
      %p2976 = scmp.le.s32.totalorder 2, %s20
      // Predicated region
      $region69: #{tpu_custom_call.1} parent=5 // pred_check
        %p2977 = pneg %p2976
      $region70: #{tpu_custom_call.1} parent=5 // pred_check_branch
        %2979 = sbr.rel (%p2977) target = $region72
      $region71: #{tpu_custom_call.1} parent=5 // pred_region
        %s2980 = ssub.s32 %s20, 2
        // Predicated region
        $region73: #{tpu_custom_call.1} parent=71 // pred_check
          %p2981 = pneg %p243
        $region74: #{tpu_custom_call.1} parent=71 // pred_check_branch
          %2983 = sbr.rel (%p2981) target = $region76
        $region75: #{tpu_custom_call.1} parent=71 // pred_region
          %s2984 = sand.u32 %s228, 1
          %s2985 = scalar_lea.sflag [#allocation4], %s2984
          %s2986 = sand.u32 %s228, 1
          %s2987 = smul.addr %s2986, 256
          %s2988 = scalar_lea.vmem [#allocation7], %s2987
          %2989 = dma.done %s2985, 4096
        $region76: #{tpu_custom_call.1} parent=71 // pred_fallthru
          _
      $region72: #{tpu_custom_call.1} parent=5 // pred_fallthru
        _
    $region6: #{tpu_custom_call.1} parent=1 // loop_footer
      %s24 = sadd.s32 1, %s20
    $region7: #{tpu_custom_call.1} parent=1 // loop_footer_branch
      %19 = sbr.rel target = $region3
    $region8: #{tpu_custom_call.1} parent=1 // loop_exit
      _
    %2990 = vsyncpa [#allocation3], 1
    %s2991 = scalar_lea.sflag [#allocation3], 1
    %2992 = vsyncpa %s2991, 1
    %2993 = vsyncpa [#allocation6], 1
    %2994 = vsyncpa [#allocation4], 1
    %s2995 = scalar_lea.sflag [#allocation4], 1
    %2996 = vsyncpa %s2995, 1

</llo_original>
